<compile_context>
chip_gen: v7x
topology: tpu7x:2x2x1
jax: 0.10.0
libtpu: 0.0.40
codegen_flags: <defaults>
</compile_context>

<pallas_src>
import functools

import jax
import jax.numpy as jnp
from jax.experimental import pallas as pl
from jax.experimental.pallas import tpu as pltpu

Z_DIM = 32        # z_dim (external global in the PyTorch spec)
Z_PAD = 128       # z feature dim padded to one full lane tile
HIDDEN = 512
X_DIM = 256       # X_dim (external global in the PyTorch spec)
BN_BATCH = 8      # rows per original BatchNorm1d batch
BN_EPS = 1e-5
LEAKY_SLOPE = 0.2


def decoder_kernel(z_ref, w1_ref, b1_ref, w2_ref, b2_ref,
                   gamma_ref, beta_ref, w3_ref, b3_ref, out_ref,
                   *, groups_per_block, bn_batch):
    # Linear(z_dim, 512): bf16 operands, f32 accumulation; f32 epilogue.
    h = jnp.dot(z_ref[...], w1_ref[...], preferred_element_type=jnp.float32)
    h = h + b1_ref[...]
    h = jnp.maximum(h, LEAKY_SLOPE * h)                      # LeakyReLU(0.2)

    # Linear(512, 512)
    h = jnp.dot(h.astype(jnp.bfloat16), w2_ref[...],
                preferred_element_type=jnp.float32) + b2_ref[...]

    # BatchNorm1d(512) — training-mode batch stats (biased variance), computed
    # independently per original bn_batch-row batch, fused into scale/shift FMA.
    hg = h.reshape(groups_per_block, bn_batch, HIDDEN)
    mean = jnp.mean(hg, axis=1, keepdims=True)               # (G, 1, H)
    mean_sq = jnp.mean(hg * hg, axis=1, keepdims=True)       # (G, 1, H)
    var = mean_sq - mean * mean
    scale = gamma_ref[...] * jax.lax.rsqrt(var + BN_EPS)     # (G, 1, H)
    shift = beta_ref[...] - mean * scale
    hg = hg * scale + shift

    hg = jnp.maximum(hg, LEAKY_SLOPE * hg)                   # LeakyReLU(0.2)
    h = hg.reshape(groups_per_block * bn_batch, HIDDEN)

    # Linear(512, X_dim) + Tanh
    y = jnp.dot(h.astype(jnp.bfloat16), w3_ref[...],
                preferred_element_type=jnp.float32) + b3_ref[...]
    out_ref[...] = jnp.tanh(y)


def decoder_forward(z_batches, params, groups_per_block=16):
    """z_batches: (num_batches, BN_BATCH, Z_DIM) f32.

    Equivalent to applying the PyTorch Decoder (training-mode BatchNorm)
    independently to each (BN_BATCH, Z_DIM) batch, all in one pallas_call
    with VMEM-resident weights. Returns (num_batches, BN_BATCH, X_DIM) f32.
    """
    w1, b1, w2, b2, gamma, beta, w3, b3 = params
    num_batches, bn_batch, zd = z_batches.shape
    assert bn_batch == BN_BATCH and zd == Z_DIM
    rows_per_block = groups_per_block * bn_batch
    assert rows_per_block % 8 == 0

    # bf16 matmul operands; zero-pad z / w1 contraction dim to 128 lanes.
    w1p = jnp.pad(w1, ((0, Z_PAD - zd), (0, 0))).astype(jnp.bfloat16)
    w2b = w2.astype(jnp.bfloat16)
    w3b = w3.astype(jnp.bfloat16)

    n_pad = -(-num_batches // groups_per_block) * groups_per_block
    rows = n_pad * bn_batch
    real_rows = num_batches * bn_batch

    z_flat = z_batches.reshape(real_rows, zd).astype(jnp.bfloat16)
    z_flat = jnp.pad(z_flat, ((0, rows - real_rows), (0, Z_PAD - zd)))

    grid = (n_pad // groups_per_block,)
    const = lambda i: (0, 0)   # weights / biases stay resident across the grid

    flops = 2 * rows * (Z_PAD * HIDDEN + HIDDEN * HIDDEN + HIDDEN * X_DIM)
    transcendentals = rows * X_DIM + n_pad * HIDDEN
    bytes_accessed = (z_flat.size * 2 + w1p.size * 2 + w2b.size * 2 + w3b.size * 2
                      + (b1.size + b2.size + b3.size + gamma.size + beta.size) * 4
                      + rows * X_DIM * 4)

    kernel = functools.partial(decoder_kernel,
                               groups_per_block=groups_per_block,
                               bn_batch=bn_batch)

    out = pl.pallas_call(
        kernel,
        out_shape=jax.ShapeDtypeStruct((rows, X_DIM), jnp.float32),
        grid_spec=pltpu.PrefetchScalarGridSpec(
            num_scalar_prefetch=0,
            grid=grid,
            in_specs=[
                pl.BlockSpec((rows_per_block, Z_PAD), lambda i: (i, 0)),  # z
                pl.BlockSpec((Z_PAD, HIDDEN), const),                     # w1
                pl.BlockSpec((1, HIDDEN), const),                         # b1
                pl.BlockSpec((HIDDEN, HIDDEN), const),                    # w2
                pl.BlockSpec((1, HIDDEN), const),                         # b2
                pl.BlockSpec((1, HIDDEN), const),                         # gamma
                pl.BlockSpec((1, HIDDEN), const),                         # beta
                pl.BlockSpec((HIDDEN, X_DIM), const),                     # w3
                pl.BlockSpec((1, X_DIM), const),                          # b3
            ],
            out_specs=pl.BlockSpec((rows_per_block, X_DIM), lambda i: (i, 0)),
        ),
        compiler_params=pltpu.CompilerParams(
            dimension_semantics=("parallel",)),
        cost_estimate=pl.CostEstimate(flops=flops,
                                      transcendentals=transcendentals,
                                      bytes_accessed=bytes_accessed),
    )(z_flat, w1p, b1, w2b, b2, gamma, beta, w3b, b3)

    return out[:real_rows].reshape(num_batches, bn_batch, X_DIM)


def init_params(key):
    """Deterministic synthetic parameters (PyTorch-Linear-style uniform init)."""
    ks = jax.random.split(key, 6)

    def linear(kw, kb, fan_in, fan_out):
        bound = 1.0 / jnp.sqrt(fan_in)
        w = jax.random.uniform(kw, (fan_in, fan_out), jnp.float32, -bound, bound)
        b = jax.random.uniform(kb, (1, fan_out), jnp.float32, -bound, bound)
        return w, b

    w1, b1 = linear(ks[0], ks[1], Z_DIM, HIDDEN)
    w2, b2 = linear(ks[2], ks[3], HIDDEN, HIDDEN)
    w3, b3 = linear(ks[4], ks[5], HIDDEN, X_DIM)
    gamma = jnp.ones((1, HIDDEN), jnp.float32)   # BatchNorm1d weight init
    beta = jnp.zeros((1, HIDDEN), jnp.float32)   # BatchNorm1d bias init
    return (w1, b1, w2, b2, gamma, beta, w3, b3)


def decoder_ref(z_batches, params):
    """Pure-JAX reference (per-batch training-mode BN), mirroring the kernel's
    bf16-operand / f32-accumulate matmul quantization."""
    w1, b1, w2, b2, gamma, beta, w3, b3 = params
    w1b, w2b, w3b = (w.astype(jnp.bfloat16) for w in (w1, w2, w3))

    def single(z):
        h = jnp.dot(z.astype(jnp.bfloat16), w1b,
                    preferred_element_type=jnp.float32) + b1
        h = jnp.where(h > 0, h, LEAKY_SLOPE * h)
        h = jnp.dot(h.astype(jnp.bfloat16), w2b,
                    preferred_element_type=jnp.float32) + b2
        mean = jnp.mean(h, axis=0, keepdims=True)
        var = jnp.mean((h - mean) ** 2, axis=0, keepdims=True)
        h = (h - mean) / jnp.sqrt(var + BN_EPS) * gamma + beta
        h = jnp.where(h > 0, h, LEAKY_SLOPE * h)
        y = jnp.dot(h.astype(jnp.bfloat16), w3b,
                    preferred_element_type=jnp.float32) + b3
        return jnp.tanh(y)

    return jax.vmap(single)(z_batches)


if __name__ == "__main__":
    key = jax.random.PRNGKey(0)
    k_z, k_p = jax.random.split(key)

    NUM_BATCHES = 32   # 32 independent 8-row BN batches -> grid of 2 blocks of 128 rows
    z = jax.random.normal(k_z, (NUM_BATCHES, BN_BATCH, Z_DIM), jnp.float32)
    params = init_params(k_p)

    out = decoder_forward(z, params)
    jax.block_until_ready(out)

    ref = decoder_ref(z, params)
    assert out.shape == (NUM_BATCHES, BN_BATCH, X_DIM)
    max_err = float(jnp.max(jnp.abs(out - ref)))
    assert jnp.allclose(out, ref, atol=2e-3, rtol=2e-3), f"max_err={max_err}"

    print("KERNEL_OK")
</pallas_src>

<mosaic_0001>
module attributes {stable_mosaic.version = 11 : i64} {
  func.func @decoder_kernel(%arg0: i32, %arg1: memref<128x128xbf16, #tpu.memory_space<vmem>>, %arg2: memref<128x512xbf16, #tpu.memory_space<vmem>>, %arg3: memref<1x512xf32, #tpu.memory_space<vmem>>, %arg4: memref<512x512xbf16, #tpu.memory_space<vmem>>, %arg5: memref<1x512xf32, #tpu.memory_space<vmem>>, %arg6: memref<1x512xf32, #tpu.memory_space<vmem>>, %arg7: memref<1x512xf32, #tpu.memory_space<vmem>>, %arg8: memref<512x256xbf16, #tpu.memory_space<vmem>>, %arg9: memref<1x256xf32, #tpu.memory_space<vmem>>, %arg10: memref<128x256xf32, #tpu.memory_space<vmem>>) attributes {dimension_semantics = [#tpu.dimension_semantics<parallel>], iteration_bounds = array<i64: 2>, scalar_prefetch = 0 : i64, scratch_operands = 0 : i64, tpu.core_type = #tpu.core_type<tc>, window_params = [{transform_indices = @transform_0, window_bounds = array<i64: 128, 128>}, {pipeline_mode = #tpu.pipeline_mode<synchronous>, transform_indices = @transform_1, window_bounds = array<i64: 128, 512>}, {pipeline_mode = #tpu.pipeline_mode<synchronous>, transform_indices = @transform_2, window_bounds = array<i64: 1, 512>}, {pipeline_mode = #tpu.pipeline_mode<synchronous>, transform_indices = @transform_3, window_bounds = array<i64: 512, 512>}, {pipeline_mode = #tpu.pipeline_mode<synchronous>, transform_indices = @transform_4, window_bounds = array<i64: 1, 512>}, {pipeline_mode = #tpu.pipeline_mode<synchronous>, transform_indices = @transform_5, window_bounds = array<i64: 1, 512>}, {pipeline_mode = #tpu.pipeline_mode<synchronous>, transform_indices = @transform_6, window_bounds = array<i64: 1, 512>}, {pipeline_mode = #tpu.pipeline_mode<synchronous>, transform_indices = @transform_7, window_bounds = array<i64: 512, 256>}, {pipeline_mode = #tpu.pipeline_mode<synchronous>, transform_indices = @transform_8, window_bounds = array<i64: 1, 256>}, {transform_indices = @transform_9, window_bounds = array<i64: 128, 256>}]} {
    %c0 = arith.constant 0 : index
    %c0_0 = arith.constant 0 : index
    %0 = vector.load %arg1[%c0, %c0_0] : memref<128x128xbf16, #tpu.memory_space<vmem>>, vector<128x128xbf16>
    %c0_1 = arith.constant 0 : index
    %c0_2 = arith.constant 0 : index
    %1 = vector.load %arg2[%c0_1, %c0_2] : memref<128x512xbf16, #tpu.memory_space<vmem>>, vector<128x512xbf16>
    %cst = arith.constant dense<0.000000e+00> : vector<128x512xf32>
    %2 = tpu.matmul %0, %1, %cst {dimension_numbers = #tpu.dot_dimension_numbers<[1], [0], [0], [1], [0, 0, 1, 1], [], []>} : vector<128x128xbf16>, vector<128x512xbf16>, vector<128x512xf32> -> vector<128x512xf32>
    %c0_3 = arith.constant 0 : index
    %c0_4 = arith.constant 0 : index
    %3 = vector.load %arg3[%c0_3, %c0_4] : memref<1x512xf32, #tpu.memory_space<vmem>>, vector<1x512xf32>
    %4 = vector.broadcast %3 : vector<1x512xf32> to vector<128x512xf32>
    %5 = arith.addf %2, %4 : vector<128x512xf32>
    %cst_5 = arith.constant 2.000000e-01 : f32
    %6 = vector.broadcast %cst_5 : f32 to vector<128x512xf32>
    %7 = arith.mulf %6, %5 : vector<128x512xf32>
    %8 = arith.maximumf %5, %7 : vector<128x512xf32>
    %9 = arith.truncf %8 : vector<128x512xf32> to vector<128x512xbf16>
    %c0_6 = arith.constant 0 : index
    %c0_7 = arith.constant 0 : index
    %10 = vector.load %arg4[%c0_6, %c0_7] : memref<512x512xbf16, #tpu.memory_space<vmem>>, vector<512x512xbf16>
    %cst_8 = arith.constant dense<0.000000e+00> : vector<128x512xf32>
    %11 = tpu.matmul %9, %10, %cst_8 {dimension_numbers = #tpu.dot_dimension_numbers<[1], [0], [0], [1], [0, 0, 1, 1], [], []>} : vector<128x512xbf16>, vector<512x512xbf16>, vector<128x512xf32> -> vector<128x512xf32>
    %c0_9 = arith.constant 0 : index
    %c0_10 = arith.constant 0 : index
    %12 = vector.load %arg5[%c0_9, %c0_10] : memref<1x512xf32, #tpu.memory_space<vmem>>, vector<1x512xf32>
    %13 = vector.broadcast %12 : vector<1x512xf32> to vector<128x512xf32>
    %14 = arith.addf %11, %13 : vector<128x512xf32>
    %15 = vector.shape_cast %14 : vector<128x512xf32> to vector<16x8x512xf32>
    %cst_11 = arith.constant dense<0.000000e+00> : vector<16x512xf32>
    %16 = vector.multi_reduction <add>, %15, %cst_11 [1] : vector<16x8x512xf32> to vector<16x512xf32>
    %17 = vector.shape_cast %16 : vector<16x512xf32> to vector<16x1x512xf32>
    %cst_12 = arith.constant 8.000000e+00 : f32
    %18 = vector.broadcast %cst_12 : f32 to vector<16x1x512xf32>
    %19 = arith.divf %17, %18 : vector<16x1x512xf32>
    %20 = arith.mulf %15, %15 : vector<16x8x512xf32>
    %cst_13 = arith.constant dense<0.000000e+00> : vector<16x512xf32>
    %21 = vector.multi_reduction <add>, %20, %cst_13 [1] : vector<16x8x512xf32> to vector<16x512xf32>
    %22 = vector.shape_cast %21 : vector<16x512xf32> to vector<16x1x512xf32>
    %cst_14 = arith.constant 8.000000e+00 : f32
    %23 = vector.broadcast %cst_14 : f32 to vector<16x1x512xf32>
    %24 = arith.divf %22, %23 : vector<16x1x512xf32>
    %25 = arith.mulf %19, %19 : vector<16x1x512xf32>
    %26 = arith.subf %24, %25 : vector<16x1x512xf32>
    %c0_15 = arith.constant 0 : index
    %c0_16 = arith.constant 0 : index
    %27 = vector.load %arg6[%c0_15, %c0_16] : memref<1x512xf32, #tpu.memory_space<vmem>>, vector<1x512xf32>
    %cst_17 = arith.constant 9.99999974E-6 : f32
    %28 = vector.broadcast %cst_17 : f32 to vector<16x1x512xf32>
    %29 = arith.addf %26, %28 : vector<16x1x512xf32>
    %30 = math.rsqrt %29 : vector<16x1x512xf32>
    %31 = vector.shape_cast %27 : vector<1x512xf32> to vector<1x1x512xf32>
    %32 = vector.broadcast %31 : vector<1x1x512xf32> to vector<16x1x512xf32>
    %33 = arith.mulf %32, %30 : vector<16x1x512xf32>
    %c0_18 = arith.constant 0 : index
    %c0_19 = arith.constant 0 : index
    %34 = vector.load %arg7[%c0_18, %c0_19] : memref<1x512xf32, #tpu.memory_space<vmem>>, vector<1x512xf32>
    %35 = arith.mulf %19, %33 : vector<16x1x512xf32>
    %36 = vector.shape_cast %34 : vector<1x512xf32> to vector<1x1x512xf32>
    %37 = vector.broadcast %36 : vector<1x1x512xf32> to vector<16x1x512xf32>
    %38 = arith.subf %37, %35 : vector<16x1x512xf32>
    %39 = vector.broadcast %33 : vector<16x1x512xf32> to vector<16x8x512xf32>
    %40 = arith.mulf %15, %39 : vector<16x8x512xf32>
    %41 = vector.broadcast %38 : vector<16x1x512xf32> to vector<16x8x512xf32>
    %42 = arith.addf %40, %41 : vector<16x8x512xf32>
    %cst_20 = arith.constant 2.000000e-01 : f32
    %43 = vector.broadcast %cst_20 : f32 to vector<16x8x512xf32>
    %44 = arith.mulf %43, %42 : vector<16x8x512xf32>
    %45 = arith.maximumf %42, %44 : vector<16x8x512xf32>
    %46 = vector.shape_cast %45 : vector<16x8x512xf32> to vector<128x512xf32>
    %47 = arith.truncf %46 : vector<128x512xf32> to vector<128x512xbf16>
    %c0_21 = arith.constant 0 : index
    %c0_22 = arith.constant 0 : index
    %48 = vector.load %arg8[%c0_21, %c0_22] : memref<512x256xbf16, #tpu.memory_space<vmem>>, vector<512x256xbf16>
    %cst_23 = arith.constant dense<0.000000e+00> : vector<128x256xf32>
    %49 = tpu.matmul %47, %48, %cst_23 {dimension_numbers = #tpu.dot_dimension_numbers<[1], [0], [0], [1], [0, 0, 1, 1], [], []>} : vector<128x512xbf16>, vector<512x256xbf16>, vector<128x256xf32> -> vector<128x256xf32>
    %c0_24 = arith.constant 0 : index
    %c0_25 = arith.constant 0 : index
    %50 = vector.load %arg9[%c0_24, %c0_25] : memref<1x256xf32, #tpu.memory_space<vmem>>, vector<1x256xf32>
    %51 = vector.broadcast %50 : vector<1x256xf32> to vector<128x256xf32>
    %52 = arith.addf %49, %51 : vector<128x256xf32>
    %53 = math.tanh %52 : vector<128x256xf32>
    %c0_26 = arith.constant 0 : index
    %c0_27 = arith.constant 0 : index
    %54 = vector.load %arg10[%c0_26, %c0_27] : memref<128x256xf32, #tpu.memory_space<vmem>>, vector<128x256xf32>
    tpu.vector_store %arg10[%c0_26, %c0_27], %53 {strides = array<i32>} : memref<128x256xf32, #tpu.memory_space<vmem>>, vector<128x256xf32>,
    return
  }
  func.func @transform_0(%arg0: i32) -> (i32, i32) {
    %c0_i32 = arith.constant 0 : i32
    %c0_i32_0 = arith.constant 0 : i32
    return %arg0, %c0_i32 : i32, i32
  }
  func.func @transform_1(%arg0: i32) -> (i32, i32) {
    %c0_i32 = arith.constant 0 : i32
    %c0_i32_0 = arith.constant 0 : i32
    %c0_i32_1 = arith.constant 0 : i32
    return %c0_i32, %c0_i32_0 : i32, i32
  }
  func.func @transform_2(%arg0: i32) -> (i32, i32) {
    %c0_i32 = arith.constant 0 : i32
    %c0_i32_0 = arith.constant 0 : i32
    %c0_i32_1 = arith.constant 0 : i32
    return %c0_i32, %c0_i32_0 : i32, i32
  }
  func.func @transform_3(%arg0: i32) -> (i32, i32) {
    %c0_i32 = arith.constant 0 : i32
    %c0_i32_0 = arith.constant 0 : i32
    %c0_i32_1 = arith.constant 0 : i32
    return %c0_i32, %c0_i32_0 : i32, i32
  }
  func.func @transform_4(%arg0: i32) -> (i32, i32) {
    %c0_i32 = arith.constant 0 : i32
    %c0_i32_0 = arith.constant 0 : i32
    %c0_i32_1 = arith.constant 0 : i32
    return %c0_i32, %c0_i32_0 : i32, i32
  }
  func.func @transform_5(%arg0: i32) -> (i32, i32) {
    %c0_i32 = arith.constant 0 : i32
    %c0_i32_0 = arith.constant 0 : i32
    %c0_i32_1 = arith.constant 0 : i32
    return %c0_i32, %c0_i32_0 : i32, i32
  }
  func.func @transform_6(%arg0: i32) -> (i32, i32) {
    %c0_i32 = arith.constant 0 : i32
    %c0_i32_0 = arith.constant 0 : i32
    %c0_i32_1 = arith.constant 0 : i32
    return %c0_i32, %c0_i32_0 : i32, i32
  }
  func.func @transform_7(%arg0: i32) -> (i32, i32) {
    %c0_i32 = arith.constant 0 : i32
    %c0_i32_0 = arith.constant 0 : i32
    %c0_i32_1 = arith.constant 0 : i32
    return %c0_i32, %c0_i32_0 : i32, i32
  }
  func.func @transform_8(%arg0: i32) -> (i32, i32) {
    %c0_i32 = arith.constant 0 : i32
    %c0_i32_0 = arith.constant 0 : i32
    %c0_i32_1 = arith.constant 0 : i32
    return %c0_i32, %c0_i32_0 : i32, i32
  }
  func.func @transform_9(%arg0: i32) -> (i32, i32) {
    %c0_i32 = arith.constant 0 : i32
    %c0_i32_0 = arith.constant 0 : i32
    return %arg0, %c0_i32 : i32, i32
  }
}

</mosaic_0001>

<llo_original>
// kernel: tpu_custom_call.1
$region0: #{tpu_custom_call.1}
  #allocation0 [shape = 'u32[]', space=smem, size = 0x4, offset = 0x4, fixed_abs, tag = 'smem constant byte address 0x4 - core index']
  #allocation1 [shape = 'u32[144,128]{1,0:T(1,128)}', space=vmem, size = 0x12000, scoped, tag = 'internal scratch']
  %s0 = inlined_call_operand.hbm [shape: bf16[256,128], index: 0, kind: input, shape index: {}]
  %s1 = inlined_call_operand.hbm [shape: bf16[128,512], index: 1, kind: input, shape index: {}]
  %s2 = inlined_call_operand.vmem [shape: f32[1,512], index: 2, kind: input, shape index: {}]
  %s3 = inlined_call_operand.hbm [shape: bf16[512,512], index: 3, kind: input, shape index: {}]
  %s4 = inlined_call_operand.vmem [shape: f32[1,512], index: 4, kind: input, shape index: {}]
  %s5 = inlined_call_operand.vmem [shape: f32[1,512], index: 5, kind: input, shape index: {}]
  %s6 = inlined_call_operand.vmem [shape: f32[1,512], index: 6, kind: input, shape index: {}]
  %s7 = inlined_call_operand.hbm [shape: bf16[512,256], index: 7, kind: input, shape index: {}]
  %s8 = inlined_call_operand.vmem [shape: f32[1,256], index: 8, kind: input, shape index: {}]
  %s9 = inlined_call_operand.hbm [shape: f32[256,256], index: 9, kind: output, shape index: {}]
  %s10 = sld [smem:[#allocation0]]
  $region85: #{tpu_custom_call.1} parent=0
    _
  %s12 = ssub.s32 1, %s10
  %s13 = scalar_select 0, %s12, %s10
  $region1: #{tpu_custom_call.1} parent=0
    #allocation2 [shape = 'u8[65536]{0}', space=vmem, size = 0x10000, scoped, tag = 'input window, operand 0']
    #allocation3 [shape = 's32[2]{0}', space=sflag, size = 0x8, scoped, tag = 'scoped memory for tpu_custom_call.1']
    #allocation4 [shape = 's32[2]{0}', space=sflag, size = 0x8, scoped, tag = 'scoped memory for tpu_custom_call.1']
    #allocation5 [shape = 'u8[131072]{0}', space=vmem, size = 0x20000, scoped, tag = 'input window, operand 1, single buffered']
    #allocation6 [shape = 's32[1]{0}', space=sflag, size = 0x4, scoped, tag = 'scoped memory for tpu_custom_call.1']
    #allocation7 [shape = 'u8[524288]{0}', space=vmem, size = 0x80000, scoped, tag = 'input window, operand 3, single buffered']
    #allocation8 [shape = 'u8[262144]{0}', space=vmem, size = 0x40000, scoped, tag = 'input window, operand 7, single buffered']
    #allocation9 [shape = 's32[1]{0}', space=sflag, size = 0x4, scoped, tag = 'scoped memory for tpu_custom_call.1']
    #allocation10 [shape = 'u8[262144]{0}', space=vmem, size = 0x40000, scoped, tag = 'output window, operand 0']
    %14 = vsyncpa [#allocation3], 0
    %s15 = scalar_lea.sflag [#allocation3], 1
    %16 = vsyncpa %s15, 0
    %17 = vsyncpa [#allocation6], 0
    %18 = vsyncpa [#allocation9], 0
    %19 = vsyncpa [#allocation4], 0
    %s20 = scalar_lea.sflag [#allocation4], 1
    %21 = vsyncpa %s20, 0
    loop: start=0, step=1, limit=4
    $region2: #{tpu_custom_call.1} parent=1 // loop_pre_header
      _
    $region3: #{tpu_custom_call.1} parent=1 // loop_header
      %s23 = sphi 0, %s27
      %p24 = scmp.ge.s32.totalorder %s23, 4
      %s33 = sphi 0, %s35
      %s36 = sphi 0, %s33
      %s37 = sphi 0, %s36
      %s53 = sphi 0, %s37
      %s57 = sphi 0, %s57
      %s59 = sphi 0, %s57
      %s60 = sphi 0, %s59
      %s74 = sphi 0, %s60
      %s78 = sphi 0, %s78
      %s80 = sphi 0, %s78
      %s81 = sphi 0, %s80
      %s95 = sphi 0, %s81
      %s99 = sphi 0, %s99
      %s101 = sphi 0, %s99
      %s102 = sphi 0, %s101
      %s116 = sphi 0, %s102
      %s120 = sphi 0, %s120
      %s122 = sphi 0, %s120
      %s123 = sphi 0, %s122
      %s137 = sphi 0, %s123
      %s141 = sphi 0, %s141
      %s143 = sphi 0, %s141
      %s144 = sphi 0, %s143
      %s158 = sphi 0, %s144
      %s162 = sphi 0, %s162
      %s164 = sphi 0, %s162
      %s165 = sphi 0, %s164
      %s179 = sphi 0, %s165
      %s183 = sphi 0, %s183
      %s185 = sphi 0, %s183
      %s186 = sphi 0, %s185
      %s200 = sphi 0, %s186
      %s204 = sphi 0, %s204
      %s206 = sphi 0, %s204
      %s207 = sphi 0, %s206
      %s221 = sphi 0, %s207
      %s227 = sphi 0, %s229
      %s230 = sphi 0, %s227
      %s231 = sphi 0, %s230
      %s247 = sphi 0, %s231
    $region4: #{tpu_custom_call.1} parent=1 // loop_header_branch
      %26 = sbr.rel (%p24) target = $region8
    $region5: #{tpu_custom_call.1} parent=1 // loop_body
      %s28 = ssub.s32 %s23, 1
      %s29 = ssub.s32 %s23, 2
      %s30 = sadd.s32 %s23, 1
      %s31 = ssub.s32 %s23, %s30
      %p32 = scmp.eq.s32.totalorder %s31, 0
      %s34 = sadd.s32 %s33, 1
      %s35 = scalar_select %p32, %s33, %s34
      %p38 = pneg %p32
      %p39 = scmp.eq.s32.totalorder %s23, 1
      %p40 = por %p38, %p39
      %p41 = scmp.ne.s32.totalorder %s33, %s36
      %p42 = scmp.eq.s32.totalorder %s23, 0
      %p43 = por %p41, %p42
      %p44 = scmp.ne.s32.totalorder %s33, %s36
      %p45 = scmp.eq.s32.totalorder %s28, 1
      %p46 = por %p44, %p45
      %p47 = scmp.ne.s32.totalorder %s36, %s37
      %p48 = scmp.eq.s32.totalorder %s28, 0
      %p49 = por %p47, %p48
      %p50 = scmp.ne.s32.totalorder %s36, %s37
      %p51 = scmp.eq.s32.totalorder %s29, 1
      %p52 = por %p50, %p51
      %p54 = scmp.ne.s32.totalorder %s37, %s53
      %p55 = scmp.eq.s32.totalorder %s29, 0
      %p56 = por %p54, %p55
      %s58 = sadd.s32 %s57, 1
      %p61 = scmp.eq.s32.totalorder %s23, 1
      %p62 = scmp.ne.s32.totalorder %s57, %s59
      %p63 = scmp.eq.s32.totalorder %s23, 0
      %p64 = por %p62, %p63
      %p65 = scmp.ne.s32.totalorder %s57, %s59
      %p66 = scmp.eq.s32.totalorder %s28, 1
      %p67 = por %p65, %p66
      %p68 = scmp.ne.s32.totalorder %s59, %s60
      %p69 = scmp.eq.s32.totalorder %s28, 0
      %p70 = por %p68, %p69
      %p71 = scmp.ne.s32.totalorder %s59, %s60
      %p72 = scmp.eq.s32.totalorder %s29, 1
      %p73 = por %p71, %p72
      %p75 = scmp.ne.s32.totalorder %s60, %s74
      %p76 = scmp.eq.s32.totalorder %s29, 0
      %p77 = por %p75, %p76
      %s79 = sadd.s32 %s78, 1
      %p82 = scmp.eq.s32.totalorder %s23, 1
      %p83 = scmp.ne.s32.totalorder %s78, %s80
      %p84 = scmp.eq.s32.totalorder %s23, 0
      %p85 = por %p83, %p84
      %p86 = scmp.ne.s32.totalorder %s78, %s80
      %p87 = scmp.eq.s32.totalorder %s28, 1
      %p88 = por %p86, %p87
      %p89 = scmp.ne.s32.totalorder %s80, %s81
      %p90 = scmp.eq.s32.totalorder %s28, 0
      %p91 = por %p89, %p90
      %p92 = scmp.ne.s32.totalorder %s80, %s81
      %p93 = scmp.eq.s32.totalorder %s29, 1
      %p94 = por %p92, %p93
      %p96 = scmp.ne.s32.totalorder %s81, %s95
      %p97 = scmp.eq.s32.totalorder %s29, 0
      %p98 = por %p96, %p97
      %s100 = sadd.s32 %s99, 1
      %p103 = scmp.eq.s32.totalorder %s23, 1
      %p104 = scmp.ne.s32.totalorder %s99, %s101
      %p105 = scmp.eq.s32.totalorder %s23, 0
      %p106 = por %p104, %p105
      %p107 = scmp.ne.s32.totalorder %s99, %s101
      %p108 = scmp.eq.s32.totalorder %s28, 1
      %p109 = por %p107, %p108
      %p110 = scmp.ne.s32.totalorder %s101, %s102
      %p111 = scmp.eq.s32.totalorder %s28, 0
      %p112 = por %p110, %p111
      %p113 = scmp.ne.s32.totalorder %s101, %s102
      %p114 = scmp.eq.s32.totalorder %s29, 1
      %p115 = por %p113, %p114
      %p117 = scmp.ne.s32.totalorder %s102, %s116
      %p118 = scmp.eq.s32.totalorder %s29, 0
      %p119 = por %p117, %p118
      %s121 = sadd.s32 %s120, 1
      %p124 = scmp.eq.s32.totalorder %s23, 1
      %p125 = scmp.ne.s32.totalorder %s120, %s122
      %p126 = scmp.eq.s32.totalorder %s23, 0
      %p127 = por %p125, %p126
      %p128 = scmp.ne.s32.totalorder %s120, %s122
      %p129 = scmp.eq.s32.totalorder %s28, 1
      %p130 = por %p128, %p129
      %p131 = scmp.ne.s32.totalorder %s122, %s123
      %p132 = scmp.eq.s32.totalorder %s28, 0
      %p133 = por %p131, %p132
      %p134 = scmp.ne.s32.totalorder %s122, %s123
      %p135 = scmp.eq.s32.totalorder %s29, 1
      %p136 = por %p134, %p135
      %p138 = scmp.ne.s32.totalorder %s123, %s137
      %p139 = scmp.eq.s32.totalorder %s29, 0
      %p140 = por %p138, %p139
      %s142 = sadd.s32 %s141, 1
      %p145 = scmp.eq.s32.totalorder %s23, 1
      %p146 = scmp.ne.s32.totalorder %s141, %s143
      %p147 = scmp.eq.s32.totalorder %s23, 0
      %p148 = por %p146, %p147
      %p149 = scmp.ne.s32.totalorder %s141, %s143
      %p150 = scmp.eq.s32.totalorder %s28, 1
      %p151 = por %p149, %p150
      %p152 = scmp.ne.s32.totalorder %s143, %s144
      %p153 = scmp.eq.s32.totalorder %s28, 0
      %p154 = por %p152, %p153
      %p155 = scmp.ne.s32.totalorder %s143, %s144
      %p156 = scmp.eq.s32.totalorder %s29, 1
      %p157 = por %p155, %p156
      %p159 = scmp.ne.s32.totalorder %s144, %s158
      %p160 = scmp.eq.s32.totalorder %s29, 0
      %p161 = por %p159, %p160
      %s163 = sadd.s32 %s162, 1
      %p166 = scmp.eq.s32.totalorder %s23, 1
      %p167 = scmp.ne.s32.totalorder %s162, %s164
      %p168 = scmp.eq.s32.totalorder %s23, 0
      %p169 = por %p167, %p168
      %p170 = scmp.ne.s32.totalorder %s162, %s164
      %p171 = scmp.eq.s32.totalorder %s28, 1
      %p172 = por %p170, %p171
      %p173 = scmp.ne.s32.totalorder %s164, %s165
      %p174 = scmp.eq.s32.totalorder %s28, 0
      %p175 = por %p173, %p174
      %p176 = scmp.ne.s32.totalorder %s164, %s165
      %p177 = scmp.eq.s32.totalorder %s29, 1
      %p178 = por %p176, %p177
      %p180 = scmp.ne.s32.totalorder %s165, %s179
      %p181 = scmp.eq.s32.totalorder %s29, 0
      %p182 = por %p180, %p181
      %s184 = sadd.s32 %s183, 1
      %p187 = scmp.eq.s32.totalorder %s23, 1
      %p188 = scmp.ne.s32.totalorder %s183, %s185
      %p189 = scmp.eq.s32.totalorder %s23, 0
      %p190 = por %p188, %p189
      %p191 = scmp.ne.s32.totalorder %s183, %s185
      %p192 = scmp.eq.s32.totalorder %s28, 1
      %p193 = por %p191, %p192
      %p194 = scmp.ne.s32.totalorder %s185, %s186
      %p195 = scmp.eq.s32.totalorder %s28, 0
      %p196 = por %p194, %p195
      %p197 = scmp.ne.s32.totalorder %s185, %s186
      %p198 = scmp.eq.s32.totalorder %s29, 1
      %p199 = por %p197, %p198
      %p201 = scmp.ne.s32.totalorder %s186, %s200
      %p202 = scmp.eq.s32.totalorder %s29, 0
      %p203 = por %p201, %p202
      %s205 = sadd.s32 %s204, 1
      %p208 = scmp.eq.s32.totalorder %s23, 1
      %p209 = scmp.ne.s32.totalorder %s204, %s206
      %p210 = scmp.eq.s32.totalorder %s23, 0
      %p211 = por %p209, %p210
      %p212 = scmp.ne.s32.totalorder %s204, %s206
      %p213 = scmp.eq.s32.totalorder %s28, 1
      %p214 = por %p212, %p213
      %p215 = scmp.ne.s32.totalorder %s206, %s207
      %p216 = scmp.eq.s32.totalorder %s28, 0
      %p217 = por %p215, %p216
      %p218 = scmp.ne.s32.totalorder %s206, %s207
      %p219 = scmp.eq.s32.totalorder %s29, 1
      %p220 = por %p218, %p219
      %p222 = scmp.ne.s32.totalorder %s207, %s221
      %p223 = scmp.eq.s32.totalorder %s29, 0
      %p224 = por %p222, %p223
      %s225 = ssub.s32 %s23, %s30
      %p226 = scmp.eq.s32.totalorder %s225, 0
      %s228 = sadd.s32 %s227, 1
      %s229 = scalar_select %p226, %s227, %s228
      %p232 = pneg %p226
      %p233 = scmp.eq.s32.totalorder %s23, 1
      %p234 = por %p232, %p233
      %p235 = scmp.ne.s32.totalorder %s227, %s230
      %p236 = scmp.eq.s32.totalorder %s23, 0
      %p237 = por %p235, %p236
      %p238 = scmp.ne.s32.totalorder %s227, %s230
      %p239 = scmp.eq.s32.totalorder %s28, 1
      %p240 = por %p238, %p239
      %p241 = scmp.ne.s32.totalorder %s230, %s231
      %p242 = scmp.eq.s32.totalorder %s28, 0
      %p243 = por %p241, %p242
      %p244 = scmp.ne.s32.totalorder %s230, %s231
      %p245 = scmp.eq.s32.totalorder %s29, 1
      %p246 = por %p244, %p245
      %p248 = scmp.ne.s32.totalorder %s231, %s247
      %p249 = scmp.eq.s32.totalorder %s29, 0
      %p250 = por %p248, %p249
      %p251 = scmp.le.s32.totalorder 1, %s23
      %p252 = scmp.lt.s32.totalorder %s23, 3
      %p253 = pnand %p251, %p252
      %p254 = pneg %p253
      // Predicated region
      $region9: #{tpu_custom_call.1} parent=5 // pred_check
        _
      $region10: #{tpu_custom_call.1} parent=5 // pred_check_branch
        %256 = sbr.rel (%p253) target = $region12
      $region11: #{tpu_custom_call.1} parent=5 // pred_region
        %s257 = ssub.s32 %s23, 1
        // Predicated region
        $region13: #{tpu_custom_call.1} parent=11 // pred_check
          %p258 = pneg %p70
        $region14: #{tpu_custom_call.1} parent=11 // pred_check_branch
          %260 = sbr.rel (%p258) target = $region16
        $region15: #{tpu_custom_call.1} parent=11 // pred_region
          %s262 = ssub.s32 4096, 4096
          %263 = vsyncadd [#allocation6], %s262
          %s264 = sshll.u32 [#allocation5], 4
          %s265 = int_to_ptr.vmem [resolvable:$true] %s264
          %270 = dma.hbm_to_vmem [thread:$0]  %s1, 4096, %s265, [#allocation6], 256, 256, 16
        $region16: #{tpu_custom_call.1} parent=11 // pred_fallthru
          _
        // Predicated region
        $region17: #{tpu_custom_call.1} parent=11 // pred_check
          %p271 = pneg %p91
        $region18: #{tpu_custom_call.1} parent=11 // pred_check_branch
          %273 = sbr.rel (%p271) target = $region20
        $region19: #{tpu_custom_call.1} parent=11 // pred_region
          _
        $region20: #{tpu_custom_call.1} parent=11 // pred_fallthru
          _
        // Predicated region
        $region21: #{tpu_custom_call.1} parent=11 // pred_check
          %p274 = pneg %p112
        $region22: #{tpu_custom_call.1} parent=11 // pred_check_branch
          %276 = sbr.rel (%p274) target = $region24
        $region23: #{tpu_custom_call.1} parent=11 // pred_region
          %s278 = ssub.s32 16384, 16384
          %279 = vsyncadd [#allocation6], %s278
          %s280 = sshll.u32 [#allocation7], 4
          %s281 = int_to_ptr.vmem [resolvable:$true] %s280
          %286 = dma.hbm_to_vmem [thread:$0]  %s3, 16384, %s281, [#allocation6], 256, 256, 16
        $region24: #{tpu_custom_call.1} parent=11 // pred_fallthru
          _
        // Predicated region
        $region25: #{tpu_custom_call.1} parent=11 // pred_check
          %p287 = pneg %p133
        $region26: #{tpu_custom_call.1} parent=11 // pred_check_branch
          %289 = sbr.rel (%p287) target = $region28
        $region27: #{tpu_custom_call.1} parent=11 // pred_region
          _
        $region28: #{tpu_custom_call.1} parent=11 // pred_fallthru
          _
        // Predicated region
        $region29: #{tpu_custom_call.1} parent=11 // pred_check
          %p290 = pneg %p154
        $region30: #{tpu_custom_call.1} parent=11 // pred_check_branch
          %292 = sbr.rel (%p290) target = $region32
        $region31: #{tpu_custom_call.1} parent=11 // pred_region
          _
        $region32: #{tpu_custom_call.1} parent=11 // pred_fallthru
          _
        // Predicated region
        $region33: #{tpu_custom_call.1} parent=11 // pred_check
          %p293 = pneg %p175
        $region34: #{tpu_custom_call.1} parent=11 // pred_check_branch
          %295 = sbr.rel (%p293) target = $region36
        $region35: #{tpu_custom_call.1} parent=11 // pred_region
          _
        $region36: #{tpu_custom_call.1} parent=11 // pred_fallthru
          _
        // Predicated region
        $region37: #{tpu_custom_call.1} parent=11 // pred_check
          %p296 = pneg %p196
        $region38: #{tpu_custom_call.1} parent=11 // pred_check_branch
          %298 = sbr.rel (%p296) target = $region40
        $region39: #{tpu_custom_call.1} parent=11 // pred_region
          %s300 = ssub.s32 8192, 8192
          %301 = vsyncadd [#allocation9], %s300
          %s302 = sshll.u32 [#allocation8], 4
          %s303 = int_to_ptr.vmem [resolvable:$true] %s302
          %308 = dma.hbm_to_vmem [thread:$0]  %s7, 8192, %s303, [#allocation9], 128, 128, 8
        $region40: #{tpu_custom_call.1} parent=11 // pred_fallthru
          _
        // Predicated region
        $region41: #{tpu_custom_call.1} parent=11 // pred_check
          %p309 = pneg %p217
        $region42: #{tpu_custom_call.1} parent=11 // pred_check_branch
          %311 = sbr.rel (%p309) target = $region44
        $region43: #{tpu_custom_call.1} parent=11 // pred_region
          _
        $region44: #{tpu_custom_call.1} parent=11 // pred_fallthru
          _
      $region12: #{tpu_custom_call.1} parent=5 // pred_fallthru
        _
      %p312 = scmp.lt.s32.totalorder %s23, 2
      // Predicated region
      $region45: #{tpu_custom_call.1} parent=5 // pred_check
        %p313 = pneg %p312
      $region46: #{tpu_custom_call.1} parent=5 // pred_check_branch
        %315 = sbr.rel (%p313) target = $region48
      $region47: #{tpu_custom_call.1} parent=5 // pred_region
        // Predicated region
        $region49: #{tpu_custom_call.1} parent=47 // pred_check
          %p316 = pneg %p43
        $region50: #{tpu_custom_call.1} parent=47 // pred_check_branch
          %318 = sbr.rel (%p316) target = $region52
        $region51: #{tpu_custom_call.1} parent=47 // pred_region
          %s319 = sand.u32 %s33, 1
          %s320 = scalar_lea.sflag [#allocation3], %s319
          %s321 = sand.u32 %s33, 1
          %s322 = smul.addr %s321, 64
          %s323 = scalar_lea.vmem [#allocation2], %s322
          %s324 = smul.u32 16, %s23
          %s326 = ssub.s32 1024, 1024
          %327 = vsyncadd %s320, %s326
          %s328 = smul.addr %s324, 64
          %s329 = scalar_lea.hbm %s0, %s328
          %s330 = sshll.u32 %s323, 4
          %s331 = int_to_ptr.vmem [resolvable:$true] %s330
          %336 = dma.hbm_to_vmem [thread:$0]  %s329, 1024, %s331, %s320, 64, 64, 4
        $region52: #{tpu_custom_call.1} parent=47 // pred_fallthru
          _
      $region48: #{tpu_custom_call.1} parent=5 // pred_fallthru
        _
      %p337 = scmp.le.s32.totalorder 1, %s23
      %p338 = scmp.lt.s32.totalorder %s23, 3
      %p339 = pnand %p337, %p338
      %p340 = pneg %p339
      // Predicated region
      $region53: #{tpu_custom_call.1} parent=5 // pred_check
        _
      $region54: #{tpu_custom_call.1} parent=5 // pred_check_branch
        %342 = sbr.rel (%p339) target = $region56
      $region55: #{tpu_custom_call.1} parent=5 // pred_region
        %s343 = ssub.s32 %s23, 1
        %s344 = sand.u32 %s36, 1
        %s345 = scalar_lea.sflag [#allocation3], %s344
        %s346 = sand.u32 %s36, 1
        %s347 = smul.addr %s346, 64
        %s348 = scalar_lea.vmem [#allocation2], %s347
        // Predicated region
        $region57: #{tpu_custom_call.1} parent=55 // pred_check
          %p349 = pneg %p49
        $region58: #{tpu_custom_call.1} parent=55 // pred_check_branch
          %351 = sbr.rel (%p349) target = $region60
        $region59: #{tpu_custom_call.1} parent=55 // pred_region
          %352 = dma.done %s345, 1024
        $region60: #{tpu_custom_call.1} parent=55 // pred_fallthru
          _
        // Predicated region
        $region61: #{tpu_custom_call.1} parent=55 // pred_check
          %p353 = pneg %p70
        $region62: #{tpu_custom_call.1} parent=55 // pred_check_branch
          %355 = sbr.rel (%p353) target = $region64
        $region63: #{tpu_custom_call.1} parent=55 // pred_region
          %356 = dma.done [#allocation6], 4096
        $region64: #{tpu_custom_call.1} parent=55 // pred_fallthru
          _
        // Predicated region
        $region65: #{tpu_custom_call.1} parent=55 // pred_check
          %p357 = pneg %p112
        $region66: #{tpu_custom_call.1} parent=55 // pred_check_branch
          %359 = sbr.rel (%p357) target = $region68
        $region67: #{tpu_custom_call.1} parent=55 // pred_region
          %360 = dma.done [#allocation6], 16384
        $region68: #{tpu_custom_call.1} parent=55 // pred_fallthru
          _
        // Predicated region
        $region69: #{tpu_custom_call.1} parent=55 // pred_check
          %p361 = pneg %p196
        $region70: #{tpu_custom_call.1} parent=55 // pred_check_branch
          %363 = sbr.rel (%p361) target = $region72
        $region71: #{tpu_custom_call.1} parent=55 // pred_region
          %364 = dma.done [#allocation9], 8192
        $region72: #{tpu_custom_call.1} parent=55 // pred_fallthru
          _
        %s365 = sand.u32 %s36, 1
        %s366 = scalar_lea.sflag [#allocation3], %s365
        %s367 = sand.u32 %s36, 1
        %s368 = smul.addr %s367, 64
        %s369 = scalar_lea.vmem [#allocation2], %s368
        %p370 = pneg %p49
        %p371 = pneg %p46
        %p372 = pneg %p70
        %p373 = pneg %p67
        %p374 = pneg %p91
        %p375 = pneg %p88
        %p376 = pneg %p112
        %p377 = pneg %p109
        %p378 = pneg %p133
        %p379 = pneg %p130
        %p380 = pneg %p154
        %p381 = pneg %p151
        %p382 = pneg %p175
        %p383 = pneg %p172
        %p384 = pneg %p196
        %p385 = pneg %p193
        %p386 = pneg %p217
        %p387 = pneg %p214
        %p388 = pneg %p243
        %p389 = pneg %p240
        %s390 = sand.u32 %s230, 1
        %s391 = scalar_lea.sflag [#allocation4], %s390
        %s392 = sand.u32 %s230, 1
        %s393 = smul.addr %s392, 256
        %s394 = scalar_lea.vmem [#allocation10], %s393
        %s395 = smul.u32 16, %s28
        %s396 = smul.u32 16, %s28
        %v398 = vld [vmem:[%s348] sm:$0xf]
        %v399 = vld [vmem:[%s348 + $0x4] sm:$0xf]
        %v400 = vld [vmem:[%s348 + $0x8] sm:$0xf]
        %v401 = vld [vmem:[%s348 + $0xc] sm:$0xf]
        %v402 = vld [vmem:[%s348 + $0x10] sm:$0xf]
        %v403 = vld [vmem:[%s348 + $0x14] sm:$0xf]
        %v404 = vld [vmem:[%s348 + $0x18] sm:$0xf]
        %v405 = vld [vmem:[%s348 + $0x1c] sm:$0xf]
        %v406 = vld [vmem:[%s348 + $0x20] sm:$0xf]
        %v407 = vld [vmem:[%s348 + $0x24] sm:$0xf]
        %v408 = vld [vmem:[%s348 + $0x28] sm:$0xf]
        %v409 = vld [vmem:[%s348 + $0x2c] sm:$0xf]
        %v410 = vld [vmem:[%s348 + $0x30] sm:$0xf]
        %v411 = vld [vmem:[%s348 + $0x34] sm:$0xf]
        %v412 = vld [vmem:[%s348 + $0x38] sm:$0xf]
        %v413 = vld [vmem:[%s348 + $0x3c] sm:$0xf]
        %v414 = vld [vmem:[#allocation5] sm:$0xff]
        %v415 = vld [vmem:[#allocation5 + $0x8] sm:$0xff]
        %v416 = vld [vmem:[#allocation5 + $0x10] sm:$0xff]
        %v417 = vld [vmem:[#allocation5 + $0x18] sm:$0xff]
        %v418 = vld [vmem:[#allocation5 + $0x20] sm:$0xff]
        %v419 = vld [vmem:[#allocation5 + $0x28] sm:$0xff]
        %v420 = vld [vmem:[#allocation5 + $0x30] sm:$0xff]
        %v421 = vld [vmem:[#allocation5 + $0x38] sm:$0xff]
        %v422 = vld [vmem:[#allocation5 + $0x40] sm:$0xff]
        %v423 = vld [vmem:[#allocation5 + $0x48] sm:$0xff]
        %v424 = vld [vmem:[#allocation5 + $0x50] sm:$0xff]
        %v425 = vld [vmem:[#allocation5 + $0x58] sm:$0xff]
        %v426 = vld [vmem:[#allocation5 + $0x60] sm:$0xff]
        %v427 = vld [vmem:[#allocation5 + $0x68] sm:$0xff]
        %v428 = vld [vmem:[#allocation5 + $0x70] sm:$0xff]
        %v429 = vld [vmem:[#allocation5 + $0x78] sm:$0xff]
        %v430 = vld [vmem:[#allocation5 + $0x80] sm:$0xff]
        %v431 = vld [vmem:[#allocation5 + $0x88] sm:$0xff]
        %v432 = vld [vmem:[#allocation5 + $0x90] sm:$0xff]
        %v433 = vld [vmem:[#allocation5 + $0x98] sm:$0xff]
        %v434 = vld [vmem:[#allocation5 + $0xa0] sm:$0xff]
        %v435 = vld [vmem:[#allocation5 + $0xa8] sm:$0xff]
        %v436 = vld [vmem:[#allocation5 + $0xb0] sm:$0xff]
        %v437 = vld [vmem:[#allocation5 + $0xb8] sm:$0xff]
        %v438 = vld [vmem:[#allocation5 + $0xc0] sm:$0xff]
        %v439 = vld [vmem:[#allocation5 + $0xc8] sm:$0xff]
        %v440 = vld [vmem:[#allocation5 + $0xd0] sm:$0xff]
        %v441 = vld [vmem:[#allocation5 + $0xd8] sm:$0xff]
        %v442 = vld [vmem:[#allocation5 + $0xe0] sm:$0xff]
        %v443 = vld [vmem:[#allocation5 + $0xe8] sm:$0xff]
        %v444 = vld [vmem:[#allocation5 + $0xf0] sm:$0xff]
        %v445 = vld [vmem:[#allocation5 + $0xf8] sm:$0xff]
        %v446 = vld [vmem:[%s2] sm:$0xf]
        %v448 = vlaneseq
        %v449 = vshrl.u32 %v448, 7
        %v450 = vsub.s32 0, %v449
        %v451 = vrot.slane %v446, %v450
        %v452 = vlaneseq
        %v453 = vshrl.u32 %v452, 7
        %v454 = vsub.s32 1, %v453
        %v455 = vrot.slane %v446, %v454
        %v456 = vlaneseq
        %v457 = vshrl.u32 %v456, 7
        %v458 = vsub.s32 2, %v457
        %v459 = vrot.slane %v446, %v458
        %v460 = vlaneseq
        %v461 = vshrl.u32 %v460, 7
        %v462 = vsub.s32 3, %v461
        %v463 = vrot.slane %v446, %v462
        %v484 = vunpack.c.l.b16 %v398
        %v485 = vunpack.c.l.b16 %v399
        %v486 = vunpack.c.l.b16 %v400
        %v487 = vunpack.c.l.b16 %v401
        %v488 = vunpack.c.l.b16 %v402
        %v489 = vunpack.c.l.b16 %v403
        %v490 = vunpack.c.l.b16 %v404
        %v491 = vunpack.c.l.b16 %v405
        %v492 = vunpack.c.l.b16 %v406
        %v493 = vunpack.c.l.b16 %v407
        %v494 = vunpack.c.l.b16 %v408
        %v495 = vunpack.c.l.b16 %v409
        %v496 = vunpack.c.l.b16 %v410
        %v497 = vunpack.c.l.b16 %v411
        %v498 = vunpack.c.l.b16 %v412
        %v499 = vunpack.c.l.b16 %v413
        %v500 = vpack.c.b16 %v485, %v484
        %v501 = vpack.c.b16 %v487, %v486
        %v502 = vpack.c.b16 %v489, %v488
        %v503 = vpack.c.b16 %v491, %v490
        %v504 = vpack.c.b16 %v493, %v492
        %v505 = vpack.c.b16 %v495, %v494
        %v506 = vpack.c.b16 %v497, %v496
        %v507 = vpack.c.b16 %v499, %v498
        %v548 = vunpack.c.l.b16 %v414
        %v549 = vunpack.c.h.b16 %v414
        %v550 = vunpack.c.l.b16 %v415
        %v551 = vunpack.c.h.b16 %v415
        %v552 = vunpack.c.l.b16 %v416
        %v553 = vunpack.c.h.b16 %v416
        %v554 = vunpack.c.l.b16 %v417
        %v555 = vunpack.c.h.b16 %v417
        %v556 = vunpack.c.l.b16 %v418
        %v557 = vunpack.c.h.b16 %v418
        %v558 = vunpack.c.l.b16 %v419
        %v559 = vunpack.c.h.b16 %v419
        %v560 = vunpack.c.l.b16 %v420
        %v561 = vunpack.c.h.b16 %v420
        %v562 = vunpack.c.l.b16 %v421
        %v563 = vunpack.c.h.b16 %v421
        %v564 = vunpack.c.l.b16 %v422
        %v565 = vunpack.c.h.b16 %v422
        %v566 = vunpack.c.l.b16 %v423
        %v567 = vunpack.c.h.b16 %v423
        %v568 = vunpack.c.l.b16 %v424
        %v569 = vunpack.c.h.b16 %v424
        %v570 = vunpack.c.l.b16 %v425
        %v571 = vunpack.c.h.b16 %v425
        %v572 = vunpack.c.l.b16 %v426
        %v573 = vunpack.c.h.b16 %v426
        %v574 = vunpack.c.l.b16 %v427
        %v575 = vunpack.c.h.b16 %v427
        %v576 = vunpack.c.l.b16 %v428
        %v577 = vunpack.c.h.b16 %v428
        %v578 = vunpack.c.l.b16 %v429
        %v579 = vunpack.c.h.b16 %v429
        %v580 = vunpack.c.l.b16 %v430
        %v581 = vunpack.c.h.b16 %v430
        %v582 = vunpack.c.l.b16 %v431
        %v583 = vunpack.c.h.b16 %v431
        %v584 = vunpack.c.l.b16 %v432
        %v585 = vunpack.c.h.b16 %v432
        %v586 = vunpack.c.l.b16 %v433
        %v587 = vunpack.c.h.b16 %v433
        %v588 = vunpack.c.l.b16 %v434
        %v589 = vunpack.c.h.b16 %v434
        %v590 = vunpack.c.l.b16 %v435
        %v591 = vunpack.c.h.b16 %v435
        %v592 = vunpack.c.l.b16 %v436
        %v593 = vunpack.c.h.b16 %v436
        %v594 = vunpack.c.l.b16 %v437
        %v595 = vunpack.c.h.b16 %v437
        %v596 = vunpack.c.l.b16 %v438
        %v597 = vunpack.c.h.b16 %v438
        %v598 = vunpack.c.l.b16 %v439
        %v599 = vunpack.c.h.b16 %v439
        %v600 = vunpack.c.l.b16 %v440
        %v601 = vunpack.c.h.b16 %v440
        %v602 = vunpack.c.l.b16 %v441
        %v603 = vunpack.c.h.b16 %v441
        %v604 = vunpack.c.l.b16 %v442
        %v605 = vunpack.c.h.b16 %v442
        %v606 = vunpack.c.l.b16 %v443
        %v607 = vunpack.c.h.b16 %v443
        %v608 = vunpack.c.l.b16 %v444
        %v609 = vunpack.c.h.b16 %v444
        %v610 = vunpack.c.l.b16 %v445
        %v611 = vunpack.c.h.b16 %v445
        %v612 = vpack.c.b16 %v552, %v548
        %v613 = vpack.c.b16 %v553, %v549
        %v614 = vpack.c.b16 %v554, %v550
        %v615 = vpack.c.b16 %v555, %v551
        %v616 = vpack.c.b16 %v560, %v556
        %v617 = vpack.c.b16 %v561, %v557
        %v618 = vpack.c.b16 %v562, %v558
        %v619 = vpack.c.b16 %v563, %v559
        %v620 = vpack.c.b16 %v568, %v564
        %v621 = vpack.c.b16 %v569, %v565
        %v622 = vpack.c.b16 %v570, %v566
        %v623 = vpack.c.b16 %v571, %v567
        %v624 = vpack.c.b16 %v576, %v572
        %v625 = vpack.c.b16 %v577, %v573
        %v626 = vpack.c.b16 %v578, %v574
        %v627 = vpack.c.b16 %v579, %v575
        %v628 = vpack.c.b16 %v584, %v580
        %v629 = vpack.c.b16 %v585, %v581
        %v630 = vpack.c.b16 %v586, %v582
        %v631 = vpack.c.b16 %v587, %v583
        %v632 = vpack.c.b16 %v592, %v588
        %v633 = vpack.c.b16 %v593, %v589
        %v634 = vpack.c.b16 %v594, %v590
        %v635 = vpack.c.b16 %v595, %v591
        %v636 = vpack.c.b16 %v600, %v596
        %v637 = vpack.c.b16 %v601, %v597
        %v638 = vpack.c.b16 %v602, %v598
        %v639 = vpack.c.b16 %v603, %v599
        %v640 = vpack.c.b16 %v608, %v604
        %v641 = vpack.c.b16 %v609, %v605
        %v642 = vpack.c.b16 %v610, %v606
        %v643 = vpack.c.b16 %v611, %v607
        %676 = vmatprep.subr.bf16.mxu0 %v613
        %677 = vmatpush1.bf16.msra.mxu0 %v612
        %678 = vmatprep.subr.bf16.mxu0 %v617
        %679 = vmatpush1.bf16.msra.mxu0 %v616
        %680 = vmatprep.subr.bf16.mxu0 %v621
        %681 = vmatpush1.bf16.msra.mxu0 %v620
        %682 = vmatprep.subr.bf16.mxu0 %v625
        %683 = vmatpush1.bf16.msra.mxu0 %v624
        %684 = vmatprep.subr.bf16.mxu0 %v629
        %685 = vmatpush1.bf16.msra.mxu0 %v628
        %686 = vmatprep.subr.bf16.mxu0 %v633
        %687 = vmatpush1.bf16.msra.mxu0 %v632
        %688 = vmatprep.subr.bf16.mxu0 %v637
        %689 = vmatpush1.bf16.msra.mxu0 %v636
        %690 = vmatprep.subr.bf16.mxu0 %v641
        %691 = vmatpush1.bf16.msra.mxu0 %v640
        %692 = vmatprep.subr.bf16.mxu0 0
        %693 = vmatpush1.bf16.msra.mxu0 0
        %694 = vmatprep.subr.bf16.mxu0 0
        %695 = vmatpush1.bf16.msra.mxu0 0
        %696 = vmatprep.subr.bf16.mxu0 0
        %697 = vmatpush1.bf16.msra.mxu0 0
        %698 = vmatprep.subr.bf16.mxu0 0
        %699 = vmatpush1.bf16.msra.mxu0 0
        %700 = vmatprep.subr.bf16.mxu0 0
        %701 = vmatpush1.bf16.msra.mxu0 0
        %702 = vmatprep.subr.bf16.mxu0 0
        %703 = vmatpush1.bf16.msra.mxu0 0
        %704 = vmatprep.subr.bf16.mxu0 0
        %705 = vmatpush1.bf16.msra.mxu0 0
        %706 = vmatprep.subr.bf16.mxu0 0
        %707 = vmatpush1.bf16.msra.mxu0 0
        %708 = vmatprep.mubr.bf16.mxu0 0
        %709 = vmatmul.mubr.bf16.gmra.mrb[0].mxu0 %v500
        %v710 = vpop.f32.mrb[0].mxu0
        %v711 = vadd.f32 %v451, %v710
        %v712 = vpop.f32.mrb[0].mxu0
        %v713 = vadd.f32 %v455, %v712
        %v714 = vpop.f32.mrb[0].mxu0
        %v715 = vadd.f32 %v451, %v714
        %v716 = vpop.f32.mrb[0].mxu0
        %v717 = vadd.f32 %v455, %v716
        %718 = vmatprep.mubr.bf16.mxu0 0
        %719 = vmatmul.mubr.bf16.gmra.mrb[0].mxu0 %v501
        %v720 = vpop.f32.mrb[0].mxu0
        %v721 = vadd.f32 %v451, %v720
        %v722 = vpop.f32.mrb[0].mxu0
        %v723 = vadd.f32 %v455, %v722
        %v724 = vpop.f32.mrb[0].mxu0
        %v725 = vadd.f32 %v451, %v724
        %v726 = vpop.f32.mrb[0].mxu0
        %v727 = vadd.f32 %v455, %v726
        %728 = vmatprep.mubr.bf16.mxu0 0
        %729 = vmatmul.mubr.bf16.gmra.mrb[0].mxu0 %v502
        %v730 = vpop.f32.mrb[0].mxu0
        %v731 = vadd.f32 %v451, %v730
        %v732 = vpop.f32.mrb[0].mxu0
        %v733 = vadd.f32 %v455, %v732
        %v734 = vpop.f32.mrb[0].mxu0
        %v735 = vadd.f32 %v451, %v734
        %v736 = vpop.f32.mrb[0].mxu0
        %v737 = vadd.f32 %v455, %v736
        %738 = vmatprep.mubr.bf16.mxu0 0
        %739 = vmatmul.mubr.bf16.gmra.mrb[0].mxu0 %v503
        %v740 = vpop.f32.mrb[0].mxu0
        %v741 = vadd.f32 %v451, %v740
        %v742 = vpop.f32.mrb[0].mxu0
        %v743 = vadd.f32 %v455, %v742
        %v744 = vpop.f32.mrb[0].mxu0
        %v745 = vadd.f32 %v451, %v744
        %v746 = vpop.f32.mrb[0].mxu0
        %v747 = vadd.f32 %v455, %v746
        %748 = vmatprep.mubr.bf16.mxu0 0
        %749 = vmatmul.mubr.bf16.gmra.mrb[0].mxu0 %v504
        %v750 = vpop.f32.mrb[0].mxu0
        %v751 = vadd.f32 %v451, %v750
        %v752 = vpop.f32.mrb[0].mxu0
        %v753 = vadd.f32 %v455, %v752
        %v754 = vpop.f32.mrb[0].mxu0
        %v755 = vadd.f32 %v451, %v754
        %v756 = vpop.f32.mrb[0].mxu0
        %v757 = vadd.f32 %v455, %v756
        %758 = vmatprep.mubr.bf16.mxu0 0
        %759 = vmatmul.mubr.bf16.gmra.mrb[0].mxu0 %v505
        %v760 = vpop.f32.mrb[0].mxu0
        %v761 = vadd.f32 %v451, %v760
        %v762 = vpop.f32.mrb[0].mxu0
        %v763 = vadd.f32 %v455, %v762
        %v764 = vpop.f32.mrb[0].mxu0
        %v765 = vadd.f32 %v451, %v764
        %v766 = vpop.f32.mrb[0].mxu0
        %v767 = vadd.f32 %v455, %v766
        %768 = vmatprep.mubr.bf16.mxu0 0
        %769 = vmatmul.mubr.bf16.gmra.mrb[0].mxu0 %v506
        %v770 = vpop.f32.mrb[0].mxu0
        %v771 = vadd.f32 %v451, %v770
        %v772 = vpop.f32.mrb[0].mxu0
        %v773 = vadd.f32 %v455, %v772
        %v774 = vpop.f32.mrb[0].mxu0
        %v775 = vadd.f32 %v451, %v774
        %v776 = vpop.f32.mrb[0].mxu0
        %v777 = vadd.f32 %v455, %v776
        %778 = vmatprep.mubr.bf16.mxu0 0
        %779 = vmatmul.mubr.bf16.gmra.mrb[0].mxu0 %v507
        %v780 = vpop.f32.mrb[0].mxu0
        %v781 = vadd.f32 %v451, %v780
        %v782 = vpop.f32.mrb[0].mxu0
        %v783 = vadd.f32 %v455, %v782
        %v784 = vpop.f32.mrb[0].mxu0
        %v785 = vadd.f32 %v451, %v784
        %v786 = vpop.f32.mrb[0].mxu0
        %v787 = vadd.f32 %v455, %v786
        %788 = vdwg.mxu0
        %789 = vmatprep.subr.bf16.mxu0 %v615
        %790 = vmatpush1.bf16.msra.mxu0 %v614
        %791 = vmatprep.subr.bf16.mxu0 %v619
        %792 = vmatpush1.bf16.msra.mxu0 %v618
        %793 = vmatprep.subr.bf16.mxu0 %v623
        %794 = vmatpush1.bf16.msra.mxu0 %v622
        %795 = vmatprep.subr.bf16.mxu0 %v627
        %796 = vmatpush1.bf16.msra.mxu0 %v626
        %797 = vmatprep.subr.bf16.mxu0 %v631
        %798 = vmatpush1.bf16.msra.mxu0 %v630
        %799 = vmatprep.subr.bf16.mxu0 %v635
        %800 = vmatpush1.bf16.msra.mxu0 %v634
        %801 = vmatprep.subr.bf16.mxu0 %v639
        %802 = vmatpush1.bf16.msra.mxu0 %v638
        %803 = vmatprep.subr.bf16.mxu0 %v643
        %804 = vmatpush1.bf16.msra.mxu0 %v642
        %805 = vmatprep.subr.bf16.mxu0 0
        %806 = vmatpush1.bf16.msra.mxu0 0
        %807 = vmatprep.subr.bf16.mxu0 0
        %808 = vmatpush1.bf16.msra.mxu0 0
        %809 = vmatprep.subr.bf16.mxu0 0
        %810 = vmatpush1.bf16.msra.mxu0 0
        %811 = vmatprep.subr.bf16.mxu0 0
        %812 = vmatpush1.bf16.msra.mxu0 0
        %813 = vmatprep.subr.bf16.mxu0 0
        %814 = vmatpush1.bf16.msra.mxu0 0
        %815 = vmatprep.subr.bf16.mxu0 0
        %816 = vmatpush1.bf16.msra.mxu0 0
        %817 = vmatprep.subr.bf16.mxu0 0
        %818 = vmatpush1.bf16.msra.mxu0 0
        %819 = vmatprep.subr.bf16.mxu0 0
        %820 = vmatpush1.bf16.msra.mxu0 0
        %821 = vmatprep.mubr.bf16.mxu0 0
        %822 = vmatmul.mubr.bf16.gmra.mrb[0].mxu0 %v500
        %v823 = vpop.f32.mrb[0].mxu0
        %v824 = vadd.f32 %v459, %v823
        %v825 = vpop.f32.mrb[0].mxu0
        %v826 = vadd.f32 %v463, %v825
        %v827 = vpop.f32.mrb[0].mxu0
        %v828 = vadd.f32 %v459, %v827
        %v829 = vpop.f32.mrb[0].mxu0
        %v830 = vadd.f32 %v463, %v829
        %831 = vmatprep.mubr.bf16.mxu0 0
        %832 = vmatmul.mubr.bf16.gmra.mrb[0].mxu0 %v501
        %v833 = vpop.f32.mrb[0].mxu0
        %v834 = vadd.f32 %v459, %v833
        %v835 = vpop.f32.mrb[0].mxu0
        %v836 = vadd.f32 %v463, %v835
        %v837 = vpop.f32.mrb[0].mxu0
        %v838 = vadd.f32 %v459, %v837
        %v839 = vpop.f32.mrb[0].mxu0
        %v840 = vadd.f32 %v463, %v839
        %841 = vmatprep.mubr.bf16.mxu0 0
        %842 = vmatmul.mubr.bf16.gmra.mrb[0].mxu0 %v502
        %v843 = vpop.f32.mrb[0].mxu0
        %v844 = vadd.f32 %v459, %v843
        %v845 = vpop.f32.mrb[0].mxu0
        %v846 = vadd.f32 %v463, %v845
        %v847 = vpop.f32.mrb[0].mxu0
        %v848 = vadd.f32 %v459, %v847
        %v849 = vpop.f32.mrb[0].mxu0
        %v850 = vadd.f32 %v463, %v849
        %851 = vmatprep.mubr.bf16.mxu0 0
        %852 = vmatmul.mubr.bf16.gmra.mrb[0].mxu0 %v503
        %v853 = vpop.f32.mrb[0].mxu0
        %v854 = vadd.f32 %v459, %v853
        %v855 = vpop.f32.mrb[0].mxu0
        %v856 = vadd.f32 %v463, %v855
        %v857 = vpop.f32.mrb[0].mxu0
        %v858 = vadd.f32 %v459, %v857
        %v859 = vpop.f32.mrb[0].mxu0
        %v860 = vadd.f32 %v463, %v859
        %861 = vmatprep.mubr.bf16.mxu0 0
        %862 = vmatmul.mubr.bf16.gmra.mrb[0].mxu0 %v504
        %v863 = vpop.f32.mrb[0].mxu0
        %v864 = vadd.f32 %v459, %v863
        %v865 = vpop.f32.mrb[0].mxu0
        %v866 = vadd.f32 %v463, %v865
        %v867 = vpop.f32.mrb[0].mxu0
        %v868 = vadd.f32 %v459, %v867
        %v869 = vpop.f32.mrb[0].mxu0
        %v870 = vadd.f32 %v463, %v869
        %871 = vmatprep.mubr.bf16.mxu0 0
        %872 = vmatmul.mubr.bf16.gmra.mrb[0].mxu0 %v505
        %v873 = vpop.f32.mrb[0].mxu0
        %v874 = vadd.f32 %v459, %v873
        %v875 = vpop.f32.mrb[0].mxu0
        %v876 = vadd.f32 %v463, %v875
        %v877 = vpop.f32.mrb[0].mxu0
        %v878 = vadd.f32 %v459, %v877
        %v879 = vpop.f32.mrb[0].mxu0
        %v880 = vadd.f32 %v463, %v879
        %881 = vmatprep.mubr.bf16.mxu0 0
        %882 = vmatmul.mubr.bf16.gmra.mrb[0].mxu0 %v506
        %v883 = vpop.f32.mrb[0].mxu0
        %v884 = vadd.f32 %v459, %v883
        %v885 = vpop.f32.mrb[0].mxu0
        %v886 = vadd.f32 %v463, %v885
        %v887 = vpop.f32.mrb[0].mxu0
        %v888 = vadd.f32 %v459, %v887
        %v889 = vpop.f32.mrb[0].mxu0
        %v890 = vadd.f32 %v463, %v889
        %891 = vmatprep.mubr.bf16.mxu0 0
        %892 = vmatmul.mubr.bf16.gmra.mrb[0].mxu0 %v507
        %v893 = vpop.f32.mrb[0].mxu0
        %v894 = vadd.f32 %v459, %v893
        %v895 = vpop.f32.mrb[0].mxu0
        %v896 = vadd.f32 %v463, %v895
        %v897 = vpop.f32.mrb[0].mxu0
        %v898 = vadd.f32 %v459, %v897
        %v899 = vpop.f32.mrb[0].mxu0
        %v900 = vadd.f32 %v463, %v899
        %901 = vdwg.mxu0
        %v902 = vmul.f32 %v711, 0.2
        %v903 = vmul.f32 %v713, 0.2
        %v904 = vmul.f32 %v824, 0.2
        %v905 = vmul.f32 %v826, 0.2
        %v906 = vmul.f32 %v715, 0.2
        %v907 = vmul.f32 %v717, 0.2
        %v908 = vmul.f32 %v828, 0.2
        %v909 = vmul.f32 %v830, 0.2
        %v910 = vmul.f32 %v721, 0.2
        %v911 = vmul.f32 %v723, 0.2
        %v912 = vmul.f32 %v834, 0.2
        %v913 = vmul.f32 %v836, 0.2
        %v914 = vmul.f32 %v725, 0.2
        %v915 = vmul.f32 %v727, 0.2
        %v916 = vmul.f32 %v838, 0.2
        %v917 = vmul.f32 %v840, 0.2
        %v918 = vmul.f32 %v731, 0.2
        %v919 = vmul.f32 %v733, 0.2
        %v920 = vmul.f32 %v844, 0.2
        %v921 = vmul.f32 %v846, 0.2
        %v922 = vmul.f32 %v735, 0.2
        %v923 = vmul.f32 %v737, 0.2
        %v924 = vmul.f32 %v848, 0.2
        %v925 = vmul.f32 %v850, 0.2
        %v926 = vmul.f32 %v741, 0.2
        %v927 = vmul.f32 %v743, 0.2
        %v928 = vmul.f32 %v854, 0.2
        %v929 = vmul.f32 %v856, 0.2
        %v930 = vmul.f32 %v745, 0.2
        %v931 = vmul.f32 %v747, 0.2
        %v932 = vmul.f32 %v858, 0.2
        %v933 = vmul.f32 %v860, 0.2
        %v934 = vmul.f32 %v751, 0.2
        %v935 = vmul.f32 %v753, 0.2
        %v936 = vmul.f32 %v864, 0.2
        %v937 = vmul.f32 %v866, 0.2
        %v938 = vmul.f32 %v755, 0.2
        %v939 = vmul.f32 %v757, 0.2
        %v940 = vmul.f32 %v868, 0.2
        %v941 = vmul.f32 %v870, 0.2
        %v942 = vmul.f32 %v761, 0.2
        %v943 = vmul.f32 %v763, 0.2
        %v944 = vmul.f32 %v874, 0.2
        %v945 = vmul.f32 %v876, 0.2
        %v946 = vmul.f32 %v765, 0.2
        %v947 = vmul.f32 %v767, 0.2
        %v948 = vmul.f32 %v878, 0.2
        %v949 = vmul.f32 %v880, 0.2
        %v950 = vmul.f32 %v771, 0.2
        %v951 = vmul.f32 %v773, 0.2
        %v952 = vmul.f32 %v884, 0.2
        %v953 = vmul.f32 %v886, 0.2
        %v954 = vmul.f32 %v775, 0.2
        %v955 = vmul.f32 %v777, 0.2
        %v956 = vmul.f32 %v888, 0.2
        %v957 = vmul.f32 %v890, 0.2
        %v958 = vmul.f32 %v781, 0.2
        %v959 = vmul.f32 %v783, 0.2
        %v960 = vmul.f32 %v894, 0.2
        %v961 = vmul.f32 %v896, 0.2
        %v962 = vmul.f32 %v785, 0.2
        %v963 = vmul.f32 %v787, 0.2
        %v964 = vmul.f32 %v898, 0.2
        %v965 = vmul.f32 %v900, 0.2
        %v966 = vmax.f32 %v711, %v902
        %v967 = vmax.f32 %v713, %v903
        %v968 = vmax.f32 %v824, %v904
        %v969 = vmax.f32 %v826, %v905
        %v970 = vmax.f32 %v715, %v906
        %v971 = vmax.f32 %v717, %v907
        %v972 = vmax.f32 %v828, %v908
        %v973 = vmax.f32 %v830, %v909
        %v974 = vmax.f32 %v721, %v910
        %v975 = vmax.f32 %v723, %v911
        %v976 = vmax.f32 %v834, %v912
        %v977 = vmax.f32 %v836, %v913
        %v978 = vmax.f32 %v725, %v914
        %v979 = vmax.f32 %v727, %v915
        %v980 = vmax.f32 %v838, %v916
        %v981 = vmax.f32 %v840, %v917
        %v982 = vmax.f32 %v731, %v918
        %v983 = vmax.f32 %v733, %v919
        %v984 = vmax.f32 %v844, %v920
        %v985 = vmax.f32 %v846, %v921
        %v986 = vmax.f32 %v735, %v922
        %v987 = vmax.f32 %v737, %v923
        %v988 = vmax.f32 %v848, %v924
        %v989 = vmax.f32 %v850, %v925
        %v990 = vmax.f32 %v741, %v926
        %v991 = vmax.f32 %v743, %v927
        %v992 = vmax.f32 %v854, %v928
        %v993 = vmax.f32 %v856, %v929
        %v994 = vmax.f32 %v745, %v930
        %v995 = vmax.f32 %v747, %v931
        %v996 = vmax.f32 %v858, %v932
        %v997 = vmax.f32 %v860, %v933
        %v998 = vmax.f32 %v751, %v934
        %v999 = vmax.f32 %v753, %v935
        %v1000 = vmax.f32 %v864, %v936
        %v1001 = vmax.f32 %v866, %v937
        %v1002 = vmax.f32 %v755, %v938
        %v1003 = vmax.f32 %v757, %v939
        %v1004 = vmax.f32 %v868, %v940
        %v1005 = vmax.f32 %v870, %v941
        %v1006 = vmax.f32 %v761, %v942
        %v1007 = vmax.f32 %v763, %v943
        %v1008 = vmax.f32 %v874, %v944
        %v1009 = vmax.f32 %v876, %v945
        %v1010 = vmax.f32 %v765, %v946
        %v1011 = vmax.f32 %v767, %v947
        %v1012 = vmax.f32 %v878, %v948
        %v1013 = vmax.f32 %v880, %v949
        %v1014 = vmax.f32 %v771, %v950
        %v1015 = vmax.f32 %v773, %v951
        %v1016 = vmax.f32 %v884, %v952
        %v1017 = vmax.f32 %v886, %v953
        %v1018 = vmax.f32 %v775, %v954
        %v1019 = vmax.f32 %v777, %v955
        %v1020 = vmax.f32 %v888, %v956
        %v1021 = vmax.f32 %v890, %v957
        %v1022 = vmax.f32 %v781, %v958
        %v1023 = vmax.f32 %v783, %v959
        %v1024 = vmax.f32 %v894, %v960
        %v1025 = vmax.f32 %v896, %v961
        %v1026 = vmax.f32 %v785, %v962
        %v1027 = vmax.f32 %v787, %v963
        %v1028 = vmax.f32 %v898, %v964
        %v1029 = vmax.f32 %v900, %v965
        %v1030 = vpack.c.bf16 %v970, %v966
        %v1031 = vpack.c.bf16 %v971, %v967
        %v1032 = vpack.c.bf16 %v972, %v968
        %v1033 = vpack.c.bf16 %v973, %v969
        %v1034 = vpack.c.bf16 %v978, %v974
        %v1035 = vpack.c.bf16 %v979, %v975
        %v1036 = vpack.c.bf16 %v980, %v976
        %v1037 = vpack.c.bf16 %v981, %v977
        %v1038 = vpack.c.bf16 %v986, %v982
        %v1039 = vpack.c.bf16 %v987, %v983
        %v1040 = vpack.c.bf16 %v988, %v984
        %v1041 = vpack.c.bf16 %v989, %v985
        %v1042 = vpack.c.bf16 %v994, %v990
        %v1043 = vpack.c.bf16 %v995, %v991
        %v1044 = vpack.c.bf16 %v996, %v992
        %v1045 = vpack.c.bf16 %v997, %v993
        %v1046 = vpack.c.bf16 %v1002, %v998
        %v1047 = vpack.c.bf16 %v1003, %v999
        %v1048 = vpack.c.bf16 %v1004, %v1000
        %v1049 = vpack.c.bf16 %v1005, %v1001
        %v1050 = vpack.c.bf16 %v1010, %v1006
        %v1051 = vpack.c.bf16 %v1011, %v1007
        %v1052 = vpack.c.bf16 %v1012, %v1008
        %v1053 = vpack.c.bf16 %v1013, %v1009
        %v1054 = vpack.c.bf16 %v1018, %v1014
        %v1055 = vpack.c.bf16 %v1019, %v1015
        %v1056 = vpack.c.bf16 %v1020, %v1016
        %v1057 = vpack.c.bf16 %v1021, %v1017
        %v1058 = vpack.c.bf16 %v1026, %v1022
        %v1059 = vpack.c.bf16 %v1027, %v1023
        %v1060 = vpack.c.bf16 %v1028, %v1024
        %v1061 = vpack.c.bf16 %v1029, %v1025
        %v1062 = vld [vmem:[#allocation7] sm:$0xff]
        %v1063 = vld [vmem:[#allocation7 + $0x8] sm:$0xff]
        %v1064 = vld [vmem:[#allocation7 + $0x10] sm:$0xff]
        %v1065 = vld [vmem:[#allocation7 + $0x18] sm:$0xff]
        %v1066 = vld [vmem:[#allocation7 + $0x20] sm:$0xff]
        %v1067 = vld [vmem:[#allocation7 + $0x28] sm:$0xff]
        %v1068 = vld [vmem:[#allocation7 + $0x30] sm:$0xff]
        %v1069 = vld [vmem:[#allocation7 + $0x38] sm:$0xff]
        %v1070 = vld [vmem:[#allocation7 + $0x40] sm:$0xff]
        %v1071 = vld [vmem:[#allocation7 + $0x48] sm:$0xff]
        %v1072 = vld [vmem:[#allocation7 + $0x50] sm:$0xff]
        %v1073 = vld [vmem:[#allocation7 + $0x58] sm:$0xff]
        %v1074 = vld [vmem:[#allocation7 + $0x60] sm:$0xff]
        %v1075 = vld [vmem:[#allocation7 + $0x68] sm:$0xff]
        %v1076 = vld [vmem:[#allocation7 + $0x70] sm:$0xff]
        %v1077 = vld [vmem:[#allocation7 + $0x78] sm:$0xff]
        %v1078 = vld [vmem:[#allocation7 + $0x80] sm:$0xff]
        %v1079 = vld [vmem:[#allocation7 + $0x88] sm:$0xff]
        %v1080 = vld [vmem:[#allocation7 + $0x90] sm:$0xff]
        %v1081 = vld [vmem:[#allocation7 + $0x98] sm:$0xff]
        %v1082 = vld [vmem:[#allocation7 + $0xa0] sm:$0xff]
        %v1083 = vld [vmem:[#allocation7 + $0xa8] sm:$0xff]
        %v1084 = vld [vmem:[#allocation7 + $0xb0] sm:$0xff]
        %v1085 = vld [vmem:[#allocation7 + $0xb8] sm:$0xff]
        %v1086 = vld [vmem:[#allocation7 + $0xc0] sm:$0xff]
        %v1087 = vld [vmem:[#allocation7 + $0xc8] sm:$0xff]
        %v1088 = vld [vmem:[#allocation7 + $0xd0] sm:$0xff]
        %v1089 = vld [vmem:[#allocation7 + $0xd8] sm:$0xff]
        %v1090 = vld [vmem:[#allocation7 + $0xe0] sm:$0xff]
        %v1091 = vld [vmem:[#allocation7 + $0xe8] sm:$0xff]
        %v1092 = vld [vmem:[#allocation7 + $0xf0] sm:$0xff]
        %v1093 = vld [vmem:[#allocation7 + $0xf8] sm:$0xff]
        %v1094 = vld [vmem:[#allocation7 + $0x100] sm:$0xff]
        %v1095 = vld [vmem:[#allocation7 + $0x108] sm:$0xff]
        %v1096 = vld [vmem:[#allocation7 + $0x110] sm:$0xff]
        %v1097 = vld [vmem:[#allocation7 + $0x118] sm:$0xff]
        %v1098 = vld [vmem:[#allocation7 + $0x120] sm:$0xff]
        %v1099 = vld [vmem:[#allocation7 + $0x128] sm:$0xff]
        %v1100 = vld [vmem:[#allocation7 + $0x130] sm:$0xff]
        %v1101 = vld [vmem:[#allocation7 + $0x138] sm:$0xff]
        %v1102 = vld [vmem:[#allocation7 + $0x140] sm:$0xff]
        %v1103 = vld [vmem:[#allocation7 + $0x148] sm:$0xff]
        %v1104 = vld [vmem:[#allocation7 + $0x150] sm:$0xff]
        %v1105 = vld [vmem:[#allocation7 + $0x158] sm:$0xff]
        %v1106 = vld [vmem:[#allocation7 + $0x160] sm:$0xff]
        %v1107 = vld [vmem:[#allocation7 + $0x168] sm:$0xff]
        %v1108 = vld [vmem:[#allocation7 + $0x170] sm:$0xff]
        %v1109 = vld [vmem:[#allocation7 + $0x178] sm:$0xff]
        %v1110 = vld [vmem:[#allocation7 + $0x180] sm:$0xff]
        %v1111 = vld [vmem:[#allocation7 + $0x188] sm:$0xff]
        %v1112 = vld [vmem:[#allocation7 + $0x190] sm:$0xff]
        %v1113 = vld [vmem:[#allocation7 + $0x198] sm:$0xff]
        %v1114 = vld [vmem:[#allocation7 + $0x1a0] sm:$0xff]
        %v1115 = vld [vmem:[#allocation7 + $0x1a8] sm:$0xff]
        %v1116 = vld [vmem:[#allocation7 + $0x1b0] sm:$0xff]
        %v1117 = vld [vmem:[#allocation7 + $0x1b8] sm:$0xff]
        %v1118 = vld [vmem:[#allocation7 + $0x1c0] sm:$0xff]
        %v1119 = vld [vmem:[#allocation7 + $0x1c8] sm:$0xff]
        %v1120 = vld [vmem:[#allocation7 + $0x1d0] sm:$0xff]
        %v1121 = vld [vmem:[#allocation7 + $0x1d8] sm:$0xff]
        %v1122 = vld [vmem:[#allocation7 + $0x1e0] sm:$0xff]
        %v1123 = vld [vmem:[#allocation7 + $0x1e8] sm:$0xff]
        %v1124 = vld [vmem:[#allocation7 + $0x1f0] sm:$0xff]
        %v1125 = vld [vmem:[#allocation7 + $0x1f8] sm:$0xff]
        %v1126 = vld [vmem:[#allocation7 + $0x200] sm:$0xff]
        %v1127 = vld [vmem:[#allocation7 + $0x208] sm:$0xff]
        %v1128 = vld [vmem:[#allocation7 + $0x210] sm:$0xff]
        %v1129 = vld [vmem:[#allocation7 + $0x218] sm:$0xff]
        %v1130 = vld [vmem:[#allocation7 + $0x220] sm:$0xff]
        %v1131 = vld [vmem:[#allocation7 + $0x228] sm:$0xff]
        %v1132 = vld [vmem:[#allocation7 + $0x230] sm:$0xff]
        %v1133 = vld [vmem:[#allocation7 + $0x238] sm:$0xff]
        %v1134 = vld [vmem:[#allocation7 + $0x240] sm:$0xff]
        %v1135 = vld [vmem:[#allocation7 + $0x248] sm:$0xff]
        %v1136 = vld [vmem:[#allocation7 + $0x250] sm:$0xff]
        %v1137 = vld [vmem:[#allocation7 + $0x258] sm:$0xff]
        %v1138 = vld [vmem:[#allocation7 + $0x260] sm:$0xff]
        %v1139 = vld [vmem:[#allocation7 + $0x268] sm:$0xff]
        %v1140 = vld [vmem:[#allocation7 + $0x270] sm:$0xff]
        %v1141 = vld [vmem:[#allocation7 + $0x278] sm:$0xff]
        %v1142 = vld [vmem:[#allocation7 + $0x280] sm:$0xff]
        %v1143 = vld [vmem:[#allocation7 + $0x288] sm:$0xff]
        %v1144 = vld [vmem:[#allocation7 + $0x290] sm:$0xff]
        %v1145 = vld [vmem:[#allocation7 + $0x298] sm:$0xff]
        %v1146 = vld [vmem:[#allocation7 + $0x2a0] sm:$0xff]
        %v1147 = vld [vmem:[#allocation7 + $0x2a8] sm:$0xff]
        %v1148 = vld [vmem:[#allocation7 + $0x2b0] sm:$0xff]
        %v1149 = vld [vmem:[#allocation7 + $0x2b8] sm:$0xff]
        %v1150 = vld [vmem:[#allocation7 + $0x2c0] sm:$0xff]
        %v1151 = vld [vmem:[#allocation7 + $0x2c8] sm:$0xff]
        %v1152 = vld [vmem:[#allocation7 + $0x2d0] sm:$0xff]
        %v1153 = vld [vmem:[#allocation7 + $0x2d8] sm:$0xff]
        %v1154 = vld [vmem:[#allocation7 + $0x2e0] sm:$0xff]
        %v1155 = vld [vmem:[#allocation7 + $0x2e8] sm:$0xff]
        %v1156 = vld [vmem:[#allocation7 + $0x2f0] sm:$0xff]
        %v1157 = vld [vmem:[#allocation7 + $0x2f8] sm:$0xff]
        %v1158 = vld [vmem:[#allocation7 + $0x300] sm:$0xff]
        %v1159 = vld [vmem:[#allocation7 + $0x308] sm:$0xff]
        %v1160 = vld [vmem:[#allocation7 + $0x310] sm:$0xff]
        %v1161 = vld [vmem:[#allocation7 + $0x318] sm:$0xff]
        %v1162 = vld [vmem:[#allocation7 + $0x320] sm:$0xff]
        %v1163 = vld [vmem:[#allocation7 + $0x328] sm:$0xff]
        %v1164 = vld [vmem:[#allocation7 + $0x330] sm:$0xff]
        %v1165 = vld [vmem:[#allocation7 + $0x338] sm:$0xff]
        %v1166 = vld [vmem:[#allocation7 + $0x340] sm:$0xff]
        %v1167 = vld [vmem:[#allocation7 + $0x348] sm:$0xff]
        %v1168 = vld [vmem:[#allocation7 + $0x350] sm:$0xff]
        %v1169 = vld [vmem:[#allocation7 + $0x358] sm:$0xff]
        %v1170 = vld [vmem:[#allocation7 + $0x360] sm:$0xff]
        %v1171 = vld [vmem:[#allocation7 + $0x368] sm:$0xff]
        %v1172 = vld [vmem:[#allocation7 + $0x370] sm:$0xff]
        %v1173 = vld [vmem:[#allocation7 + $0x378] sm:$0xff]
        %v1174 = vld [vmem:[#allocation7 + $0x380] sm:$0xff]
        %v1175 = vld [vmem:[#allocation7 + $0x388] sm:$0xff]
        %v1176 = vld [vmem:[#allocation7 + $0x390] sm:$0xff]
        %v1177 = vld [vmem:[#allocation7 + $0x398] sm:$0xff]
        %v1178 = vld [vmem:[#allocation7 + $0x3a0] sm:$0xff]
        %v1179 = vld [vmem:[#allocation7 + $0x3a8] sm:$0xff]
        %v1180 = vld [vmem:[#allocation7 + $0x3b0] sm:$0xff]
        %v1181 = vld [vmem:[#allocation7 + $0x3b8] sm:$0xff]
        %v1182 = vld [vmem:[#allocation7 + $0x3c0] sm:$0xff]
        %v1183 = vld [vmem:[#allocation7 + $0x3c8] sm:$0xff]
        %v1184 = vld [vmem:[#allocation7 + $0x3d0] sm:$0xff]
        %v1185 = vld [vmem:[#allocation7 + $0x3d8] sm:$0xff]
        %v1186 = vld [vmem:[#allocation7 + $0x3e0] sm:$0xff]
        %v1187 = vld [vmem:[#allocation7 + $0x3e8] sm:$0xff]
        %v1188 = vld [vmem:[#allocation7 + $0x3f0] sm:$0xff]
        %v1189 = vld [vmem:[#allocation7 + $0x3f8] sm:$0xff]
        %v1190 = vld [vmem:[%s4] sm:$0xf]
        %v1192 = vlaneseq
        %v1193 = vshrl.u32 %v1192, 7
        %v1194 = vsub.s32 0, %v1193
        %v1195 = vrot.slane %v1190, %v1194
        %v1196 = vlaneseq
        %v1197 = vshrl.u32 %v1196, 7
        %v1198 = vsub.s32 1, %v1197
        %v1199 = vrot.slane %v1190, %v1198
        %v1200 = vlaneseq
        %v1201 = vshrl.u32 %v1200, 7
        %v1202 = vsub.s32 2, %v1201
        %v1203 = vrot.slane %v1190, %v1202
        %v1204 = vlaneseq
        %v1205 = vshrl.u32 %v1204, 7
        %v1206 = vsub.s32 3, %v1205
        %v1207 = vrot.slane %v1190, %v1206
        %v1340 = vunpack.c.l.b16 %v1062
        %v1341 = vunpack.c.h.b16 %v1062
        %v1342 = vunpack.c.l.b16 %v1063
        %v1343 = vunpack.c.h.b16 %v1063
        %v1344 = vunpack.c.l.b16 %v1064
        %v1345 = vunpack.c.h.b16 %v1064
        %v1346 = vunpack.c.l.b16 %v1065
        %v1347 = vunpack.c.h.b16 %v1065
        %v1348 = vunpack.c.l.b16 %v1066
        %v1349 = vunpack.c.h.b16 %v1066
        %v1350 = vunpack.c.l.b16 %v1067
        %v1351 = vunpack.c.h.b16 %v1067
        %v1352 = vunpack.c.l.b16 %v1068
        %v1353 = vunpack.c.h.b16 %v1068
        %v1354 = vunpack.c.l.b16 %v1069
        %v1355 = vunpack.c.h.b16 %v1069
        %v1356 = vunpack.c.l.b16 %v1070
        %v1357 = vunpack.c.h.b16 %v1070
        %v1358 = vunpack.c.l.b16 %v1071
        %v1359 = vunpack.c.h.b16 %v1071
        %v1360 = vunpack.c.l.b16 %v1072
        %v1361 = vunpack.c.h.b16 %v1072
        %v1362 = vunpack.c.l.b16 %v1073
        %v1363 = vunpack.c.h.b16 %v1073
        %v1364 = vunpack.c.l.b16 %v1074
        %v1365 = vunpack.c.h.b16 %v1074
        %v1366 = vunpack.c.l.b16 %v1075
        %v1367 = vunpack.c.h.b16 %v1075
        %v1368 = vunpack.c.l.b16 %v1076
        %v1369 = vunpack.c.h.b16 %v1076
        %v1370 = vunpack.c.l.b16 %v1077
        %v1371 = vunpack.c.h.b16 %v1077
        %v1372 = vunpack.c.l.b16 %v1078
        %v1373 = vunpack.c.h.b16 %v1078
        %v1374 = vunpack.c.l.b16 %v1079
        %v1375 = vunpack.c.h.b16 %v1079
        %v1376 = vunpack.c.l.b16 %v1080
        %v1377 = vunpack.c.h.b16 %v1080
        %v1378 = vunpack.c.l.b16 %v1081
        %v1379 = vunpack.c.h.b16 %v1081
        %v1380 = vunpack.c.l.b16 %v1082
        %v1381 = vunpack.c.h.b16 %v1082
        %v1382 = vunpack.c.l.b16 %v1083
        %v1383 = vunpack.c.h.b16 %v1083
        %v1384 = vunpack.c.l.b16 %v1084
        %v1385 = vunpack.c.h.b16 %v1084
        %v1386 = vunpack.c.l.b16 %v1085
        %v1387 = vunpack.c.h.b16 %v1085
        %v1388 = vunpack.c.l.b16 %v1086
        %v1389 = vunpack.c.h.b16 %v1086
        %v1390 = vunpack.c.l.b16 %v1087
        %v1391 = vunpack.c.h.b16 %v1087
        %v1392 = vunpack.c.l.b16 %v1088
        %v1393 = vunpack.c.h.b16 %v1088
        %v1394 = vunpack.c.l.b16 %v1089
        %v1395 = vunpack.c.h.b16 %v1089
        %v1396 = vunpack.c.l.b16 %v1090
        %v1397 = vunpack.c.h.b16 %v1090
        %v1398 = vunpack.c.l.b16 %v1091
        %v1399 = vunpack.c.h.b16 %v1091
        %v1400 = vunpack.c.l.b16 %v1092
        %v1401 = vunpack.c.h.b16 %v1092
        %v1402 = vunpack.c.l.b16 %v1093
        %v1403 = vunpack.c.h.b16 %v1093
        %v1404 = vunpack.c.l.b16 %v1094
        %v1405 = vunpack.c.h.b16 %v1094
        %v1406 = vunpack.c.l.b16 %v1095
        %v1407 = vunpack.c.h.b16 %v1095
        %v1408 = vunpack.c.l.b16 %v1096
        %v1409 = vunpack.c.h.b16 %v1096
        %v1410 = vunpack.c.l.b16 %v1097
        %v1411 = vunpack.c.h.b16 %v1097
        %v1412 = vunpack.c.l.b16 %v1098
        %v1413 = vunpack.c.h.b16 %v1098
        %v1414 = vunpack.c.l.b16 %v1099
        %v1415 = vunpack.c.h.b16 %v1099
        %v1416 = vunpack.c.l.b16 %v1100
        %v1417 = vunpack.c.h.b16 %v1100
        %v1418 = vunpack.c.l.b16 %v1101
        %v1419 = vunpack.c.h.b16 %v1101
        %v1420 = vunpack.c.l.b16 %v1102
        %v1421 = vunpack.c.h.b16 %v1102
        %v1422 = vunpack.c.l.b16 %v1103
        %v1423 = vunpack.c.h.b16 %v1103
        %v1424 = vunpack.c.l.b16 %v1104
        %v1425 = vunpack.c.h.b16 %v1104
        %v1426 = vunpack.c.l.b16 %v1105
        %v1427 = vunpack.c.h.b16 %v1105
        %v1428 = vunpack.c.l.b16 %v1106
        %v1429 = vunpack.c.h.b16 %v1106
        %v1430 = vunpack.c.l.b16 %v1107
        %v1431 = vunpack.c.h.b16 %v1107
        %v1432 = vunpack.c.l.b16 %v1108
        %v1433 = vunpack.c.h.b16 %v1108
        %v1434 = vunpack.c.l.b16 %v1109
        %v1435 = vunpack.c.h.b16 %v1109
        %v1436 = vunpack.c.l.b16 %v1110
        %v1437 = vunpack.c.h.b16 %v1110
        %v1438 = vunpack.c.l.b16 %v1111
        %v1439 = vunpack.c.h.b16 %v1111
        %v1440 = vunpack.c.l.b16 %v1112
        %v1441 = vunpack.c.h.b16 %v1112
        %v1442 = vunpack.c.l.b16 %v1113
        %v1443 = vunpack.c.h.b16 %v1113
        %v1444 = vunpack.c.l.b16 %v1114
        %v1445 = vunpack.c.h.b16 %v1114
        %v1446 = vunpack.c.l.b16 %v1115
        %v1447 = vunpack.c.h.b16 %v1115
        %v1448 = vunpack.c.l.b16 %v1116
        %v1449 = vunpack.c.h.b16 %v1116
        %v1450 = vunpack.c.l.b16 %v1117
        %v1451 = vunpack.c.h.b16 %v1117
        %v1452 = vunpack.c.l.b16 %v1118
        %v1453 = vunpack.c.h.b16 %v1118
        %v1454 = vunpack.c.l.b16 %v1119
        %v1455 = vunpack.c.h.b16 %v1119
        %v1456 = vunpack.c.l.b16 %v1120
        %v1457 = vunpack.c.h.b16 %v1120
        %v1458 = vunpack.c.l.b16 %v1121
        %v1459 = vunpack.c.h.b16 %v1121
        %v1460 = vunpack.c.l.b16 %v1122
        %v1461 = vunpack.c.h.b16 %v1122
        %v1462 = vunpack.c.l.b16 %v1123
        %v1463 = vunpack.c.h.b16 %v1123
        %v1464 = vunpack.c.l.b16 %v1124
        %v1465 = vunpack.c.h.b16 %v1124
        %v1466 = vunpack.c.l.b16 %v1125
        %v1467 = vunpack.c.h.b16 %v1125
        %v1468 = vunpack.c.l.b16 %v1126
        %v1469 = vunpack.c.h.b16 %v1126
        %v1470 = vunpack.c.l.b16 %v1127
        %v1471 = vunpack.c.h.b16 %v1127
        %v1472 = vunpack.c.l.b16 %v1128
        %v1473 = vunpack.c.h.b16 %v1128
        %v1474 = vunpack.c.l.b16 %v1129
        %v1475 = vunpack.c.h.b16 %v1129
        %v1476 = vunpack.c.l.b16 %v1130
        %v1477 = vunpack.c.h.b16 %v1130
        %v1478 = vunpack.c.l.b16 %v1131
        %v1479 = vunpack.c.h.b16 %v1131
        %v1480 = vunpack.c.l.b16 %v1132
        %v1481 = vunpack.c.h.b16 %v1132
        %v1482 = vunpack.c.l.b16 %v1133
        %v1483 = vunpack.c.h.b16 %v1133
        %v1484 = vunpack.c.l.b16 %v1134
        %v1485 = vunpack.c.h.b16 %v1134
        %v1486 = vunpack.c.l.b16 %v1135
        %v1487 = vunpack.c.h.b16 %v1135
        %v1488 = vunpack.c.l.b16 %v1136
        %v1489 = vunpack.c.h.b16 %v1136
        %v1490 = vunpack.c.l.b16 %v1137
        %v1491 = vunpack.c.h.b16 %v1137
        %v1492 = vunpack.c.l.b16 %v1138
        %v1493 = vunpack.c.h.b16 %v1138
        %v1494 = vunpack.c.l.b16 %v1139
        %v1495 = vunpack.c.h.b16 %v1139
        %v1496 = vunpack.c.l.b16 %v1140
        %v1497 = vunpack.c.h.b16 %v1140
        %v1498 = vunpack.c.l.b16 %v1141
        %v1499 = vunpack.c.h.b16 %v1141
        %v1500 = vunpack.c.l.b16 %v1142
        %v1501 = vunpack.c.h.b16 %v1142
        %v1502 = vunpack.c.l.b16 %v1143
        %v1503 = vunpack.c.h.b16 %v1143
        %v1504 = vunpack.c.l.b16 %v1144
        %v1505 = vunpack.c.h.b16 %v1144
        %v1506 = vunpack.c.l.b16 %v1145
        %v1507 = vunpack.c.h.b16 %v1145
        %v1508 = vunpack.c.l.b16 %v1146
        %v1509 = vunpack.c.h.b16 %v1146
        %v1510 = vunpack.c.l.b16 %v1147
        %v1511 = vunpack.c.h.b16 %v1147
        %v1512 = vunpack.c.l.b16 %v1148
        %v1513 = vunpack.c.h.b16 %v1148
        %v1514 = vunpack.c.l.b16 %v1149
        %v1515 = vunpack.c.h.b16 %v1149
        %v1516 = vunpack.c.l.b16 %v1150
        %v1517 = vunpack.c.h.b16 %v1150
        %v1518 = vunpack.c.l.b16 %v1151
        %v1519 = vunpack.c.h.b16 %v1151
        %v1520 = vunpack.c.l.b16 %v1152
        %v1521 = vunpack.c.h.b16 %v1152
        %v1522 = vunpack.c.l.b16 %v1153
        %v1523 = vunpack.c.h.b16 %v1153
        %v1524 = vunpack.c.l.b16 %v1154
        %v1525 = vunpack.c.h.b16 %v1154
        %v1526 = vunpack.c.l.b16 %v1155
        %v1527 = vunpack.c.h.b16 %v1155
        %v1528 = vunpack.c.l.b16 %v1156
        %v1529 = vunpack.c.h.b16 %v1156
        %v1530 = vunpack.c.l.b16 %v1157
        %v1531 = vunpack.c.h.b16 %v1157
        %v1532 = vunpack.c.l.b16 %v1158
        %v1533 = vunpack.c.h.b16 %v1158
        %v1534 = vunpack.c.l.b16 %v1159
        %v1535 = vunpack.c.h.b16 %v1159
        %v1536 = vunpack.c.l.b16 %v1160
        %v1537 = vunpack.c.h.b16 %v1160
        %v1538 = vunpack.c.l.b16 %v1161
        %v1539 = vunpack.c.h.b16 %v1161
        %v1540 = vunpack.c.l.b16 %v1162
        %v1541 = vunpack.c.h.b16 %v1162
        %v1542 = vunpack.c.l.b16 %v1163
        %v1543 = vunpack.c.h.b16 %v1163
        %v1544 = vunpack.c.l.b16 %v1164
        %v1545 = vunpack.c.h.b16 %v1164
        %v1546 = vunpack.c.l.b16 %v1165
        %v1547 = vunpack.c.h.b16 %v1165
        %v1548 = vunpack.c.l.b16 %v1166
        %v1549 = vunpack.c.h.b16 %v1166
        %v1550 = vunpack.c.l.b16 %v1167
        %v1551 = vunpack.c.h.b16 %v1167
        %v1552 = vunpack.c.l.b16 %v1168
        %v1553 = vunpack.c.h.b16 %v1168
        %v1554 = vunpack.c.l.b16 %v1169
        %v1555 = vunpack.c.h.b16 %v1169
        %v1556 = vunpack.c.l.b16 %v1170
        %v1557 = vunpack.c.h.b16 %v1170
        %v1558 = vunpack.c.l.b16 %v1171
        %v1559 = vunpack.c.h.b16 %v1171
        %v1560 = vunpack.c.l.b16 %v1172
        %v1561 = vunpack.c.h.b16 %v1172
        %v1562 = vunpack.c.l.b16 %v1173
        %v1563 = vunpack.c.h.b16 %v1173
        %v1564 = vunpack.c.l.b16 %v1174
        %v1565 = vunpack.c.h.b16 %v1174
        %v1566 = vunpack.c.l.b16 %v1175
        %v1567 = vunpack.c.h.b16 %v1175
        %v1568 = vunpack.c.l.b16 %v1176
        %v1569 = vunpack.c.h.b16 %v1176
        %v1570 = vunpack.c.l.b16 %v1177
        %v1571 = vunpack.c.h.b16 %v1177
        %v1572 = vunpack.c.l.b16 %v1178
        %v1573 = vunpack.c.h.b16 %v1178
        %v1574 = vunpack.c.l.b16 %v1179
        %v1575 = vunpack.c.h.b16 %v1179
        %v1576 = vunpack.c.l.b16 %v1180
        %v1577 = vunpack.c.h.b16 %v1180
        %v1578 = vunpack.c.l.b16 %v1181
        %v1579 = vunpack.c.h.b16 %v1181
        %v1580 = vunpack.c.l.b16 %v1182
        %v1581 = vunpack.c.h.b16 %v1182
        %v1582 = vunpack.c.l.b16 %v1183
        %v1583 = vunpack.c.h.b16 %v1183
        %v1584 = vunpack.c.l.b16 %v1184
        %v1585 = vunpack.c.h.b16 %v1184
        %v1586 = vunpack.c.l.b16 %v1185
        %v1587 = vunpack.c.h.b16 %v1185
        %v1588 = vunpack.c.l.b16 %v1186
        %v1589 = vunpack.c.h.b16 %v1186
        %v1590 = vunpack.c.l.b16 %v1187
        %v1591 = vunpack.c.h.b16 %v1187
        %v1592 = vunpack.c.l.b16 %v1188
        %v1593 = vunpack.c.h.b16 %v1188
        %v1594 = vunpack.c.l.b16 %v1189
        %v1595 = vunpack.c.h.b16 %v1189
        %v1596 = vpack.c.b16 %v1344, %v1340
        %v1597 = vpack.c.b16 %v1345, %v1341
        %v1598 = vpack.c.b16 %v1346, %v1342
        %v1599 = vpack.c.b16 %v1347, %v1343
        %v1600 = vpack.c.b16 %v1352, %v1348
        %v1601 = vpack.c.b16 %v1353, %v1349
        %v1602 = vpack.c.b16 %v1354, %v1350
        %v1603 = vpack.c.b16 %v1355, %v1351
        %v1604 = vpack.c.b16 %v1360, %v1356
        %v1605 = vpack.c.b16 %v1361, %v1357
        %v1606 = vpack.c.b16 %v1362, %v1358
        %v1607 = vpack.c.b16 %v1363, %v1359
        %v1608 = vpack.c.b16 %v1368, %v1364
        %v1609 = vpack.c.b16 %v1369, %v1365
        %v1610 = vpack.c.b16 %v1370, %v1366
        %v1611 = vpack.c.b16 %v1371, %v1367
        %v1612 = vpack.c.b16 %v1376, %v1372
        %v1613 = vpack.c.b16 %v1377, %v1373
        %v1614 = vpack.c.b16 %v1378, %v1374
        %v1615 = vpack.c.b16 %v1379, %v1375
        %v1616 = vpack.c.b16 %v1384, %v1380
        %v1617 = vpack.c.b16 %v1385, %v1381
        %v1618 = vpack.c.b16 %v1386, %v1382
        %v1619 = vpack.c.b16 %v1387, %v1383
        %v1620 = vpack.c.b16 %v1392, %v1388
        %v1621 = vpack.c.b16 %v1393, %v1389
        %v1622 = vpack.c.b16 %v1394, %v1390
        %v1623 = vpack.c.b16 %v1395, %v1391
        %v1624 = vpack.c.b16 %v1400, %v1396
        %v1625 = vpack.c.b16 %v1401, %v1397
        %v1626 = vpack.c.b16 %v1402, %v1398
        %v1627 = vpack.c.b16 %v1403, %v1399
        %v1628 = vpack.c.b16 %v1408, %v1404
        %v1629 = vpack.c.b16 %v1409, %v1405
        %v1630 = vpack.c.b16 %v1410, %v1406
        %v1631 = vpack.c.b16 %v1411, %v1407
        %v1632 = vpack.c.b16 %v1416, %v1412
        %v1633 = vpack.c.b16 %v1417, %v1413
        %v1634 = vpack.c.b16 %v1418, %v1414
        %v1635 = vpack.c.b16 %v1419, %v1415
        %v1636 = vpack.c.b16 %v1424, %v1420
        %v1637 = vpack.c.b16 %v1425, %v1421
        %v1638 = vpack.c.b16 %v1426, %v1422
        %v1639 = vpack.c.b16 %v1427, %v1423
        %v1640 = vpack.c.b16 %v1432, %v1428
        %v1641 = vpack.c.b16 %v1433, %v1429
        %v1642 = vpack.c.b16 %v1434, %v1430
        %v1643 = vpack.c.b16 %v1435, %v1431
        %v1644 = vpack.c.b16 %v1440, %v1436
        %v1645 = vpack.c.b16 %v1441, %v1437
        %v1646 = vpack.c.b16 %v1442, %v1438
        %v1647 = vpack.c.b16 %v1443, %v1439
        %v1648 = vpack.c.b16 %v1448, %v1444
        %v1649 = vpack.c.b16 %v1449, %v1445
        %v1650 = vpack.c.b16 %v1450, %v1446
        %v1651 = vpack.c.b16 %v1451, %v1447
        %v1652 = vpack.c.b16 %v1456, %v1452
        %v1653 = vpack.c.b16 %v1457, %v1453
        %v1654 = vpack.c.b16 %v1458, %v1454
        %v1655 = vpack.c.b16 %v1459, %v1455
        %v1656 = vpack.c.b16 %v1464, %v1460
        %v1657 = vpack.c.b16 %v1465, %v1461
        %v1658 = vpack.c.b16 %v1466, %v1462
        %v1659 = vpack.c.b16 %v1467, %v1463
        %v1660 = vpack.c.b16 %v1472, %v1468
        %v1661 = vpack.c.b16 %v1473, %v1469
        %v1662 = vpack.c.b16 %v1474, %v1470
        %v1663 = vpack.c.b16 %v1475, %v1471
        %v1664 = vpack.c.b16 %v1480, %v1476
        %v1665 = vpack.c.b16 %v1481, %v1477
        %v1666 = vpack.c.b16 %v1482, %v1478
        %v1667 = vpack.c.b16 %v1483, %v1479
        %v1668 = vpack.c.b16 %v1488, %v1484
        %v1669 = vpack.c.b16 %v1489, %v1485
        %v1670 = vpack.c.b16 %v1490, %v1486
        %v1671 = vpack.c.b16 %v1491, %v1487
        %v1672 = vpack.c.b16 %v1496, %v1492
        %v1673 = vpack.c.b16 %v1497, %v1493
        %v1674 = vpack.c.b16 %v1498, %v1494
        %v1675 = vpack.c.b16 %v1499, %v1495
        %v1676 = vpack.c.b16 %v1504, %v1500
        %v1677 = vpack.c.b16 %v1505, %v1501
        %v1678 = vpack.c.b16 %v1506, %v1502
        %v1679 = vpack.c.b16 %v1507, %v1503
        %v1680 = vpack.c.b16 %v1512, %v1508
        %v1681 = vpack.c.b16 %v1513, %v1509
        %v1682 = vpack.c.b16 %v1514, %v1510
        %v1683 = vpack.c.b16 %v1515, %v1511
        %v1684 = vpack.c.b16 %v1520, %v1516
        %v1685 = vpack.c.b16 %v1521, %v1517
        %v1686 = vpack.c.b16 %v1522, %v1518
        %v1687 = vpack.c.b16 %v1523, %v1519
        %v1688 = vpack.c.b16 %v1528, %v1524
        %v1689 = vpack.c.b16 %v1529, %v1525
        %v1690 = vpack.c.b16 %v1530, %v1526
        %v1691 = vpack.c.b16 %v1531, %v1527
        %v1692 = vpack.c.b16 %v1536, %v1532
        %v1693 = vpack.c.b16 %v1537, %v1533
        %v1694 = vpack.c.b16 %v1538, %v1534
        %v1695 = vpack.c.b16 %v1539, %v1535
        %v1696 = vpack.c.b16 %v1544, %v1540
        %v1697 = vpack.c.b16 %v1545, %v1541
        %v1698 = vpack.c.b16 %v1546, %v1542
        %v1699 = vpack.c.b16 %v1547, %v1543
        %v1700 = vpack.c.b16 %v1552, %v1548
        %v1701 = vpack.c.b16 %v1553, %v1549
        %v1702 = vpack.c.b16 %v1554, %v1550
        %v1703 = vpack.c.b16 %v1555, %v1551
        %v1704 = vpack.c.b16 %v1560, %v1556
        %v1705 = vpack.c.b16 %v1561, %v1557
        %v1706 = vpack.c.b16 %v1562, %v1558
        %v1707 = vpack.c.b16 %v1563, %v1559
        %v1708 = vpack.c.b16 %v1568, %v1564
        %v1709 = vpack.c.b16 %v1569, %v1565
        %v1710 = vpack.c.b16 %v1570, %v1566
        %v1711 = vpack.c.b16 %v1571, %v1567
        %v1712 = vpack.c.b16 %v1576, %v1572
        %v1713 = vpack.c.b16 %v1577, %v1573
        %v1714 = vpack.c.b16 %v1578, %v1574
        %v1715 = vpack.c.b16 %v1579, %v1575
        %v1716 = vpack.c.b16 %v1584, %v1580
        %v1717 = vpack.c.b16 %v1585, %v1581
        %v1718 = vpack.c.b16 %v1586, %v1582
        %v1719 = vpack.c.b16 %v1587, %v1583
        %v1720 = vpack.c.b16 %v1592, %v1588
        %v1721 = vpack.c.b16 %v1593, %v1589
        %v1722 = vpack.c.b16 %v1594, %v1590
        %v1723 = vpack.c.b16 %v1595, %v1591
        %1852 = vmatprep.subr.bf16.mxu0 %v1597
        %1853 = vmatpush1.bf16.msra.mxu0 %v1596
        %1854 = vmatprep.subr.bf16.mxu0 %v1601
        %1855 = vmatpush1.bf16.msra.mxu0 %v1600
        %1856 = vmatprep.subr.bf16.mxu0 %v1605
        %1857 = vmatpush1.bf16.msra.mxu0 %v1604
        %1858 = vmatprep.subr.bf16.mxu0 %v1609
        %1859 = vmatpush1.bf16.msra.mxu0 %v1608
        %1860 = vmatprep.subr.bf16.mxu0 %v1613
        %1861 = vmatpush1.bf16.msra.mxu0 %v1612
        %1862 = vmatprep.subr.bf16.mxu0 %v1617
        %1863 = vmatpush1.bf16.msra.mxu0 %v1616
        %1864 = vmatprep.subr.bf16.mxu0 %v1621
        %1865 = vmatpush1.bf16.msra.mxu0 %v1620
        %1866 = vmatprep.subr.bf16.mxu0 %v1625
        %1867 = vmatpush1.bf16.msra.mxu0 %v1624
        %1868 = vmatprep.subr.bf16.mxu0 %v1629
        %1869 = vmatpush1.bf16.msra.mxu0 %v1628
        %1870 = vmatprep.subr.bf16.mxu0 %v1633
        %1871 = vmatpush1.bf16.msra.mxu0 %v1632
        %1872 = vmatprep.subr.bf16.mxu0 %v1637
        %1873 = vmatpush1.bf16.msra.mxu0 %v1636
        %1874 = vmatprep.subr.bf16.mxu0 %v1641
        %1875 = vmatpush1.bf16.msra.mxu0 %v1640
        %1876 = vmatprep.subr.bf16.mxu0 %v1645
        %1877 = vmatpush1.bf16.msra.mxu0 %v1644
        %1878 = vmatprep.subr.bf16.mxu0 %v1649
        %1879 = vmatpush1.bf16.msra.mxu0 %v1648
        %1880 = vmatprep.subr.bf16.mxu0 %v1653
        %1881 = vmatpush1.bf16.msra.mxu0 %v1652
        %1882 = vmatprep.subr.bf16.mxu0 %v1657
        %1883 = vmatpush1.bf16.msra.mxu0 %v1656
        %1884 = vmatprep.mubr.bf16.mxu0 %v1031
        %1885 = vmatmul.mubr.bf16.gmra.mrb[0].mxu0 %v1030
        %v1886 = vpop.f32.mrb[0].mxu0
        %v1887 = vadd.f32 %v1195, %v1886
        %v1888 = vpop.f32.mrb[0].mxu0
        %v1889 = vadd.f32 %v1199, %v1888
        %v1890 = vpop.f32.mrb[0].mxu0
        %v1891 = vadd.f32 %v1195, %v1890
        %v1892 = vpop.f32.mrb[0].mxu0
        %v1893 = vadd.f32 %v1199, %v1892
        %1894 = vmatprep.mubr.bf16.mxu0 %v1035
        %1895 = vmatmul.mubr.bf16.gmra.mrb[0].mxu0 %v1034
        %v1896 = vpop.f32.mrb[0].mxu0
        %v1897 = vadd.f32 %v1195, %v1896
        %v1898 = vpop.f32.mrb[0].mxu0
        %v1899 = vadd.f32 %v1199, %v1898
        %v1900 = vpop.f32.mrb[0].mxu0
        %v1901 = vadd.f32 %v1195, %v1900
        %v1902 = vpop.f32.mrb[0].mxu0
        %v1903 = vadd.f32 %v1199, %v1902
        %1904 = vmatprep.mubr.bf16.mxu0 %v1039
        %1905 = vmatmul.mubr.bf16.gmra.mrb[0].mxu0 %v1038
        %v1906 = vpop.f32.mrb[0].mxu0
        %v1907 = vadd.f32 %v1195, %v1906
        %v1908 = vpop.f32.mrb[0].mxu0
        %v1909 = vadd.f32 %v1199, %v1908
        %v1910 = vpop.f32.mrb[0].mxu0
        %v1911 = vadd.f32 %v1195, %v1910
        %v1912 = vpop.f32.mrb[0].mxu0
        %v1913 = vadd.f32 %v1199, %v1912
        %1914 = vmatprep.mubr.bf16.mxu0 %v1043
        %1915 = vmatmul.mubr.bf16.gmra.mrb[0].mxu0 %v1042
        %v1916 = vpop.f32.mrb[0].mxu0
        %v1917 = vadd.f32 %v1195, %v1916
        %v1918 = vpop.f32.mrb[0].mxu0
        %v1919 = vadd.f32 %v1199, %v1918
        %v1920 = vpop.f32.mrb[0].mxu0
        %v1921 = vadd.f32 %v1195, %v1920
        %v1922 = vpop.f32.mrb[0].mxu0
        %v1923 = vadd.f32 %v1199, %v1922
        %1924 = vmatprep.mubr.bf16.mxu0 %v1047
        %1925 = vmatmul.mubr.bf16.gmra.mrb[0].mxu0 %v1046
        %v1926 = vpop.f32.mrb[0].mxu0
        %v1927 = vadd.f32 %v1195, %v1926
        %v1928 = vpop.f32.mrb[0].mxu0
        %v1929 = vadd.f32 %v1199, %v1928
        %v1930 = vpop.f32.mrb[0].mxu0
        %v1931 = vadd.f32 %v1195, %v1930
        %v1932 = vpop.f32.mrb[0].mxu0
        %v1933 = vadd.f32 %v1199, %v1932
        %1934 = vmatprep.mubr.bf16.mxu0 %v1051
        %1935 = vmatmul.mubr.bf16.gmra.mrb[0].mxu0 %v1050
        %v1936 = vpop.f32.mrb[0].mxu0
        %v1937 = vadd.f32 %v1195, %v1936
        %v1938 = vpop.f32.mrb[0].mxu0
        %v1939 = vadd.f32 %v1199, %v1938
        %v1940 = vpop.f32.mrb[0].mxu0
        %v1941 = vadd.f32 %v1195, %v1940
        %v1942 = vpop.f32.mrb[0].mxu0
        %v1943 = vadd.f32 %v1199, %v1942
        %1944 = vmatprep.mubr.bf16.mxu0 %v1055
        %1945 = vmatmul.mubr.bf16.gmra.mrb[0].mxu0 %v1054
        %v1946 = vpop.f32.mrb[0].mxu0
        %v1947 = vadd.f32 %v1195, %v1946
        %v1948 = vpop.f32.mrb[0].mxu0
        %v1949 = vadd.f32 %v1199, %v1948
        %v1950 = vpop.f32.mrb[0].mxu0
        %v1951 = vadd.f32 %v1195, %v1950
        %v1952 = vpop.f32.mrb[0].mxu0
        %v1953 = vadd.f32 %v1199, %v1952
        %1954 = vmatprep.mubr.bf16.mxu0 %v1059
        %1955 = vmatmul.mubr.bf16.gmra.mrb[0].mxu0 %v1058
        %v1956 = vpop.f32.mrb[0].mxu0
        %v1957 = vadd.f32 %v1195, %v1956
        %v1958 = vpop.f32.mrb[0].mxu0
        %v1959 = vadd.f32 %v1199, %v1958
        %v1960 = vpop.f32.mrb[0].mxu0
        %v1961 = vadd.f32 %v1195, %v1960
        %v1962 = vpop.f32.mrb[0].mxu0
        %v1963 = vadd.f32 %v1199, %v1962
        %1964 = vdwg.mxu0
        %1965 = vmatprep.subr.bf16.mxu0 %v1661
        %1966 = vmatpush1.bf16.msra.mxu0 %v1660
        %1967 = vmatprep.subr.bf16.mxu0 %v1665
        %1968 = vmatpush1.bf16.msra.mxu0 %v1664
        %1969 = vmatprep.subr.bf16.mxu0 %v1669
        %1970 = vmatpush1.bf16.msra.mxu0 %v1668
        %1971 = vmatprep.subr.bf16.mxu0 %v1673
        %1972 = vmatpush1.bf16.msra.mxu0 %v1672
        %1973 = vmatprep.subr.bf16.mxu0 %v1677
        %1974 = vmatpush1.bf16.msra.mxu0 %v1676
        %1975 = vmatprep.subr.bf16.mxu0 %v1681
        %1976 = vmatpush1.bf16.msra.mxu0 %v1680
        %1977 = vmatprep.subr.bf16.mxu0 %v1685
        %1978 = vmatpush1.bf16.msra.mxu0 %v1684
        %1979 = vmatprep.subr.bf16.mxu0 %v1689
        %1980 = vmatpush1.bf16.msra.mxu0 %v1688
        %1981 = vmatprep.subr.bf16.mxu0 %v1693
        %1982 = vmatpush1.bf16.msra.mxu0 %v1692
        %1983 = vmatprep.subr.bf16.mxu0 %v1697
        %1984 = vmatpush1.bf16.msra.mxu0 %v1696
        %1985 = vmatprep.subr.bf16.mxu0 %v1701
        %1986 = vmatpush1.bf16.msra.mxu0 %v1700
        %1987 = vmatprep.subr.bf16.mxu0 %v1705
        %1988 = vmatpush1.bf16.msra.mxu0 %v1704
        %1989 = vmatprep.subr.bf16.mxu0 %v1709
        %1990 = vmatpush1.bf16.msra.mxu0 %v1708
        %1991 = vmatprep.subr.bf16.mxu0 %v1713
        %1992 = vmatpush1.bf16.msra.mxu0 %v1712
        %1993 = vmatprep.subr.bf16.mxu0 %v1717
        %1994 = vmatpush1.bf16.msra.mxu0 %v1716
        %1995 = vmatprep.subr.bf16.mxu0 %v1721
        %1996 = vmatpush1.bf16.msra.mxu0 %v1720
        %1997 = vmatprep.mubr.bf16.mxu0 %v1033
        %1998 = vmatmul.mubr.bf16.gmra.mrb[0].mxu0 %v1032
        %v1999 = vpop.f32.mrb[0].mxu0
        %v2000 = vadd.f32 %v1887, %v1999
        %v2001 = vpop.f32.mrb[0].mxu0
        %v2002 = vadd.f32 %v1889, %v2001
        %v2003 = vpop.f32.mrb[0].mxu0
        %v2004 = vadd.f32 %v1891, %v2003
        %v2005 = vpop.f32.mrb[0].mxu0
        %v2006 = vadd.f32 %v1893, %v2005
        %2007 = vmatprep.mubr.bf16.mxu0 %v1037
        %2008 = vmatmul.mubr.bf16.gmra.mrb[0].mxu0 %v1036
        %v2009 = vpop.f32.mrb[0].mxu0
        %v2010 = vadd.f32 %v1897, %v2009
        %v2011 = vpop.f32.mrb[0].mxu0
        %v2012 = vadd.f32 %v1899, %v2011
        %v2013 = vpop.f32.mrb[0].mxu0
        %v2014 = vadd.f32 %v1901, %v2013
        %v2015 = vpop.f32.mrb[0].mxu0
        %v2016 = vadd.f32 %v1903, %v2015
        %2017 = vmatprep.mubr.bf16.mxu0 %v1041
        %2018 = vmatmul.mubr.bf16.gmra.mrb[0].mxu0 %v1040
        %v2019 = vpop.f32.mrb[0].mxu0
        %v2020 = vadd.f32 %v1907, %v2019
        %v2021 = vpop.f32.mrb[0].mxu0
        %v2022 = vadd.f32 %v1909, %v2021
        %v2023 = vpop.f32.mrb[0].mxu0
        %v2024 = vadd.f32 %v1911, %v2023
        %v2025 = vpop.f32.mrb[0].mxu0
        %v2026 = vadd.f32 %v1913, %v2025
        %2027 = vmatprep.mubr.bf16.mxu0 %v1045
        %2028 = vmatmul.mubr.bf16.gmra.mrb[0].mxu0 %v1044
        %v2029 = vpop.f32.mrb[0].mxu0
        %v2030 = vadd.f32 %v1917, %v2029
        %v2031 = vpop.f32.mrb[0].mxu0
        %v2032 = vadd.f32 %v1919, %v2031
        %v2033 = vpop.f32.mrb[0].mxu0
        %v2034 = vadd.f32 %v1921, %v2033
        %v2035 = vpop.f32.mrb[0].mxu0
        %v2036 = vadd.f32 %v1923, %v2035
        %2037 = vmatprep.mubr.bf16.mxu0 %v1049
        %2038 = vmatmul.mubr.bf16.gmra.mrb[0].mxu0 %v1048
        %v2039 = vpop.f32.mrb[0].mxu0
        %v2040 = vadd.f32 %v1927, %v2039
        %v2041 = vpop.f32.mrb[0].mxu0
        %v2042 = vadd.f32 %v1929, %v2041
        %v2043 = vpop.f32.mrb[0].mxu0
        %v2044 = vadd.f32 %v1931, %v2043
        %v2045 = vpop.f32.mrb[0].mxu0
        %v2046 = vadd.f32 %v1933, %v2045
        %2047 = vmatprep.mubr.bf16.mxu0 %v1053
        %2048 = vmatmul.mubr.bf16.gmra.mrb[0].mxu0 %v1052
        %v2049 = vpop.f32.mrb[0].mxu0
        %v2050 = vadd.f32 %v1937, %v2049
        %v2051 = vpop.f32.mrb[0].mxu0
        %v2052 = vadd.f32 %v1939, %v2051
        %v2053 = vpop.f32.mrb[0].mxu0
        %v2054 = vadd.f32 %v1941, %v2053
        %v2055 = vpop.f32.mrb[0].mxu0
        %v2056 = vadd.f32 %v1943, %v2055
        %2057 = vmatprep.mubr.bf16.mxu0 %v1057
        %2058 = vmatmul.mubr.bf16.gmra.mrb[0].mxu0 %v1056
        %v2059 = vpop.f32.mrb[0].mxu0
        %v2060 = vadd.f32 %v1947, %v2059
        %v2061 = vpop.f32.mrb[0].mxu0
        %v2062 = vadd.f32 %v1949, %v2061
        %v2063 = vpop.f32.mrb[0].mxu0
        %v2064 = vadd.f32 %v1951, %v2063
        %v2065 = vpop.f32.mrb[0].mxu0
        %v2066 = vadd.f32 %v1953, %v2065
        %2067 = vmatprep.mubr.bf16.mxu0 %v1061
        %2068 = vmatmul.mubr.bf16.gmra.mrb[0].mxu0 %v1060
        %v2069 = vpop.f32.mrb[0].mxu0
        %v2070 = vadd.f32 %v1957, %v2069
        %v2071 = vpop.f32.mrb[0].mxu0
        %v2072 = vadd.f32 %v1959, %v2071
        %v2073 = vpop.f32.mrb[0].mxu0
        %v2074 = vadd.f32 %v1961, %v2073
        %v2075 = vpop.f32.mrb[0].mxu0
        %v2076 = vadd.f32 %v1963, %v2075
        %2077 = vdwg.mxu0
        %2078 = vmatprep.subr.bf16.mxu0 %v1599
        %2079 = vmatpush1.bf16.msra.mxu0 %v1598
        %2080 = vmatprep.subr.bf16.mxu0 %v1603
        %2081 = vmatpush1.bf16.msra.mxu0 %v1602
        %2082 = vmatprep.subr.bf16.mxu0 %v1607
        %2083 = vmatpush1.bf16.msra.mxu0 %v1606
        %2084 = vmatprep.subr.bf16.mxu0 %v1611
        %2085 = vmatpush1.bf16.msra.mxu0 %v1610
        %2086 = vmatprep.subr.bf16.mxu0 %v1615
        %2087 = vmatpush1.bf16.msra.mxu0 %v1614
        %2088 = vmatprep.subr.bf16.mxu0 %v1619
        %2089 = vmatpush1.bf16.msra.mxu0 %v1618
        %2090 = vmatprep.subr.bf16.mxu0 %v1623
        %2091 = vmatpush1.bf16.msra.mxu0 %v1622
        %2092 = vmatprep.subr.bf16.mxu0 %v1627
        %2093 = vmatpush1.bf16.msra.mxu0 %v1626
        %2094 = vmatprep.subr.bf16.mxu0 %v1631
        %2095 = vmatpush1.bf16.msra.mxu0 %v1630
        %2096 = vmatprep.subr.bf16.mxu0 %v1635
        %2097 = vmatpush1.bf16.msra.mxu0 %v1634
        %2098 = vmatprep.subr.bf16.mxu0 %v1639
        %2099 = vmatpush1.bf16.msra.mxu0 %v1638
        %2100 = vmatprep.subr.bf16.mxu0 %v1643
        %2101 = vmatpush1.bf16.msra.mxu0 %v1642
        %2102 = vmatprep.subr.bf16.mxu0 %v1647
        %2103 = vmatpush1.bf16.msra.mxu0 %v1646
        %2104 = vmatprep.subr.bf16.mxu0 %v1651
        %2105 = vmatpush1.bf16.msra.mxu0 %v1650
        %2106 = vmatprep.subr.bf16.mxu0 %v1655
        %2107 = vmatpush1.bf16.msra.mxu0 %v1654
        %2108 = vmatprep.subr.bf16.mxu0 %v1659
        %2109 = vmatpush1.bf16.msra.mxu0 %v1658
        %2110 = vmatprep.mubr.bf16.mxu0 %v1031
        %2111 = vmatmul.mubr.bf16.gmra.mrb[0].mxu0 %v1030
        %v2112 = vpop.f32.mrb[0].mxu0
        %v2113 = vadd.f32 %v1203, %v2112
        %v2114 = vpop.f32.mrb[0].mxu0
        %v2115 = vadd.f32 %v1207, %v2114
        %v2116 = vpop.f32.mrb[0].mxu0
        %v2117 = vadd.f32 %v1203, %v2116
        %v2118 = vpop.f32.mrb[0].mxu0
        %v2119 = vadd.f32 %v1207, %v2118
        %2120 = vmatprep.mubr.bf16.mxu0 %v1035
        %2121 = vmatmul.mubr.bf16.gmra.mrb[0].mxu0 %v1034
        %v2122 = vpop.f32.mrb[0].mxu0
        %v2123 = vadd.f32 %v1203, %v2122
        %v2124 = vpop.f32.mrb[0].mxu0
        %v2125 = vadd.f32 %v1207, %v2124
        %v2126 = vpop.f32.mrb[0].mxu0
        %v2127 = vadd.f32 %v1203, %v2126
        %v2128 = vpop.f32.mrb[0].mxu0
        %v2129 = vadd.f32 %v1207, %v2128
        %2130 = vmatprep.mubr.bf16.mxu0 %v1039
        %2131 = vmatmul.mubr.bf16.gmra.mrb[0].mxu0 %v1038
        %v2132 = vpop.f32.mrb[0].mxu0
        %v2133 = vadd.f32 %v1203, %v2132
        %v2134 = vpop.f32.mrb[0].mxu0
        %v2135 = vadd.f32 %v1207, %v2134
        %v2136 = vpop.f32.mrb[0].mxu0
        %v2137 = vadd.f32 %v1203, %v2136
        %v2138 = vpop.f32.mrb[0].mxu0
        %v2139 = vadd.f32 %v1207, %v2138
        %2140 = vmatprep.mubr.bf16.mxu0 %v1043
        %2141 = vmatmul.mubr.bf16.gmra.mrb[0].mxu0 %v1042
        %v2142 = vpop.f32.mrb[0].mxu0
        %v2143 = vadd.f32 %v1203, %v2142
        %v2144 = vpop.f32.mrb[0].mxu0
        %v2145 = vadd.f32 %v1207, %v2144
        %v2146 = vpop.f32.mrb[0].mxu0
        %v2147 = vadd.f32 %v1203, %v2146
        %v2148 = vpop.f32.mrb[0].mxu0
        %v2149 = vadd.f32 %v1207, %v2148
        %2150 = vmatprep.mubr.bf16.mxu0 %v1047
        %2151 = vmatmul.mubr.bf16.gmra.mrb[0].mxu0 %v1046
        %v2152 = vpop.f32.mrb[0].mxu0
        %v2153 = vadd.f32 %v1203, %v2152
        %v2154 = vpop.f32.mrb[0].mxu0
        %v2155 = vadd.f32 %v1207, %v2154
        %v2156 = vpop.f32.mrb[0].mxu0
        %v2157 = vadd.f32 %v1203, %v2156
        %v2158 = vpop.f32.mrb[0].mxu0
        %v2159 = vadd.f32 %v1207, %v2158
        %2160 = vmatprep.mubr.bf16.mxu0 %v1051
        %2161 = vmatmul.mubr.bf16.gmra.mrb[0].mxu0 %v1050
        %v2162 = vpop.f32.mrb[0].mxu0
        %v2163 = vadd.f32 %v1203, %v2162
        %v2164 = vpop.f32.mrb[0].mxu0
        %v2165 = vadd.f32 %v1207, %v2164
        %v2166 = vpop.f32.mrb[0].mxu0
        %v2167 = vadd.f32 %v1203, %v2166
        %v2168 = vpop.f32.mrb[0].mxu0
        %v2169 = vadd.f32 %v1207, %v2168
        %2170 = vmatprep.mubr.bf16.mxu0 %v1055
        %2171 = vmatmul.mubr.bf16.gmra.mrb[0].mxu0 %v1054
        %v2172 = vpop.f32.mrb[0].mxu0
        %v2173 = vadd.f32 %v1203, %v2172
        %v2174 = vpop.f32.mrb[0].mxu0
        %v2175 = vadd.f32 %v1207, %v2174
        %v2176 = vpop.f32.mrb[0].mxu0
        %v2177 = vadd.f32 %v1203, %v2176
        %v2178 = vpop.f32.mrb[0].mxu0
        %v2179 = vadd.f32 %v1207, %v2178
        %2180 = vmatprep.mubr.bf16.mxu0 %v1059
        %2181 = vmatmul.mubr.bf16.gmra.mrb[0].mxu0 %v1058
        %v2182 = vpop.f32.mrb[0].mxu0
        %v2183 = vadd.f32 %v1203, %v2182
        %v2184 = vpop.f32.mrb[0].mxu0
        %v2185 = vadd.f32 %v1207, %v2184
        %v2186 = vpop.f32.mrb[0].mxu0
        %v2187 = vadd.f32 %v1203, %v2186
        %v2188 = vpop.f32.mrb[0].mxu0
        %v2189 = vadd.f32 %v1207, %v2188
        %2190 = vdwg.mxu0
        %2191 = vmatprep.subr.bf16.mxu0 %v1663
        %2192 = vmatpush1.bf16.msra.mxu0 %v1662
        %2193 = vmatprep.subr.bf16.mxu0 %v1667
        %2194 = vmatpush1.bf16.msra.mxu0 %v1666
        %2195 = vmatprep.subr.bf16.mxu0 %v1671
        %2196 = vmatpush1.bf16.msra.mxu0 %v1670
        %2197 = vmatprep.subr.bf16.mxu0 %v1675
        %2198 = vmatpush1.bf16.msra.mxu0 %v1674
        %2199 = vmatprep.subr.bf16.mxu0 %v1679
        %2200 = vmatpush1.bf16.msra.mxu0 %v1678
        %2201 = vmatprep.subr.bf16.mxu0 %v1683
        %2202 = vmatpush1.bf16.msra.mxu0 %v1682
        %2203 = vmatprep.subr.bf16.mxu0 %v1687
        %2204 = vmatpush1.bf16.msra.mxu0 %v1686
        %2205 = vmatprep.subr.bf16.mxu0 %v1691
        %2206 = vmatpush1.bf16.msra.mxu0 %v1690
        %2207 = vmatprep.subr.bf16.mxu0 %v1695
        %2208 = vmatpush1.bf16.msra.mxu0 %v1694
        %2209 = vmatprep.subr.bf16.mxu0 %v1699
        %2210 = vmatpush1.bf16.msra.mxu0 %v1698
        %2211 = vmatprep.subr.bf16.mxu0 %v1703
        %2212 = vmatpush1.bf16.msra.mxu0 %v1702
        %2213 = vmatprep.subr.bf16.mxu0 %v1707
        %2214 = vmatpush1.bf16.msra.mxu0 %v1706
        %2215 = vmatprep.subr.bf16.mxu0 %v1711
        %2216 = vmatpush1.bf16.msra.mxu0 %v1710
        %2217 = vmatprep.subr.bf16.mxu0 %v1715
        %2218 = vmatpush1.bf16.msra.mxu0 %v1714
        %2219 = vmatprep.subr.bf16.mxu0 %v1719
        %2220 = vmatpush1.bf16.msra.mxu0 %v1718
        %2221 = vmatprep.subr.bf16.mxu0 %v1723
        %2222 = vmatpush1.bf16.msra.mxu0 %v1722
        %2223 = vmatprep.mubr.bf16.mxu0 %v1033
        %2224 = vmatmul.mubr.bf16.gmra.mrb[0].mxu0 %v1032
        %v2225 = vpop.f32.mrb[0].mxu0
        %v2226 = vadd.f32 %v2113, %v2225
        %v2227 = vpop.f32.mrb[0].mxu0
        %v2228 = vadd.f32 %v2115, %v2227
        %v2229 = vpop.f32.mrb[0].mxu0
        %v2230 = vadd.f32 %v2117, %v2229
        %v2231 = vpop.f32.mrb[0].mxu0
        %v2232 = vadd.f32 %v2119, %v2231
        %2233 = vmatprep.mubr.bf16.mxu0 %v1037
        %2234 = vmatmul.mubr.bf16.gmra.mrb[0].mxu0 %v1036
        %v2235 = vpop.f32.mrb[0].mxu0
        %v2236 = vadd.f32 %v2123, %v2235
        %v2237 = vpop.f32.mrb[0].mxu0
        %v2238 = vadd.f32 %v2125, %v2237
        %v2239 = vpop.f32.mrb[0].mxu0
        %v2240 = vadd.f32 %v2127, %v2239
        %v2241 = vpop.f32.mrb[0].mxu0
        %v2242 = vadd.f32 %v2129, %v2241
        %2243 = vmatprep.mubr.bf16.mxu0 %v1041
        %2244 = vmatmul.mubr.bf16.gmra.mrb[0].mxu0 %v1040
        %v2245 = vpop.f32.mrb[0].mxu0
        %v2246 = vadd.f32 %v2133, %v2245
        %v2247 = vpop.f32.mrb[0].mxu0
        %v2248 = vadd.f32 %v2135, %v2247
        %v2249 = vpop.f32.mrb[0].mxu0
        %v2250 = vadd.f32 %v2137, %v2249
        %v2251 = vpop.f32.mrb[0].mxu0
        %v2252 = vadd.f32 %v2139, %v2251
        %2253 = vmatprep.mubr.bf16.mxu0 %v1045
        %2254 = vmatmul.mubr.bf16.gmra.mrb[0].mxu0 %v1044
        %v2255 = vpop.f32.mrb[0].mxu0
        %v2256 = vadd.f32 %v2143, %v2255
        %v2257 = vpop.f32.mrb[0].mxu0
        %v2258 = vadd.f32 %v2145, %v2257
        %v2259 = vpop.f32.mrb[0].mxu0
        %v2260 = vadd.f32 %v2147, %v2259
        %v2261 = vpop.f32.mrb[0].mxu0
        %v2262 = vadd.f32 %v2149, %v2261
        %2263 = vmatprep.mubr.bf16.mxu0 %v1049
        %2264 = vmatmul.mubr.bf16.gmra.mrb[0].mxu0 %v1048
        %v2265 = vpop.f32.mrb[0].mxu0
        %v2266 = vadd.f32 %v2153, %v2265
        %v2267 = vpop.f32.mrb[0].mxu0
        %v2268 = vadd.f32 %v2155, %v2267
        %v2269 = vpop.f32.mrb[0].mxu0
        %v2270 = vadd.f32 %v2157, %v2269
        %v2271 = vpop.f32.mrb[0].mxu0
        %v2272 = vadd.f32 %v2159, %v2271
        %2273 = vmatprep.mubr.bf16.mxu0 %v1053
        %2274 = vmatmul.mubr.bf16.gmra.mrb[0].mxu0 %v1052
        %v2275 = vpop.f32.mrb[0].mxu0
        %v2276 = vadd.f32 %v2163, %v2275
        %v2277 = vpop.f32.mrb[0].mxu0
        %v2278 = vadd.f32 %v2165, %v2277
        %v2279 = vpop.f32.mrb[0].mxu0
        %v2280 = vadd.f32 %v2167, %v2279
        %v2281 = vpop.f32.mrb[0].mxu0
        %v2282 = vadd.f32 %v2169, %v2281
        %2283 = vmatprep.mubr.bf16.mxu0 %v1057
        %2284 = vmatmul.mubr.bf16.gmra.mrb[0].mxu0 %v1056
        %v2285 = vpop.f32.mrb[0].mxu0
        %v2286 = vadd.f32 %v2173, %v2285
        %v2287 = vpop.f32.mrb[0].mxu0
        %v2288 = vadd.f32 %v2175, %v2287
        %v2289 = vpop.f32.mrb[0].mxu0
        %v2290 = vadd.f32 %v2177, %v2289
        %v2291 = vpop.f32.mrb[0].mxu0
        %v2292 = vadd.f32 %v2179, %v2291
        %2293 = vmatprep.mubr.bf16.mxu0 %v1061
        %2294 = vmatmul.mubr.bf16.gmra.mrb[0].mxu0 %v1060
        %v2295 = vpop.f32.mrb[0].mxu0
        %v2296 = vadd.f32 %v2183, %v2295
        %v2297 = vpop.f32.mrb[0].mxu0
        %v2298 = vadd.f32 %v2185, %v2297
        %v2299 = vpop.f32.mrb[0].mxu0
        %v2300 = vadd.f32 %v2187, %v2299
        %v2301 = vpop.f32.mrb[0].mxu0
        %v2302 = vadd.f32 %v2189, %v2301
        %2303 = vdwg.mxu0
        %v2304 = vrot.slane %v2000, 4
        %v2305 = vadd.f32 %v2000, %v2304
        %v2306 = vrot.slane %v2305, 2
        %v2307 = vadd.f32 %v2305, %v2306
        %v2308 = vrot.slane %v2307, 1
        %v2309 = vadd.f32 %v2307, %v2308
        %v2310 = vrot.slane %v2002, 4
        %v2311 = vadd.f32 %v2002, %v2310
        %v2312 = vrot.slane %v2311, 2
        %v2313 = vadd.f32 %v2311, %v2312
        %v2314 = vrot.slane %v2313, 1
        %v2315 = vadd.f32 %v2313, %v2314
        %v2316 = vrot.slane %v2226, 4
        %v2317 = vadd.f32 %v2226, %v2316
        %v2318 = vrot.slane %v2317, 2
        %v2319 = vadd.f32 %v2317, %v2318
        %v2320 = vrot.slane %v2319, 1
        %v2321 = vadd.f32 %v2319, %v2320
        %v2322 = vrot.slane %v2228, 4
        %v2323 = vadd.f32 %v2228, %v2322
        %v2324 = vrot.slane %v2323, 2
        %v2325 = vadd.f32 %v2323, %v2324
        %v2326 = vrot.slane %v2325, 1
        %v2327 = vadd.f32 %v2325, %v2326
        %v2328 = vrot.slane %v2004, 4
        %v2329 = vadd.f32 %v2004, %v2328
        %v2330 = vrot.slane %v2329, 2
        %v2331 = vadd.f32 %v2329, %v2330
        %v2332 = vrot.slane %v2331, 1
        %v2333 = vadd.f32 %v2331, %v2332
        %v2334 = vrot.slane %v2006, 4
        %v2335 = vadd.f32 %v2006, %v2334
        %v2336 = vrot.slane %v2335, 2
        %v2337 = vadd.f32 %v2335, %v2336
        %v2338 = vrot.slane %v2337, 1
        %v2339 = vadd.f32 %v2337, %v2338
        %v2340 = vrot.slane %v2230, 4
        %v2341 = vadd.f32 %v2230, %v2340
        %v2342 = vrot.slane %v2341, 2
        %v2343 = vadd.f32 %v2341, %v2342
        %v2344 = vrot.slane %v2343, 1
        %v2345 = vadd.f32 %v2343, %v2344
        %v2346 = vrot.slane %v2232, 4
        %v2347 = vadd.f32 %v2232, %v2346
        %v2348 = vrot.slane %v2347, 2
        %v2349 = vadd.f32 %v2347, %v2348
        %v2350 = vrot.slane %v2349, 1
        %v2351 = vadd.f32 %v2349, %v2350
        %v2352 = vrot.slane %v2010, 4
        %v2353 = vadd.f32 %v2010, %v2352
        %v2354 = vrot.slane %v2353, 2
        %v2355 = vadd.f32 %v2353, %v2354
        %v2356 = vrot.slane %v2355, 1
        %v2357 = vadd.f32 %v2355, %v2356
        %v2358 = vrot.slane %v2012, 4
        %v2359 = vadd.f32 %v2012, %v2358
        %v2360 = vrot.slane %v2359, 2
        %v2361 = vadd.f32 %v2359, %v2360
        %v2362 = vrot.slane %v2361, 1
        %v2363 = vadd.f32 %v2361, %v2362
        %v2364 = vrot.slane %v2236, 4
        %v2365 = vadd.f32 %v2236, %v2364
        %v2366 = vrot.slane %v2365, 2
        %v2367 = vadd.f32 %v2365, %v2366
        %v2368 = vrot.slane %v2367, 1
        %v2369 = vadd.f32 %v2367, %v2368
        %v2370 = vrot.slane %v2238, 4
        %v2371 = vadd.f32 %v2238, %v2370
        %v2372 = vrot.slane %v2371, 2
        %v2373 = vadd.f32 %v2371, %v2372
        %v2374 = vrot.slane %v2373, 1
        %v2375 = vadd.f32 %v2373, %v2374
        %v2376 = vrot.slane %v2014, 4
        %v2377 = vadd.f32 %v2014, %v2376
        %v2378 = vrot.slane %v2377, 2
        %v2379 = vadd.f32 %v2377, %v2378
        %v2380 = vrot.slane %v2379, 1
        %v2381 = vadd.f32 %v2379, %v2380
        %v2382 = vrot.slane %v2016, 4
        %v2383 = vadd.f32 %v2016, %v2382
        %v2384 = vrot.slane %v2383, 2
        %v2385 = vadd.f32 %v2383, %v2384
        %v2386 = vrot.slane %v2385, 1
        %v2387 = vadd.f32 %v2385, %v2386
        %v2388 = vrot.slane %v2240, 4
        %v2389 = vadd.f32 %v2240, %v2388
        %v2390 = vrot.slane %v2389, 2
        %v2391 = vadd.f32 %v2389, %v2390
        %v2392 = vrot.slane %v2391, 1
        %v2393 = vadd.f32 %v2391, %v2392
        %v2394 = vrot.slane %v2242, 4
        %v2395 = vadd.f32 %v2242, %v2394
        %v2396 = vrot.slane %v2395, 2
        %v2397 = vadd.f32 %v2395, %v2396
        %v2398 = vrot.slane %v2397, 1
        %v2399 = vadd.f32 %v2397, %v2398
        %v2400 = vrot.slane %v2020, 4
        %v2401 = vadd.f32 %v2020, %v2400
        %v2402 = vrot.slane %v2401, 2
        %v2403 = vadd.f32 %v2401, %v2402
        %v2404 = vrot.slane %v2403, 1
        %v2405 = vadd.f32 %v2403, %v2404
        %v2406 = vrot.slane %v2022, 4
        %v2407 = vadd.f32 %v2022, %v2406
        %v2408 = vrot.slane %v2407, 2
        %v2409 = vadd.f32 %v2407, %v2408
        %v2410 = vrot.slane %v2409, 1
        %v2411 = vadd.f32 %v2409, %v2410
        %v2412 = vrot.slane %v2246, 4
        %v2413 = vadd.f32 %v2246, %v2412
        %v2414 = vrot.slane %v2413, 2
        %v2415 = vadd.f32 %v2413, %v2414
        %v2416 = vrot.slane %v2415, 1
        %v2417 = vadd.f32 %v2415, %v2416
        %v2418 = vrot.slane %v2248, 4
        %v2419 = vadd.f32 %v2248, %v2418
        %v2420 = vrot.slane %v2419, 2
        %v2421 = vadd.f32 %v2419, %v2420
        %v2422 = vrot.slane %v2421, 1
        %v2423 = vadd.f32 %v2421, %v2422
        %v2424 = vrot.slane %v2024, 4
        %v2425 = vadd.f32 %v2024, %v2424
        %v2426 = vrot.slane %v2425, 2
        %v2427 = vadd.f32 %v2425, %v2426
        %v2428 = vrot.slane %v2427, 1
        %v2429 = vadd.f32 %v2427, %v2428
        %v2430 = vrot.slane %v2026, 4
        %v2431 = vadd.f32 %v2026, %v2430
        %v2432 = vrot.slane %v2431, 2
        %v2433 = vadd.f32 %v2431, %v2432
        %v2434 = vrot.slane %v2433, 1
        %v2435 = vadd.f32 %v2433, %v2434
        %v2436 = vrot.slane %v2250, 4
        %v2437 = vadd.f32 %v2250, %v2436
        %v2438 = vrot.slane %v2437, 2
        %v2439 = vadd.f32 %v2437, %v2438
        %v2440 = vrot.slane %v2439, 1
        %v2441 = vadd.f32 %v2439, %v2440
        %v2442 = vrot.slane %v2252, 4
        %v2443 = vadd.f32 %v2252, %v2442
        %v2444 = vrot.slane %v2443, 2
        %v2445 = vadd.f32 %v2443, %v2444
        %v2446 = vrot.slane %v2445, 1
        %v2447 = vadd.f32 %v2445, %v2446
        %v2448 = vrot.slane %v2030, 4
        %v2449 = vadd.f32 %v2030, %v2448
        %v2450 = vrot.slane %v2449, 2
        %v2451 = vadd.f32 %v2449, %v2450
        %v2452 = vrot.slane %v2451, 1
        %v2453 = vadd.f32 %v2451, %v2452
        %v2454 = vrot.slane %v2032, 4
        %v2455 = vadd.f32 %v2032, %v2454
        %v2456 = vrot.slane %v2455, 2
        %v2457 = vadd.f32 %v2455, %v2456
        %v2458 = vrot.slane %v2457, 1
        %v2459 = vadd.f32 %v2457, %v2458
        %v2460 = vrot.slane %v2256, 4
        %v2461 = vadd.f32 %v2256, %v2460
        %v2462 = vrot.slane %v2461, 2
        %v2463 = vadd.f32 %v2461, %v2462
        %v2464 = vrot.slane %v2463, 1
        %v2465 = vadd.f32 %v2463, %v2464
        %v2466 = vrot.slane %v2258, 4
        %v2467 = vadd.f32 %v2258, %v2466
        %v2468 = vrot.slane %v2467, 2
        %v2469 = vadd.f32 %v2467, %v2468
        %v2470 = vrot.slane %v2469, 1
        %v2471 = vadd.f32 %v2469, %v2470
        %v2472 = vrot.slane %v2034, 4
        %v2473 = vadd.f32 %v2034, %v2472
        %v2474 = vrot.slane %v2473, 2
        %v2475 = vadd.f32 %v2473, %v2474
        %v2476 = vrot.slane %v2475, 1
        %v2477 = vadd.f32 %v2475, %v2476
        %v2478 = vrot.slane %v2036, 4
        %v2479 = vadd.f32 %v2036, %v2478
        %v2480 = vrot.slane %v2479, 2
        %v2481 = vadd.f32 %v2479, %v2480
        %v2482 = vrot.slane %v2481, 1
        %v2483 = vadd.f32 %v2481, %v2482
        %v2484 = vrot.slane %v2260, 4
        %v2485 = vadd.f32 %v2260, %v2484
        %v2486 = vrot.slane %v2485, 2
        %v2487 = vadd.f32 %v2485, %v2486
        %v2488 = vrot.slane %v2487, 1
        %v2489 = vadd.f32 %v2487, %v2488
        %v2490 = vrot.slane %v2262, 4
        %v2491 = vadd.f32 %v2262, %v2490
        %v2492 = vrot.slane %v2491, 2
        %v2493 = vadd.f32 %v2491, %v2492
        %v2494 = vrot.slane %v2493, 1
        %v2495 = vadd.f32 %v2493, %v2494
        %v2496 = vrot.slane %v2040, 4
        %v2497 = vadd.f32 %v2040, %v2496
        %v2498 = vrot.slane %v2497, 2
        %v2499 = vadd.f32 %v2497, %v2498
        %v2500 = vrot.slane %v2499, 1
        %v2501 = vadd.f32 %v2499, %v2500
        %v2502 = vrot.slane %v2042, 4
        %v2503 = vadd.f32 %v2042, %v2502
        %v2504 = vrot.slane %v2503, 2
        %v2505 = vadd.f32 %v2503, %v2504
        %v2506 = vrot.slane %v2505, 1
        %v2507 = vadd.f32 %v2505, %v2506
        %v2508 = vrot.slane %v2266, 4
        %v2509 = vadd.f32 %v2266, %v2508
        %v2510 = vrot.slane %v2509, 2
        %v2511 = vadd.f32 %v2509, %v2510
        %v2512 = vrot.slane %v2511, 1
        %v2513 = vadd.f32 %v2511, %v2512
        %v2514 = vrot.slane %v2268, 4
        %v2515 = vadd.f32 %v2268, %v2514
        %v2516 = vrot.slane %v2515, 2
        %v2517 = vadd.f32 %v2515, %v2516
        %v2518 = vrot.slane %v2517, 1
        %v2519 = vadd.f32 %v2517, %v2518
        %v2520 = vrot.slane %v2044, 4
        %v2521 = vadd.f32 %v2044, %v2520
        %v2522 = vrot.slane %v2521, 2
        %v2523 = vadd.f32 %v2521, %v2522
        %v2524 = vrot.slane %v2523, 1
        %v2525 = vadd.f32 %v2523, %v2524
        %v2526 = vrot.slane %v2046, 4
        %v2527 = vadd.f32 %v2046, %v2526
        %v2528 = vrot.slane %v2527, 2
        %v2529 = vadd.f32 %v2527, %v2528
        %v2530 = vrot.slane %v2529, 1
        %v2531 = vadd.f32 %v2529, %v2530
        %v2532 = vrot.slane %v2270, 4
        %v2533 = vadd.f32 %v2270, %v2532
        %v2534 = vrot.slane %v2533, 2
        %v2535 = vadd.f32 %v2533, %v2534
        %v2536 = vrot.slane %v2535, 1
        %v2537 = vadd.f32 %v2535, %v2536
        %v2538 = vrot.slane %v2272, 4
        %v2539 = vadd.f32 %v2272, %v2538
        %v2540 = vrot.slane %v2539, 2
        %v2541 = vadd.f32 %v2539, %v2540
        %v2542 = vrot.slane %v2541, 1
        %v2543 = vadd.f32 %v2541, %v2542
        %v2544 = vrot.slane %v2050, 4
        %v2545 = vadd.f32 %v2050, %v2544
        %v2546 = vrot.slane %v2545, 2
        %v2547 = vadd.f32 %v2545, %v2546
        %v2548 = vrot.slane %v2547, 1
        %v2549 = vadd.f32 %v2547, %v2548
        %v2550 = vrot.slane %v2052, 4
        %v2551 = vadd.f32 %v2052, %v2550
        %v2552 = vrot.slane %v2551, 2
        %v2553 = vadd.f32 %v2551, %v2552
        %v2554 = vrot.slane %v2553, 1
        %v2555 = vadd.f32 %v2553, %v2554
        %v2556 = vrot.slane %v2276, 4
        %v2557 = vadd.f32 %v2276, %v2556
        %v2558 = vrot.slane %v2557, 2
        %v2559 = vadd.f32 %v2557, %v2558
        %v2560 = vrot.slane %v2559, 1
        %v2561 = vadd.f32 %v2559, %v2560
        %v2562 = vrot.slane %v2278, 4
        %v2563 = vadd.f32 %v2278, %v2562
        %v2564 = vrot.slane %v2563, 2
        %v2565 = vadd.f32 %v2563, %v2564
        %v2566 = vrot.slane %v2565, 1
        %v2567 = vadd.f32 %v2565, %v2566
        %v2568 = vrot.slane %v2054, 4
        %v2569 = vadd.f32 %v2054, %v2568
        %v2570 = vrot.slane %v2569, 2
        %v2571 = vadd.f32 %v2569, %v2570
        %v2572 = vrot.slane %v2571, 1
        %v2573 = vadd.f32 %v2571, %v2572
        %v2574 = vrot.slane %v2056, 4
        %v2575 = vadd.f32 %v2056, %v2574
        %v2576 = vrot.slane %v2575, 2
        %v2577 = vadd.f32 %v2575, %v2576
        %v2578 = vrot.slane %v2577, 1
        %v2579 = vadd.f32 %v2577, %v2578
        %v2580 = vrot.slane %v2280, 4
        %v2581 = vadd.f32 %v2280, %v2580
        %v2582 = vrot.slane %v2581, 2
        %v2583 = vadd.f32 %v2581, %v2582
        %v2584 = vrot.slane %v2583, 1
        %v2585 = vadd.f32 %v2583, %v2584
        %v2586 = vrot.slane %v2282, 4
        %v2587 = vadd.f32 %v2282, %v2586
        %v2588 = vrot.slane %v2587, 2
        %v2589 = vadd.f32 %v2587, %v2588
        %v2590 = vrot.slane %v2589, 1
        %v2591 = vadd.f32 %v2589, %v2590
        %v2592 = vrot.slane %v2060, 4
        %v2593 = vadd.f32 %v2060, %v2592
        %v2594 = vrot.slane %v2593, 2
        %v2595 = vadd.f32 %v2593, %v2594
        %v2596 = vrot.slane %v2595, 1
        %v2597 = vadd.f32 %v2595, %v2596
        %v2598 = vrot.slane %v2062, 4
        %v2599 = vadd.f32 %v2062, %v2598
        %v2600 = vrot.slane %v2599, 2
        %v2601 = vadd.f32 %v2599, %v2600
        %v2602 = vrot.slane %v2601, 1
        %v2603 = vadd.f32 %v2601, %v2602
        %v2604 = vrot.slane %v2286, 4
        %v2605 = vadd.f32 %v2286, %v2604
        %v2606 = vrot.slane %v2605, 2
        %v2607 = vadd.f32 %v2605, %v2606
        %v2608 = vrot.slane %v2607, 1
        %v2609 = vadd.f32 %v2607, %v2608
        %v2610 = vrot.slane %v2288, 4
        %v2611 = vadd.f32 %v2288, %v2610
        %v2612 = vrot.slane %v2611, 2
        %v2613 = vadd.f32 %v2611, %v2612
        %v2614 = vrot.slane %v2613, 1
        %v2615 = vadd.f32 %v2613, %v2614
        %v2616 = vrot.slane %v2064, 4
        %v2617 = vadd.f32 %v2064, %v2616
        %v2618 = vrot.slane %v2617, 2
        %v2619 = vadd.f32 %v2617, %v2618
        %v2620 = vrot.slane %v2619, 1
        %v2621 = vadd.f32 %v2619, %v2620
        %v2622 = vrot.slane %v2066, 4
        %v2623 = vadd.f32 %v2066, %v2622
        %v2624 = vrot.slane %v2623, 2
        %v2625 = vadd.f32 %v2623, %v2624
        %v2626 = vrot.slane %v2625, 1
        %v2627 = vadd.f32 %v2625, %v2626
        %v2628 = vrot.slane %v2290, 4
        %v2629 = vadd.f32 %v2290, %v2628
        %v2630 = vrot.slane %v2629, 2
        %v2631 = vadd.f32 %v2629, %v2630
        %v2632 = vrot.slane %v2631, 1
        %v2633 = vadd.f32 %v2631, %v2632
        %v2634 = vrot.slane %v2292, 4
        %v2635 = vadd.f32 %v2292, %v2634
        %v2636 = vrot.slane %v2635, 2
        %v2637 = vadd.f32 %v2635, %v2636
        %v2638 = vrot.slane %v2637, 1
        %v2639 = vadd.f32 %v2637, %v2638
        %v2640 = vrot.slane %v2070, 4
        %v2641 = vadd.f32 %v2070, %v2640
        %v2642 = vrot.slane %v2641, 2
        %v2643 = vadd.f32 %v2641, %v2642
        %v2644 = vrot.slane %v2643, 1
        %v2645 = vadd.f32 %v2643, %v2644
        %v2646 = vrot.slane %v2072, 4
        %v2647 = vadd.f32 %v2072, %v2646
        %v2648 = vrot.slane %v2647, 2
        %v2649 = vadd.f32 %v2647, %v2648
        %v2650 = vrot.slane %v2649, 1
        %v2651 = vadd.f32 %v2649, %v2650
        %v2652 = vrot.slane %v2296, 4
        %v2653 = vadd.f32 %v2296, %v2652
        %v2654 = vrot.slane %v2653, 2
        %v2655 = vadd.f32 %v2653, %v2654
        %v2656 = vrot.slane %v2655, 1
        %v2657 = vadd.f32 %v2655, %v2656
        %v2658 = vrot.slane %v2298, 4
        %v2659 = vadd.f32 %v2298, %v2658
        %v2660 = vrot.slane %v2659, 2
        %v2661 = vadd.f32 %v2659, %v2660
        %v2662 = vrot.slane %v2661, 1
        %v2663 = vadd.f32 %v2661, %v2662
        %v2664 = vrot.slane %v2074, 4
        %v2665 = vadd.f32 %v2074, %v2664
        %v2666 = vrot.slane %v2665, 2
        %v2667 = vadd.f32 %v2665, %v2666
        %v2668 = vrot.slane %v2667, 1
        %v2669 = vadd.f32 %v2667, %v2668
        %v2670 = vrot.slane %v2076, 4
        %v2671 = vadd.f32 %v2076, %v2670
        %v2672 = vrot.slane %v2671, 2
        %v2673 = vadd.f32 %v2671, %v2672
        %v2674 = vrot.slane %v2673, 1
        %v2675 = vadd.f32 %v2673, %v2674
        %v2676 = vrot.slane %v2300, 4
        %v2677 = vadd.f32 %v2300, %v2676
        %v2678 = vrot.slane %v2677, 2
        %v2679 = vadd.f32 %v2677, %v2678
        %v2680 = vrot.slane %v2679, 1
        %v2681 = vadd.f32 %v2679, %v2680
        %v2682 = vrot.slane %v2302, 4
        %v2683 = vadd.f32 %v2302, %v2682
        %v2684 = vrot.slane %v2683, 2
        %v2685 = vadd.f32 %v2683, %v2684
        %v2686 = vrot.slane %v2685, 1
        %v2687 = vadd.f32 %v2685, %v2686
        %v2688 = vrcp.pop 8.0
        %v2689 = vmul.f32 %v2309, %v2688
        %v2690 = vmul.f32 %v2315, %v2688
        %v2691 = vmul.f32 %v2321, %v2688
        %v2692 = vmul.f32 %v2327, %v2688
        %v2693 = vmul.f32 %v2333, %v2688
        %v2694 = vmul.f32 %v2339, %v2688
        %v2695 = vmul.f32 %v2345, %v2688
        %v2696 = vmul.f32 %v2351, %v2688
        %v2697 = vmul.f32 %v2357, %v2688
        %v2698 = vmul.f32 %v2363, %v2688
        %v2699 = vmul.f32 %v2369, %v2688
        %v2700 = vmul.f32 %v2375, %v2688
        %v2701 = vmul.f32 %v2381, %v2688
        %v2702 = vmul.f32 %v2387, %v2688
        %v2703 = vmul.f32 %v2393, %v2688
        %v2704 = vmul.f32 %v2399, %v2688
        %v2705 = vmul.f32 %v2405, %v2688
        %v2706 = vmul.f32 %v2411, %v2688
        %v2707 = vmul.f32 %v2417, %v2688
        %v2708 = vmul.f32 %v2423, %v2688
        %v2709 = vmul.f32 %v2429, %v2688
        %v2710 = vmul.f32 %v2435, %v2688
        %v2711 = vmul.f32 %v2441, %v2688
        %v2712 = vmul.f32 %v2447, %v2688
        %v2713 = vmul.f32 %v2453, %v2688
        %v2714 = vmul.f32 %v2459, %v2688
        %v2715 = vmul.f32 %v2465, %v2688
        %v2716 = vmul.f32 %v2471, %v2688
        %v2717 = vmul.f32 %v2477, %v2688
        %v2718 = vmul.f32 %v2483, %v2688
        %v2719 = vmul.f32 %v2489, %v2688
        %v2720 = vmul.f32 %v2495, %v2688
        %v2721 = vmul.f32 %v2501, %v2688
        %v2722 = vmul.f32 %v2507, %v2688
        %v2723 = vmul.f32 %v2513, %v2688
        %v2724 = vmul.f32 %v2519, %v2688
        %v2725 = vmul.f32 %v2525, %v2688
        %v2726 = vmul.f32 %v2531, %v2688
        %v2727 = vmul.f32 %v2537, %v2688
        %v2728 = vmul.f32 %v2543, %v2688
        %v2729 = vmul.f32 %v2549, %v2688
        %v2730 = vmul.f32 %v2555, %v2688
        %v2731 = vmul.f32 %v2561, %v2688
        %v2732 = vmul.f32 %v2567, %v2688
        %v2733 = vmul.f32 %v2573, %v2688
        %v2734 = vmul.f32 %v2579, %v2688
        %v2735 = vmul.f32 %v2585, %v2688
        %v2736 = vmul.f32 %v2591, %v2688
        %v2737 = vmul.f32 %v2597, %v2688
        %v2738 = vmul.f32 %v2603, %v2688
        %v2739 = vmul.f32 %v2609, %v2688
        %v2740 = vmul.f32 %v2615, %v2688
        %v2741 = vmul.f32 %v2621, %v2688
        %v2742 = vmul.f32 %v2627, %v2688
        %v2743 = vmul.f32 %v2633, %v2688
        %v2744 = vmul.f32 %v2639, %v2688
        %v2745 = vmul.f32 %v2645, %v2688
        %v2746 = vmul.f32 %v2651, %v2688
        %v2747 = vmul.f32 %v2657, %v2688
        %v2748 = vmul.f32 %v2663, %v2688
        %v2749 = vmul.f32 %v2669, %v2688
        %v2750 = vmul.f32 %v2675, %v2688
        %v2751 = vmul.f32 %v2681, %v2688
        %v2752 = vmul.f32 %v2687, %v2688
        %v2753 = vmul.f32 %v2000, %v2000
        %v2754 = vmul.f32 %v2002, %v2002
        %v2755 = vmul.f32 %v2226, %v2226
        %v2756 = vmul.f32 %v2228, %v2228
        %v2757 = vmul.f32 %v2004, %v2004
        %v2758 = vmul.f32 %v2006, %v2006
        %v2759 = vmul.f32 %v2230, %v2230
        %v2760 = vmul.f32 %v2232, %v2232
        %v2761 = vmul.f32 %v2010, %v2010
        %v2762 = vmul.f32 %v2012, %v2012
        %v2763 = vmul.f32 %v2236, %v2236
        %v2764 = vmul.f32 %v2238, %v2238
        %v2765 = vmul.f32 %v2014, %v2014
        %v2766 = vmul.f32 %v2016, %v2016
        %v2767 = vmul.f32 %v2240, %v2240
        %v2768 = vmul.f32 %v2242, %v2242
        %v2769 = vmul.f32 %v2020, %v2020
        %v2770 = vmul.f32 %v2022, %v2022
        %v2771 = vmul.f32 %v2246, %v2246
        %v2772 = vmul.f32 %v2248, %v2248
        %v2773 = vmul.f32 %v2024, %v2024
        %v2774 = vmul.f32 %v2026, %v2026
        %v2775 = vmul.f32 %v2250, %v2250
        %v2776 = vmul.f32 %v2252, %v2252
        %v2777 = vmul.f32 %v2030, %v2030
        %v2778 = vmul.f32 %v2032, %v2032
        %v2779 = vmul.f32 %v2256, %v2256
        %v2780 = vmul.f32 %v2258, %v2258
        %v2781 = vmul.f32 %v2034, %v2034
        %v2782 = vmul.f32 %v2036, %v2036
        %v2783 = vmul.f32 %v2260, %v2260
        %v2784 = vmul.f32 %v2262, %v2262
        %v2785 = vmul.f32 %v2040, %v2040
        %v2786 = vmul.f32 %v2042, %v2042
        %v2787 = vmul.f32 %v2266, %v2266
        %v2788 = vmul.f32 %v2268, %v2268
        %v2789 = vmul.f32 %v2044, %v2044
        %v2790 = vmul.f32 %v2046, %v2046
        %v2791 = vmul.f32 %v2270, %v2270
        %v2792 = vmul.f32 %v2272, %v2272
        %v2793 = vmul.f32 %v2050, %v2050
        %v2794 = vmul.f32 %v2052, %v2052
        %v2795 = vmul.f32 %v2276, %v2276
        %v2796 = vmul.f32 %v2278, %v2278
        %v2797 = vmul.f32 %v2054, %v2054
        %v2798 = vmul.f32 %v2056, %v2056
        %v2799 = vmul.f32 %v2280, %v2280
        %v2800 = vmul.f32 %v2282, %v2282
        %v2801 = vmul.f32 %v2060, %v2060
        %v2802 = vmul.f32 %v2062, %v2062
        %v2803 = vmul.f32 %v2286, %v2286
        %v2804 = vmul.f32 %v2288, %v2288
        %v2805 = vmul.f32 %v2064, %v2064
        %v2806 = vmul.f32 %v2066, %v2066
        %v2807 = vmul.f32 %v2290, %v2290
        %v2808 = vmul.f32 %v2292, %v2292
        %v2809 = vmul.f32 %v2070, %v2070
        %v2810 = vmul.f32 %v2072, %v2072
        %v2811 = vmul.f32 %v2296, %v2296
        %v2812 = vmul.f32 %v2298, %v2298
        %v2813 = vmul.f32 %v2074, %v2074
        %v2814 = vmul.f32 %v2076, %v2076
        %v2815 = vmul.f32 %v2300, %v2300
        %v2816 = vmul.f32 %v2302, %v2302
        %v2817 = vrot.slane %v2753, 4
        %v2818 = vadd.f32 %v2753, %v2817
        %v2819 = vrot.slane %v2818, 2
        %v2820 = vadd.f32 %v2818, %v2819
        %v2821 = vrot.slane %v2820, 1
        %v2822 = vadd.f32 %v2820, %v2821
        %v2823 = vrot.slane %v2754, 4
        %v2824 = vadd.f32 %v2754, %v2823
        %v2825 = vrot.slane %v2824, 2
        %v2826 = vadd.f32 %v2824, %v2825
        %v2827 = vrot.slane %v2826, 1
        %v2828 = vadd.f32 %v2826, %v2827
        %v2829 = vrot.slane %v2755, 4
        %v2830 = vadd.f32 %v2755, %v2829
        %v2831 = vrot.slane %v2830, 2
        %v2832 = vadd.f32 %v2830, %v2831
        %v2833 = vrot.slane %v2832, 1
        %v2834 = vadd.f32 %v2832, %v2833
        %v2835 = vrot.slane %v2756, 4
        %v2836 = vadd.f32 %v2756, %v2835
        %v2837 = vrot.slane %v2836, 2
        %v2838 = vadd.f32 %v2836, %v2837
        %v2839 = vrot.slane %v2838, 1
        %v2840 = vadd.f32 %v2838, %v2839
        %v2841 = vrot.slane %v2757, 4
        %v2842 = vadd.f32 %v2757, %v2841
        %v2843 = vrot.slane %v2842, 2
        %v2844 = vadd.f32 %v2842, %v2843
        %v2845 = vrot.slane %v2844, 1
        %v2846 = vadd.f32 %v2844, %v2845
        %v2847 = vrot.slane %v2758, 4
        %v2848 = vadd.f32 %v2758, %v2847
        %v2849 = vrot.slane %v2848, 2
        %v2850 = vadd.f32 %v2848, %v2849
        %v2851 = vrot.slane %v2850, 1
        %v2852 = vadd.f32 %v2850, %v2851
        %v2853 = vrot.slane %v2759, 4
        %v2854 = vadd.f32 %v2759, %v2853
        %v2855 = vrot.slane %v2854, 2
        %v2856 = vadd.f32 %v2854, %v2855
        %v2857 = vrot.slane %v2856, 1
        %v2858 = vadd.f32 %v2856, %v2857
        %v2859 = vrot.slane %v2760, 4
        %v2860 = vadd.f32 %v2760, %v2859
        %v2861 = vrot.slane %v2860, 2
        %v2862 = vadd.f32 %v2860, %v2861
        %v2863 = vrot.slane %v2862, 1
        %v2864 = vadd.f32 %v2862, %v2863
        %v2865 = vrot.slane %v2761, 4
        %v2866 = vadd.f32 %v2761, %v2865
        %v2867 = vrot.slane %v2866, 2
        %v2868 = vadd.f32 %v2866, %v2867
        %v2869 = vrot.slane %v2868, 1
        %v2870 = vadd.f32 %v2868, %v2869
        %v2871 = vrot.slane %v2762, 4
        %v2872 = vadd.f32 %v2762, %v2871
        %v2873 = vrot.slane %v2872, 2
        %v2874 = vadd.f32 %v2872, %v2873
        %v2875 = vrot.slane %v2874, 1
        %v2876 = vadd.f32 %v2874, %v2875
        %v2877 = vrot.slane %v2763, 4
        %v2878 = vadd.f32 %v2763, %v2877
        %v2879 = vrot.slane %v2878, 2
        %v2880 = vadd.f32 %v2878, %v2879
        %v2881 = vrot.slane %v2880, 1
        %v2882 = vadd.f32 %v2880, %v2881
        %v2883 = vrot.slane %v2764, 4
        %v2884 = vadd.f32 %v2764, %v2883
        %v2885 = vrot.slane %v2884, 2
        %v2886 = vadd.f32 %v2884, %v2885
        %v2887 = vrot.slane %v2886, 1
        %v2888 = vadd.f32 %v2886, %v2887
        %v2889 = vrot.slane %v2765, 4
        %v2890 = vadd.f32 %v2765, %v2889
        %v2891 = vrot.slane %v2890, 2
        %v2892 = vadd.f32 %v2890, %v2891
        %v2893 = vrot.slane %v2892, 1
        %v2894 = vadd.f32 %v2892, %v2893
        %v2895 = vrot.slane %v2766, 4
        %v2896 = vadd.f32 %v2766, %v2895
        %v2897 = vrot.slane %v2896, 2
        %v2898 = vadd.f32 %v2896, %v2897
        %v2899 = vrot.slane %v2898, 1
        %v2900 = vadd.f32 %v2898, %v2899
        %v2901 = vrot.slane %v2767, 4
        %v2902 = vadd.f32 %v2767, %v2901
        %v2903 = vrot.slane %v2902, 2
        %v2904 = vadd.f32 %v2902, %v2903
        %v2905 = vrot.slane %v2904, 1
        %v2906 = vadd.f32 %v2904, %v2905
        %v2907 = vrot.slane %v2768, 4
        %v2908 = vadd.f32 %v2768, %v2907
        %v2909 = vrot.slane %v2908, 2
        %v2910 = vadd.f32 %v2908, %v2909
        %v2911 = vrot.slane %v2910, 1
        %v2912 = vadd.f32 %v2910, %v2911
        %v2913 = vrot.slane %v2769, 4
        %v2914 = vadd.f32 %v2769, %v2913
        %v2915 = vrot.slane %v2914, 2
        %v2916 = vadd.f32 %v2914, %v2915
        %v2917 = vrot.slane %v2916, 1
        %v2918 = vadd.f32 %v2916, %v2917
        %v2919 = vrot.slane %v2770, 4
        %v2920 = vadd.f32 %v2770, %v2919
        %v2921 = vrot.slane %v2920, 2
        %v2922 = vadd.f32 %v2920, %v2921
        %v2923 = vrot.slane %v2922, 1
        %v2924 = vadd.f32 %v2922, %v2923
        %v2925 = vrot.slane %v2771, 4
        %v2926 = vadd.f32 %v2771, %v2925
        %v2927 = vrot.slane %v2926, 2
        %v2928 = vadd.f32 %v2926, %v2927
        %v2929 = vrot.slane %v2928, 1
        %v2930 = vadd.f32 %v2928, %v2929
        %v2931 = vrot.slane %v2772, 4
        %v2932 = vadd.f32 %v2772, %v2931
        %v2933 = vrot.slane %v2932, 2
        %v2934 = vadd.f32 %v2932, %v2933
        %v2935 = vrot.slane %v2934, 1
        %v2936 = vadd.f32 %v2934, %v2935
        %v2937 = vrot.slane %v2773, 4
        %v2938 = vadd.f32 %v2773, %v2937
        %v2939 = vrot.slane %v2938, 2
        %v2940 = vadd.f32 %v2938, %v2939
        %v2941 = vrot.slane %v2940, 1
        %v2942 = vadd.f32 %v2940, %v2941
        %v2943 = vrot.slane %v2774, 4
        %v2944 = vadd.f32 %v2774, %v2943
        %v2945 = vrot.slane %v2944, 2
        %v2946 = vadd.f32 %v2944, %v2945
        %v2947 = vrot.slane %v2946, 1
        %v2948 = vadd.f32 %v2946, %v2947
        %v2949 = vrot.slane %v2775, 4
        %v2950 = vadd.f32 %v2775, %v2949
        %v2951 = vrot.slane %v2950, 2
        %v2952 = vadd.f32 %v2950, %v2951
        %v2953 = vrot.slane %v2952, 1
        %v2954 = vadd.f32 %v2952, %v2953
        %v2955 = vrot.slane %v2776, 4
        %v2956 = vadd.f32 %v2776, %v2955
        %v2957 = vrot.slane %v2956, 2
        %v2958 = vadd.f32 %v2956, %v2957
        %v2959 = vrot.slane %v2958, 1
        %v2960 = vadd.f32 %v2958, %v2959
        %v2961 = vrot.slane %v2777, 4
        %v2962 = vadd.f32 %v2777, %v2961
        %v2963 = vrot.slane %v2962, 2
        %v2964 = vadd.f32 %v2962, %v2963
        %v2965 = vrot.slane %v2964, 1
        %v2966 = vadd.f32 %v2964, %v2965
        %v2967 = vrot.slane %v2778, 4
        %v2968 = vadd.f32 %v2778, %v2967
        %v2969 = vrot.slane %v2968, 2
        %v2970 = vadd.f32 %v2968, %v2969
        %v2971 = vrot.slane %v2970, 1
        %v2972 = vadd.f32 %v2970, %v2971
        %v2973 = vrot.slane %v2779, 4
        %v2974 = vadd.f32 %v2779, %v2973
        %v2975 = vrot.slane %v2974, 2
        %v2976 = vadd.f32 %v2974, %v2975
        %v2977 = vrot.slane %v2976, 1
        %v2978 = vadd.f32 %v2976, %v2977
        %v2979 = vrot.slane %v2780, 4
        %v2980 = vadd.f32 %v2780, %v2979
        %v2981 = vrot.slane %v2980, 2
        %v2982 = vadd.f32 %v2980, %v2981
        %v2983 = vrot.slane %v2982, 1
        %v2984 = vadd.f32 %v2982, %v2983
        %v2985 = vrot.slane %v2781, 4
        %v2986 = vadd.f32 %v2781, %v2985
        %v2987 = vrot.slane %v2986, 2
        %v2988 = vadd.f32 %v2986, %v2987
        %v2989 = vrot.slane %v2988, 1
        %v2990 = vadd.f32 %v2988, %v2989
        %v2991 = vrot.slane %v2782, 4
        %v2992 = vadd.f32 %v2782, %v2991
        %v2993 = vrot.slane %v2992, 2
        %v2994 = vadd.f32 %v2992, %v2993
        %v2995 = vrot.slane %v2994, 1
        %v2996 = vadd.f32 %v2994, %v2995
        %v2997 = vrot.slane %v2783, 4
        %v2998 = vadd.f32 %v2783, %v2997
        %v2999 = vrot.slane %v2998, 2
        %v3000 = vadd.f32 %v2998, %v2999
        %v3001 = vrot.slane %v3000, 1
        %v3002 = vadd.f32 %v3000, %v3001
        %v3003 = vrot.slane %v2784, 4
        %v3004 = vadd.f32 %v2784, %v3003
        %v3005 = vrot.slane %v3004, 2
        %v3006 = vadd.f32 %v3004, %v3005
        %v3007 = vrot.slane %v3006, 1
        %v3008 = vadd.f32 %v3006, %v3007
        %v3009 = vrot.slane %v2785, 4
        %v3010 = vadd.f32 %v2785, %v3009
        %v3011 = vrot.slane %v3010, 2
        %v3012 = vadd.f32 %v3010, %v3011
        %v3013 = vrot.slane %v3012, 1
        %v3014 = vadd.f32 %v3012, %v3013
        %v3015 = vrot.slane %v2786, 4
        %v3016 = vadd.f32 %v2786, %v3015
        %v3017 = vrot.slane %v3016, 2
        %v3018 = vadd.f32 %v3016, %v3017
        %v3019 = vrot.slane %v3018, 1
        %v3020 = vadd.f32 %v3018, %v3019
        %v3021 = vrot.slane %v2787, 4
        %v3022 = vadd.f32 %v2787, %v3021
        %v3023 = vrot.slane %v3022, 2
        %v3024 = vadd.f32 %v3022, %v3023
        %v3025 = vrot.slane %v3024, 1
        %v3026 = vadd.f32 %v3024, %v3025
        %v3027 = vrot.slane %v2788, 4
        %v3028 = vadd.f32 %v2788, %v3027
        %v3029 = vrot.slane %v3028, 2
        %v3030 = vadd.f32 %v3028, %v3029
        %v3031 = vrot.slane %v3030, 1
        %v3032 = vadd.f32 %v3030, %v3031
        %v3033 = vrot.slane %v2789, 4
        %v3034 = vadd.f32 %v2789, %v3033
        %v3035 = vrot.slane %v3034, 2
        %v3036 = vadd.f32 %v3034, %v3035
        %v3037 = vrot.slane %v3036, 1
        %v3038 = vadd.f32 %v3036, %v3037
        %v3039 = vrot.slane %v2790, 4
        %v3040 = vadd.f32 %v2790, %v3039
        %v3041 = vrot.slane %v3040, 2
        %v3042 = vadd.f32 %v3040, %v3041
        %v3043 = vrot.slane %v3042, 1
        %v3044 = vadd.f32 %v3042, %v3043
        %v3045 = vrot.slane %v2791, 4
        %v3046 = vadd.f32 %v2791, %v3045
        %v3047 = vrot.slane %v3046, 2
        %v3048 = vadd.f32 %v3046, %v3047
        %v3049 = vrot.slane %v3048, 1
        %v3050 = vadd.f32 %v3048, %v3049
        %v3051 = vrot.slane %v2792, 4
        %v3052 = vadd.f32 %v2792, %v3051
        %v3053 = vrot.slane %v3052, 2
        %v3054 = vadd.f32 %v3052, %v3053
        %v3055 = vrot.slane %v3054, 1
        %v3056 = vadd.f32 %v3054, %v3055
        %v3057 = vrot.slane %v2793, 4
        %v3058 = vadd.f32 %v2793, %v3057
        %v3059 = vrot.slane %v3058, 2
        %v3060 = vadd.f32 %v3058, %v3059
        %v3061 = vrot.slane %v3060, 1
        %v3062 = vadd.f32 %v3060, %v3061
        %v3063 = vrot.slane %v2794, 4
        %v3064 = vadd.f32 %v2794, %v3063
        %v3065 = vrot.slane %v3064, 2
        %v3066 = vadd.f32 %v3064, %v3065
        %v3067 = vrot.slane %v3066, 1
        %v3068 = vadd.f32 %v3066, %v3067
        %v3069 = vrot.slane %v2795, 4
        %v3070 = vadd.f32 %v2795, %v3069
        %v3071 = vrot.slane %v3070, 2
        %v3072 = vadd.f32 %v3070, %v3071
        %v3073 = vrot.slane %v3072, 1
        %v3074 = vadd.f32 %v3072, %v3073
        %v3075 = vrot.slane %v2796, 4
        %v3076 = vadd.f32 %v2796, %v3075
        %v3077 = vrot.slane %v3076, 2
        %v3078 = vadd.f32 %v3076, %v3077
        %v3079 = vrot.slane %v3078, 1
        %v3080 = vadd.f32 %v3078, %v3079
        %v3081 = vrot.slane %v2797, 4
        %v3082 = vadd.f32 %v2797, %v3081
        %v3083 = vrot.slane %v3082, 2
        %v3084 = vadd.f32 %v3082, %v3083
        %v3085 = vrot.slane %v3084, 1
        %v3086 = vadd.f32 %v3084, %v3085
        %v3087 = vrot.slane %v2798, 4
        %v3088 = vadd.f32 %v2798, %v3087
        %v3089 = vrot.slane %v3088, 2
        %v3090 = vadd.f32 %v3088, %v3089
        %v3091 = vrot.slane %v3090, 1
        %v3092 = vadd.f32 %v3090, %v3091
        %v3093 = vrot.slane %v2799, 4
        %v3094 = vadd.f32 %v2799, %v3093
        %v3095 = vrot.slane %v3094, 2
        %v3096 = vadd.f32 %v3094, %v3095
        %v3097 = vrot.slane %v3096, 1
        %v3098 = vadd.f32 %v3096, %v3097
        %v3099 = vrot.slane %v2800, 4
        %v3100 = vadd.f32 %v2800, %v3099
        %v3101 = vrot.slane %v3100, 2
        %v3102 = vadd.f32 %v3100, %v3101
        %v3103 = vrot.slane %v3102, 1
        %v3104 = vadd.f32 %v3102, %v3103
        %v3105 = vrot.slane %v2801, 4
        %v3106 = vadd.f32 %v2801, %v3105
        %v3107 = vrot.slane %v3106, 2
        %v3108 = vadd.f32 %v3106, %v3107
        %v3109 = vrot.slane %v3108, 1
        %v3110 = vadd.f32 %v3108, %v3109
        %v3111 = vrot.slane %v2802, 4
        %v3112 = vadd.f32 %v2802, %v3111
        %v3113 = vrot.slane %v3112, 2
        %v3114 = vadd.f32 %v3112, %v3113
        %v3115 = vrot.slane %v3114, 1
        %v3116 = vadd.f32 %v3114, %v3115
        %v3117 = vrot.slane %v2803, 4
        %v3118 = vadd.f32 %v2803, %v3117
        %v3119 = vrot.slane %v3118, 2
        %v3120 = vadd.f32 %v3118, %v3119
        %v3121 = vrot.slane %v3120, 1
        %v3122 = vadd.f32 %v3120, %v3121
        %v3123 = vrot.slane %v2804, 4
        %v3124 = vadd.f32 %v2804, %v3123
        %v3125 = vrot.slane %v3124, 2
        %v3126 = vadd.f32 %v3124, %v3125
        %v3127 = vrot.slane %v3126, 1
        %v3128 = vadd.f32 %v3126, %v3127
        %v3129 = vrot.slane %v2805, 4
        %v3130 = vadd.f32 %v2805, %v3129
        %v3131 = vrot.slane %v3130, 2
        %v3132 = vadd.f32 %v3130, %v3131
        %v3133 = vrot.slane %v3132, 1
        %v3134 = vadd.f32 %v3132, %v3133
        %v3135 = vrot.slane %v2806, 4
        %v3136 = vadd.f32 %v2806, %v3135
        %v3137 = vrot.slane %v3136, 2
        %v3138 = vadd.f32 %v3136, %v3137
        %v3139 = vrot.slane %v3138, 1
        %v3140 = vadd.f32 %v3138, %v3139
        %v3141 = vrot.slane %v2807, 4
        %v3142 = vadd.f32 %v2807, %v3141
        %v3143 = vrot.slane %v3142, 2
        %v3144 = vadd.f32 %v3142, %v3143
        %v3145 = vrot.slane %v3144, 1
        %v3146 = vadd.f32 %v3144, %v3145
        %v3147 = vrot.slane %v2808, 4
        %v3148 = vadd.f32 %v2808, %v3147
        %v3149 = vrot.slane %v3148, 2
        %v3150 = vadd.f32 %v3148, %v3149
        %v3151 = vrot.slane %v3150, 1
        %v3152 = vadd.f32 %v3150, %v3151
        %v3153 = vrot.slane %v2809, 4
        %v3154 = vadd.f32 %v2809, %v3153
        %v3155 = vrot.slane %v3154, 2
        %v3156 = vadd.f32 %v3154, %v3155
        %v3157 = vrot.slane %v3156, 1
        %v3158 = vadd.f32 %v3156, %v3157
        %v3159 = vrot.slane %v2810, 4
        %v3160 = vadd.f32 %v2810, %v3159
        %v3161 = vrot.slane %v3160, 2
        %v3162 = vadd.f32 %v3160, %v3161
        %v3163 = vrot.slane %v3162, 1
        %v3164 = vadd.f32 %v3162, %v3163
        %v3165 = vrot.slane %v2811, 4
        %v3166 = vadd.f32 %v2811, %v3165
        %v3167 = vrot.slane %v3166, 2
        %v3168 = vadd.f32 %v3166, %v3167
        %v3169 = vrot.slane %v3168, 1
        %v3170 = vadd.f32 %v3168, %v3169
        %v3171 = vrot.slane %v2812, 4
        %v3172 = vadd.f32 %v2812, %v3171
        %v3173 = vrot.slane %v3172, 2
        %v3174 = vadd.f32 %v3172, %v3173
        %v3175 = vrot.slane %v3174, 1
        %v3176 = vadd.f32 %v3174, %v3175
        %v3177 = vrot.slane %v2813, 4
        %v3178 = vadd.f32 %v2813, %v3177
        %v3179 = vrot.slane %v3178, 2
        %v3180 = vadd.f32 %v3178, %v3179
        %v3181 = vrot.slane %v3180, 1
        %v3182 = vadd.f32 %v3180, %v3181
        %v3183 = vrot.slane %v2814, 4
        %v3184 = vadd.f32 %v2814, %v3183
        %v3185 = vrot.slane %v3184, 2
        %v3186 = vadd.f32 %v3184, %v3185
        %v3187 = vrot.slane %v3186, 1
        %v3188 = vadd.f32 %v3186, %v3187
        %v3189 = vrot.slane %v2815, 4
        %v3190 = vadd.f32 %v2815, %v3189
        %v3191 = vrot.slane %v3190, 2
        %v3192 = vadd.f32 %v3190, %v3191
        %v3193 = vrot.slane %v3192, 1
        %v3194 = vadd.f32 %v3192, %v3193
        %v3195 = vrot.slane %v2816, 4
        %v3196 = vadd.f32 %v2816, %v3195
        %v3197 = vrot.slane %v3196, 2
        %v3198 = vadd.f32 %v3196, %v3197
        %v3199 = vrot.slane %v3198, 1
        %v3200 = vadd.f32 %v3198, %v3199
        %v3201 = vmul.f32 %v2822, %v2688
        %v3202 = vmul.f32 %v2828, %v2688
        %v3203 = vmul.f32 %v2834, %v2688
        %v3204 = vmul.f32 %v2840, %v2688
        %v3205 = vmul.f32 %v2846, %v2688
        %v3206 = vmul.f32 %v2852, %v2688
        %v3207 = vmul.f32 %v2858, %v2688
        %v3208 = vmul.f32 %v2864, %v2688
        %v3209 = vmul.f32 %v2870, %v2688
        %v3210 = vmul.f32 %v2876, %v2688
        %v3211 = vmul.f32 %v2882, %v2688
        %v3212 = vmul.f32 %v2888, %v2688
        %v3213 = vmul.f32 %v2894, %v2688
        %v3214 = vmul.f32 %v2900, %v2688
        %v3215 = vmul.f32 %v2906, %v2688
        %v3216 = vmul.f32 %v2912, %v2688
        %v3217 = vmul.f32 %v2918, %v2688
        %v3218 = vmul.f32 %v2924, %v2688
        %v3219 = vmul.f32 %v2930, %v2688
        %v3220 = vmul.f32 %v2936, %v2688
        %v3221 = vmul.f32 %v2942, %v2688
        %v3222 = vmul.f32 %v2948, %v2688
        %v3223 = vmul.f32 %v2954, %v2688
        %v3224 = vmul.f32 %v2960, %v2688
        %v3225 = vmul.f32 %v2966, %v2688
        %v3226 = vmul.f32 %v2972, %v2688
        %v3227 = vmul.f32 %v2978, %v2688
        %v3228 = vmul.f32 %v2984, %v2688
        %v3229 = vmul.f32 %v2990, %v2688
        %v3230 = vmul.f32 %v2996, %v2688
        %v3231 = vmul.f32 %v3002, %v2688
        %v3232 = vmul.f32 %v3008, %v2688
        %v3233 = vmul.f32 %v3014, %v2688
        %v3234 = vmul.f32 %v3020, %v2688
        %v3235 = vmul.f32 %v3026, %v2688
        %v3236 = vmul.f32 %v3032, %v2688
        %v3237 = vmul.f32 %v3038, %v2688
        %v3238 = vmul.f32 %v3044, %v2688
        %v3239 = vmul.f32 %v3050, %v2688
        %v3240 = vmul.f32 %v3056, %v2688
        %v3241 = vmul.f32 %v3062, %v2688
        %v3242 = vmul.f32 %v3068, %v2688
        %v3243 = vmul.f32 %v3074, %v2688
        %v3244 = vmul.f32 %v3080, %v2688
        %v3245 = vmul.f32 %v3086, %v2688
        %v3246 = vmul.f32 %v3092, %v2688
        %v3247 = vmul.f32 %v3098, %v2688
        %v3248 = vmul.f32 %v3104, %v2688
        %v3249 = vmul.f32 %v3110, %v2688
        %v3250 = vmul.f32 %v3116, %v2688
        %v3251 = vmul.f32 %v3122, %v2688
        %v3252 = vmul.f32 %v3128, %v2688
        %v3253 = vmul.f32 %v3134, %v2688
        %v3254 = vmul.f32 %v3140, %v2688
        %v3255 = vmul.f32 %v3146, %v2688
        %v3256 = vmul.f32 %v3152, %v2688
        %v3257 = vmul.f32 %v3158, %v2688
        %v3258 = vmul.f32 %v3164, %v2688
        %v3259 = vmul.f32 %v3170, %v2688
        %v3260 = vmul.f32 %v3176, %v2688
        %v3261 = vmul.f32 %v3182, %v2688
        %v3262 = vmul.f32 %v3188, %v2688
        %v3263 = vmul.f32 %v3194, %v2688
        %v3264 = vmul.f32 %v3200, %v2688
        %v3265 = vmul.f32 %v2689, %v2689
        %v3266 = vmul.f32 %v2690, %v2690
        %v3267 = vmul.f32 %v2691, %v2691
        %v3268 = vmul.f32 %v2692, %v2692
        %v3269 = vmul.f32 %v2693, %v2693
        %v3270 = vmul.f32 %v2694, %v2694
        %v3271 = vmul.f32 %v2695, %v2695
        %v3272 = vmul.f32 %v2696, %v2696
        %v3273 = vmul.f32 %v2697, %v2697
        %v3274 = vmul.f32 %v2698, %v2698
        %v3275 = vmul.f32 %v2699, %v2699
        %v3276 = vmul.f32 %v2700, %v2700
        %v3277 = vmul.f32 %v2701, %v2701
        %v3278 = vmul.f32 %v2702, %v2702
        %v3279 = vmul.f32 %v2703, %v2703
        %v3280 = vmul.f32 %v2704, %v2704
        %v3281 = vmul.f32 %v2705, %v2705
        %v3282 = vmul.f32 %v2706, %v2706
        %v3283 = vmul.f32 %v2707, %v2707
        %v3284 = vmul.f32 %v2708, %v2708
        %v3285 = vmul.f32 %v2709, %v2709
        %v3286 = vmul.f32 %v2710, %v2710
        %v3287 = vmul.f32 %v2711, %v2711
        %v3288 = vmul.f32 %v2712, %v2712
        %v3289 = vmul.f32 %v2713, %v2713
        %v3290 = vmul.f32 %v2714, %v2714
        %v3291 = vmul.f32 %v2715, %v2715
        %v3292 = vmul.f32 %v2716, %v2716
        %v3293 = vmul.f32 %v2717, %v2717
        %v3294 = vmul.f32 %v2718, %v2718
        %v3295 = vmul.f32 %v2719, %v2719
        %v3296 = vmul.f32 %v2720, %v2720
        %v3297 = vmul.f32 %v2721, %v2721
        %v3298 = vmul.f32 %v2722, %v2722
        %v3299 = vmul.f32 %v2723, %v2723
        %v3300 = vmul.f32 %v2724, %v2724
        %v3301 = vmul.f32 %v2725, %v2725
        %v3302 = vmul.f32 %v2726, %v2726
        %v3303 = vmul.f32 %v2727, %v2727
        %v3304 = vmul.f32 %v2728, %v2728
        %v3305 = vmul.f32 %v2729, %v2729
        %v3306 = vmul.f32 %v2730, %v2730
        %v3307 = vmul.f32 %v2731, %v2731
        %v3308 = vmul.f32 %v2732, %v2732
        %v3309 = vmul.f32 %v2733, %v2733
        %v3310 = vmul.f32 %v2734, %v2734
        %v3311 = vmul.f32 %v2735, %v2735
        %v3312 = vmul.f32 %v2736, %v2736
        %v3313 = vmul.f32 %v2737, %v2737
        %v3314 = vmul.f32 %v2738, %v2738
        %v3315 = vmul.f32 %v2739, %v2739
        %v3316 = vmul.f32 %v2740, %v2740
        %v3317 = vmul.f32 %v2741, %v2741
        %v3318 = vmul.f32 %v2742, %v2742
        %v3319 = vmul.f32 %v2743, %v2743
        %v3320 = vmul.f32 %v2744, %v2744
        %v3321 = vmul.f32 %v2745, %v2745
        %v3322 = vmul.f32 %v2746, %v2746
        %v3323 = vmul.f32 %v2747, %v2747
        %v3324 = vmul.f32 %v2748, %v2748
        %v3325 = vmul.f32 %v2749, %v2749
        %v3326 = vmul.f32 %v2750, %v2750
        %v3327 = vmul.f32 %v2751, %v2751
        %v3328 = vmul.f32 %v2752, %v2752
        %v3329 = vsub.f32 %v3201, %v3265
        %v3330 = vsub.f32 %v3202, %v3266
        %v3331 = vsub.f32 %v3203, %v3267
        %v3332 = vsub.f32 %v3204, %v3268
        %v3333 = vsub.f32 %v3205, %v3269
        %v3334 = vsub.f32 %v3206, %v3270
        %v3335 = vsub.f32 %v3207, %v3271
        %v3336 = vsub.f32 %v3208, %v3272
        %v3337 = vsub.f32 %v3209, %v3273
        %v3338 = vsub.f32 %v3210, %v3274
        %v3339 = vsub.f32 %v3211, %v3275
        %v3340 = vsub.f32 %v3212, %v3276
        %v3341 = vsub.f32 %v3213, %v3277
        %v3342 = vsub.f32 %v3214, %v3278
        %v3343 = vsub.f32 %v3215, %v3279
        %v3344 = vsub.f32 %v3216, %v3280
        %v3345 = vsub.f32 %v3217, %v3281
        %v3346 = vsub.f32 %v3218, %v3282
        %v3347 = vsub.f32 %v3219, %v3283
        %v3348 = vsub.f32 %v3220, %v3284
        %v3349 = vsub.f32 %v3221, %v3285
        %v3350 = vsub.f32 %v3222, %v3286
        %v3351 = vsub.f32 %v3223, %v3287
        %v3352 = vsub.f32 %v3224, %v3288
        %v3353 = vsub.f32 %v3225, %v3289
        %v3354 = vsub.f32 %v3226, %v3290
        %v3355 = vsub.f32 %v3227, %v3291
        %v3356 = vsub.f32 %v3228, %v3292
        %v3357 = vsub.f32 %v3229, %v3293
        %v3358 = vsub.f32 %v3230, %v3294
        %v3359 = vsub.f32 %v3231, %v3295
        %v3360 = vsub.f32 %v3232, %v3296
        %v3361 = vsub.f32 %v3233, %v3297
        %v3362 = vsub.f32 %v3234, %v3298
        %v3363 = vsub.f32 %v3235, %v3299
        %v3364 = vsub.f32 %v3236, %v3300
        %v3365 = vsub.f32 %v3237, %v3301
        %v3366 = vsub.f32 %v3238, %v3302
        %v3367 = vsub.f32 %v3239, %v3303
        %v3368 = vsub.f32 %v3240, %v3304
        %v3369 = vsub.f32 %v3241, %v3305
        %v3370 = vsub.f32 %v3242, %v3306
        %v3371 = vsub.f32 %v3243, %v3307
        %v3372 = vsub.f32 %v3244, %v3308
        %v3373 = vsub.f32 %v3245, %v3309
        %v3374 = vsub.f32 %v3246, %v3310
        %v3375 = vsub.f32 %v3247, %v3311
        %v3376 = vsub.f32 %v3248, %v3312
        %v3377 = vsub.f32 %v3249, %v3313
        %v3378 = vsub.f32 %v3250, %v3314
        %v3379 = vsub.f32 %v3251, %v3315
        %v3380 = vsub.f32 %v3252, %v3316
        %v3381 = vsub.f32 %v3253, %v3317
        %v3382 = vsub.f32 %v3254, %v3318
        %v3383 = vsub.f32 %v3255, %v3319
        %v3384 = vsub.f32 %v3256, %v3320
        %v3385 = vsub.f32 %v3257, %v3321
        %v3386 = vsub.f32 %v3258, %v3322
        %v3387 = vsub.f32 %v3259, %v3323
        %v3388 = vsub.f32 %v3260, %v3324
        %v3389 = vsub.f32 %v3261, %v3325
        %v3390 = vsub.f32 %v3262, %v3326
        %v3391 = vsub.f32 %v3263, %v3327
        %v3392 = vsub.f32 %v3264, %v3328
        %v3393 = vld [vmem:[%s5] sm:$0xf]
        %v3394 = vadd.f32 %v3329, 1e-05
        %v3395 = vadd.f32 %v3330, 1e-05
        %v3396 = vadd.f32 %v3331, 1e-05
        %v3397 = vadd.f32 %v3332, 1e-05
        %v3398 = vadd.f32 %v3333, 1e-05
        %v3399 = vadd.f32 %v3334, 1e-05
        %v3400 = vadd.f32 %v3335, 1e-05
        %v3401 = vadd.f32 %v3336, 1e-05
        %v3402 = vadd.f32 %v3337, 1e-05
        %v3403 = vadd.f32 %v3338, 1e-05
        %v3404 = vadd.f32 %v3339, 1e-05
        %v3405 = vadd.f32 %v3340, 1e-05
        %v3406 = vadd.f32 %v3341, 1e-05
        %v3407 = vadd.f32 %v3342, 1e-05
        %v3408 = vadd.f32 %v3343, 1e-05
        %v3409 = vadd.f32 %v3344, 1e-05
        %v3410 = vadd.f32 %v3345, 1e-05
        %v3411 = vadd.f32 %v3346, 1e-05
        %v3412 = vadd.f32 %v3347, 1e-05
        %v3413 = vadd.f32 %v3348, 1e-05
        %v3414 = vadd.f32 %v3349, 1e-05
        %v3415 = vadd.f32 %v3350, 1e-05
        %v3416 = vadd.f32 %v3351, 1e-05
        %v3417 = vadd.f32 %v3352, 1e-05
        %v3418 = vadd.f32 %v3353, 1e-05
        %v3419 = vadd.f32 %v3354, 1e-05
        %v3420 = vadd.f32 %v3355, 1e-05
        %v3421 = vadd.f32 %v3356, 1e-05
        %v3422 = vadd.f32 %v3357, 1e-05
        %v3423 = vadd.f32 %v3358, 1e-05
        %v3424 = vadd.f32 %v3359, 1e-05
        %v3425 = vadd.f32 %v3360, 1e-05
        %v3426 = vadd.f32 %v3361, 1e-05
        %v3427 = vadd.f32 %v3362, 1e-05
        %v3428 = vadd.f32 %v3363, 1e-05
        %v3429 = vadd.f32 %v3364, 1e-05
        %v3430 = vadd.f32 %v3365, 1e-05
        %v3431 = vadd.f32 %v3366, 1e-05
        %v3432 = vadd.f32 %v3367, 1e-05
        %v3433 = vadd.f32 %v3368, 1e-05
        %v3434 = vadd.f32 %v3369, 1e-05
        %v3435 = vadd.f32 %v3370, 1e-05
        %v3436 = vadd.f32 %v3371, 1e-05
        %v3437 = vadd.f32 %v3372, 1e-05
        %v3438 = vadd.f32 %v3373, 1e-05
        %v3439 = vadd.f32 %v3374, 1e-05
        %v3440 = vadd.f32 %v3375, 1e-05
        %v3441 = vadd.f32 %v3376, 1e-05
        %v3442 = vadd.f32 %v3377, 1e-05
        %v3443 = vadd.f32 %v3378, 1e-05
        %v3444 = vadd.f32 %v3379, 1e-05
        %v3445 = vadd.f32 %v3380, 1e-05
        %v3446 = vadd.f32 %v3381, 1e-05
        %v3447 = vadd.f32 %v3382, 1e-05
        %v3448 = vadd.f32 %v3383, 1e-05
        %v3449 = vadd.f32 %v3384, 1e-05
        %v3450 = vadd.f32 %v3385, 1e-05
        %v3451 = vadd.f32 %v3386, 1e-05
        %v3452 = vadd.f32 %v3387, 1e-05
        %v3453 = vadd.f32 %v3388, 1e-05
        %v3454 = vadd.f32 %v3389, 1e-05
        %v3455 = vadd.f32 %v3390, 1e-05
        %v3456 = vadd.f32 %v3391, 1e-05
        %v3457 = vadd.f32 %v3392, 1e-05
        %v3458 = vrsqrt.pop %v3394
        %v3459 = vrsqrt.pop %v3395
        %v3460 = vrsqrt.pop %v3396
        %v3461 = vrsqrt.pop %v3397
        %v3462 = vrsqrt.pop %v3398
        %v3463 = vrsqrt.pop %v3399
        %v3464 = vrsqrt.pop %v3400
        %v3465 = vrsqrt.pop %v3401
        %v3466 = vrsqrt.pop %v3402
        %v3467 = vrsqrt.pop %v3403
        %v3468 = vrsqrt.pop %v3404
        %v3469 = vrsqrt.pop %v3405
        %v3470 = vrsqrt.pop %v3406
        %v3471 = vrsqrt.pop %v3407
        %v3472 = vrsqrt.pop %v3408
        %v3473 = vrsqrt.pop %v3409
        %v3474 = vrsqrt.pop %v3410
        %v3475 = vrsqrt.pop %v3411
        %v3476 = vrsqrt.pop %v3412
        %v3477 = vrsqrt.pop %v3413
        %v3478 = vrsqrt.pop %v3414
        %v3479 = vrsqrt.pop %v3415
        %v3480 = vrsqrt.pop %v3416
        %v3481 = vrsqrt.pop %v3417
        %v3482 = vrsqrt.pop %v3418
        %v3483 = vrsqrt.pop %v3419
        %v3484 = vrsqrt.pop %v3420
        %v3485 = vrsqrt.pop %v3421
        %v3486 = vrsqrt.pop %v3422
        %v3487 = vrsqrt.pop %v3423
        %v3488 = vrsqrt.pop %v3424
        %v3489 = vrsqrt.pop %v3425
        %v3490 = vrsqrt.pop %v3426
        %v3491 = vrsqrt.pop %v3427
        %v3492 = vrsqrt.pop %v3428
        %v3493 = vrsqrt.pop %v3429
        %v3494 = vrsqrt.pop %v3430
        %v3495 = vrsqrt.pop %v3431
        %v3496 = vrsqrt.pop %v3432
        %v3497 = vrsqrt.pop %v3433
        %v3498 = vrsqrt.pop %v3434
        %v3499 = vrsqrt.pop %v3435
        %v3500 = vrsqrt.pop %v3436
        %v3501 = vrsqrt.pop %v3437
        %v3502 = vrsqrt.pop %v3438
        %v3503 = vrsqrt.pop %v3439
        %v3504 = vrsqrt.pop %v3440
        %v3505 = vrsqrt.pop %v3441
        %v3506 = vrsqrt.pop %v3442
        %v3507 = vrsqrt.pop %v3443
        %v3508 = vrsqrt.pop %v3444
        %v3509 = vrsqrt.pop %v3445
        %v3510 = vrsqrt.pop %v3446
        %v3511 = vrsqrt.pop %v3447
        %v3512 = vrsqrt.pop %v3448
        %v3513 = vrsqrt.pop %v3449
        %v3514 = vrsqrt.pop %v3450
        %v3515 = vrsqrt.pop %v3451
        %v3516 = vrsqrt.pop %v3452
        %v3517 = vrsqrt.pop %v3453
        %v3518 = vrsqrt.pop %v3454
        %v3519 = vrsqrt.pop %v3455
        %v3520 = vrsqrt.pop %v3456
        %v3521 = vrsqrt.pop %v3457
        %v3586 = vcombine.low %v3458, %v3459
        %v3587 = vcombine.low %v3460, %v3461
        %v3589 = vunpack.c.l.s4 1966171168
        %v3590 = vunpack.c.0.s8 %v3589
        %v3591 = vlaneseq
        %v3592 = vshrl.u32 %v3591, 7
        %v3593 = vsub.s32 %v3590, %v3592
        %v3594 = vrot.slane %v3586, %v3593
        %v3596 = vunpack.c.l.s4 1966171168
        %v3597 = vunpack.c.0.s8 %v3596
        %v3598 = vlaneseq
        %v3599 = vshrl.u32 %v3598, 7
        %v3600 = vsub.s32 %v3597, %v3599
        %v3601 = vrot.slane %v3587, %v3600
        %v3602 = vcombine.low %v3594, %v3601
        %v3604 = vunpack.c.l.s4 1966171168
        %v3605 = vunpack.c.0.s8 %v3604
        %v3606 = vlaneseq
        %v3607 = vshrl.u32 %v3606, 7
        %v3608 = vsub.s32 %v3605, %v3607
        %v3609 = vrot.slane %v3602, %v3608
        %v3610 = vcombine.low %v3462, %v3463
        %v3611 = vcombine.low %v3464, %v3465
        %v3613 = vunpack.c.l.s4 1966171168
        %v3614 = vunpack.c.0.s8 %v3613
        %v3615 = vlaneseq
        %v3616 = vshrl.u32 %v3615, 7
        %v3617 = vsub.s32 %v3614, %v3616
        %v3618 = vrot.slane %v3610, %v3617
        %v3620 = vunpack.c.l.s4 1966171168
        %v3621 = vunpack.c.0.s8 %v3620
        %v3622 = vlaneseq
        %v3623 = vshrl.u32 %v3622, 7
        %v3624 = vsub.s32 %v3621, %v3623
        %v3625 = vrot.slane %v3611, %v3624
        %v3626 = vcombine.low %v3618, %v3625
        %v3628 = vunpack.c.l.s4 1966171168
        %v3629 = vunpack.c.0.s8 %v3628
        %v3630 = vlaneseq
        %v3631 = vshrl.u32 %v3630, 7
        %v3632 = vsub.s32 %v3629, %v3631
        %v3633 = vrot.slane %v3626, %v3632
        %v3634 = vcombine.low %v3466, %v3467
        %v3635 = vcombine.low %v3468, %v3469
        %v3637 = vunpack.c.l.s4 1966171168
        %v3638 = vunpack.c.0.s8 %v3637
        %v3639 = vlaneseq
        %v3640 = vshrl.u32 %v3639, 7
        %v3641 = vsub.s32 %v3638, %v3640
        %v3642 = vrot.slane %v3634, %v3641
        %v3644 = vunpack.c.l.s4 1966171168
        %v3645 = vunpack.c.0.s8 %v3644
        %v3646 = vlaneseq
        %v3647 = vshrl.u32 %v3646, 7
        %v3648 = vsub.s32 %v3645, %v3647
        %v3649 = vrot.slane %v3635, %v3648
        %v3650 = vcombine.low %v3642, %v3649
        %v3652 = vunpack.c.l.s4 1966171168
        %v3653 = vunpack.c.0.s8 %v3652
        %v3654 = vlaneseq
        %v3655 = vshrl.u32 %v3654, 7
        %v3656 = vsub.s32 %v3653, %v3655
        %v3657 = vrot.slane %v3650, %v3656
        %v3658 = vcombine.low %v3470, %v3471
        %v3659 = vcombine.low %v3472, %v3473
        %v3661 = vunpack.c.l.s4 1966171168
        %v3662 = vunpack.c.0.s8 %v3661
        %v3663 = vlaneseq
        %v3664 = vshrl.u32 %v3663, 7
        %v3665 = vsub.s32 %v3662, %v3664
        %v3666 = vrot.slane %v3658, %v3665
        %v3668 = vunpack.c.l.s4 1966171168
        %v3669 = vunpack.c.0.s8 %v3668
        %v3670 = vlaneseq
        %v3671 = vshrl.u32 %v3670, 7
        %v3672 = vsub.s32 %v3669, %v3671
        %v3673 = vrot.slane %v3659, %v3672
        %v3674 = vcombine.low %v3666, %v3673
        %v3676 = vunpack.c.l.s4 1966171168
        %v3677 = vunpack.c.0.s8 %v3676
        %v3678 = vlaneseq
        %v3679 = vshrl.u32 %v3678, 7
        %v3680 = vsub.s32 %v3677, %v3679
        %v3681 = vrot.slane %v3674, %v3680
        %v3682 = vcombine.low %v3474, %v3475
        %v3683 = vcombine.low %v3476, %v3477
        %v3685 = vunpack.c.l.s4 1966171168
        %v3686 = vunpack.c.0.s8 %v3685
        %v3687 = vlaneseq
        %v3688 = vshrl.u32 %v3687, 7
        %v3689 = vsub.s32 %v3686, %v3688
        %v3690 = vrot.slane %v3682, %v3689
        %v3692 = vunpack.c.l.s4 1966171168
        %v3693 = vunpack.c.0.s8 %v3692
        %v3694 = vlaneseq
        %v3695 = vshrl.u32 %v3694, 7
        %v3696 = vsub.s32 %v3693, %v3695
        %v3697 = vrot.slane %v3683, %v3696
        %v3698 = vcombine.low %v3690, %v3697
        %v3700 = vunpack.c.l.s4 1966171168
        %v3701 = vunpack.c.0.s8 %v3700
        %v3702 = vlaneseq
        %v3703 = vshrl.u32 %v3702, 7
        %v3704 = vsub.s32 %v3701, %v3703
        %v3705 = vrot.slane %v3698, %v3704
        %v3706 = vcombine.low %v3478, %v3479
        %v3707 = vcombine.low %v3480, %v3481
        %v3709 = vunpack.c.l.s4 1966171168
        %v3710 = vunpack.c.0.s8 %v3709
        %v3711 = vlaneseq
        %v3712 = vshrl.u32 %v3711, 7
        %v3713 = vsub.s32 %v3710, %v3712
        %v3714 = vrot.slane %v3706, %v3713
        %v3716 = vunpack.c.l.s4 1966171168
        %v3717 = vunpack.c.0.s8 %v3716
        %v3718 = vlaneseq
        %v3719 = vshrl.u32 %v3718, 7
        %v3720 = vsub.s32 %v3717, %v3719
        %v3721 = vrot.slane %v3707, %v3720
        %v3722 = vcombine.low %v3714, %v3721
        %v3724 = vunpack.c.l.s4 1966171168
        %v3725 = vunpack.c.0.s8 %v3724
        %v3726 = vlaneseq
        %v3727 = vshrl.u32 %v3726, 7
        %v3728 = vsub.s32 %v3725, %v3727
        %v3729 = vrot.slane %v3722, %v3728
        %v3730 = vcombine.low %v3482, %v3483
        %v3731 = vcombine.low %v3484, %v3485
        %v3733 = vunpack.c.l.s4 1966171168
        %v3734 = vunpack.c.0.s8 %v3733
        %v3735 = vlaneseq
        %v3736 = vshrl.u32 %v3735, 7
        %v3737 = vsub.s32 %v3734, %v3736
        %v3738 = vrot.slane %v3730, %v3737
        %v3740 = vunpack.c.l.s4 1966171168
        %v3741 = vunpack.c.0.s8 %v3740
        %v3742 = vlaneseq
        %v3743 = vshrl.u32 %v3742, 7
        %v3744 = vsub.s32 %v3741, %v3743
        %v3745 = vrot.slane %v3731, %v3744
        %v3746 = vcombine.low %v3738, %v3745
        %v3748 = vunpack.c.l.s4 1966171168
        %v3749 = vunpack.c.0.s8 %v3748
        %v3750 = vlaneseq
        %v3751 = vshrl.u32 %v3750, 7
        %v3752 = vsub.s32 %v3749, %v3751
        %v3753 = vrot.slane %v3746, %v3752
        %v3754 = vcombine.low %v3486, %v3487
        %v3755 = vcombine.low %v3488, %v3489
        %v3757 = vunpack.c.l.s4 1966171168
        %v3758 = vunpack.c.0.s8 %v3757
        %v3759 = vlaneseq
        %v3760 = vshrl.u32 %v3759, 7
        %v3761 = vsub.s32 %v3758, %v3760
        %v3762 = vrot.slane %v3754, %v3761
        %v3764 = vunpack.c.l.s4 1966171168
        %v3765 = vunpack.c.0.s8 %v3764
        %v3766 = vlaneseq
        %v3767 = vshrl.u32 %v3766, 7
        %v3768 = vsub.s32 %v3765, %v3767
        %v3769 = vrot.slane %v3755, %v3768
        %v3770 = vcombine.low %v3762, %v3769
        %v3772 = vunpack.c.l.s4 1966171168
        %v3773 = vunpack.c.0.s8 %v3772
        %v3774 = vlaneseq
        %v3775 = vshrl.u32 %v3774, 7
        %v3776 = vsub.s32 %v3773, %v3775
        %v3777 = vrot.slane %v3770, %v3776
        %v3778 = vcombine.low %v3490, %v3491
        %v3779 = vcombine.low %v3492, %v3493
        %v3781 = vunpack.c.l.s4 1966171168
        %v3782 = vunpack.c.0.s8 %v3781
        %v3783 = vlaneseq
        %v3784 = vshrl.u32 %v3783, 7
        %v3785 = vsub.s32 %v3782, %v3784
        %v3786 = vrot.slane %v3778, %v3785
        %v3788 = vunpack.c.l.s4 1966171168
        %v3789 = vunpack.c.0.s8 %v3788
        %v3790 = vlaneseq
        %v3791 = vshrl.u32 %v3790, 7
        %v3792 = vsub.s32 %v3789, %v3791
        %v3793 = vrot.slane %v3779, %v3792
        %v3794 = vcombine.low %v3786, %v3793
        %v3796 = vunpack.c.l.s4 1966171168
        %v3797 = vunpack.c.0.s8 %v3796
        %v3798 = vlaneseq
        %v3799 = vshrl.u32 %v3798, 7
        %v3800 = vsub.s32 %v3797, %v3799
        %v3801 = vrot.slane %v3794, %v3800
        %v3802 = vcombine.low %v3494, %v3495
        %v3803 = vcombine.low %v3496, %v3497
        %v3805 = vunpack.c.l.s4 1966171168
        %v3806 = vunpack.c.0.s8 %v3805
        %v3807 = vlaneseq
        %v3808 = vshrl.u32 %v3807, 7
        %v3809 = vsub.s32 %v3806, %v3808
        %v3810 = vrot.slane %v3802, %v3809
        %v3812 = vunpack.c.l.s4 1966171168
        %v3813 = vunpack.c.0.s8 %v3812
        %v3814 = vlaneseq
        %v3815 = vshrl.u32 %v3814, 7
        %v3816 = vsub.s32 %v3813, %v3815
        %v3817 = vrot.slane %v3803, %v3816
        %v3818 = vcombine.low %v3810, %v3817
        %v3820 = vunpack.c.l.s4 1966171168
        %v3821 = vunpack.c.0.s8 %v3820
        %v3822 = vlaneseq
        %v3823 = vshrl.u32 %v3822, 7
        %v3824 = vsub.s32 %v3821, %v3823
        %v3825 = vrot.slane %v3818, %v3824
        %v3826 = vcombine.low %v3498, %v3499
        %v3827 = vcombine.low %v3500, %v3501
        %v3829 = vunpack.c.l.s4 1966171168
        %v3830 = vunpack.c.0.s8 %v3829
        %v3831 = vlaneseq
        %v3832 = vshrl.u32 %v3831, 7
        %v3833 = vsub.s32 %v3830, %v3832
        %v3834 = vrot.slane %v3826, %v3833
        %v3836 = vunpack.c.l.s4 1966171168
        %v3837 = vunpack.c.0.s8 %v3836
        %v3838 = vlaneseq
        %v3839 = vshrl.u32 %v3838, 7
        %v3840 = vsub.s32 %v3837, %v3839
        %v3841 = vrot.slane %v3827, %v3840
        %v3842 = vcombine.low %v3834, %v3841
        %v3844 = vunpack.c.l.s4 1966171168
        %v3845 = vunpack.c.0.s8 %v3844
        %v3846 = vlaneseq
        %v3847 = vshrl.u32 %v3846, 7
        %v3848 = vsub.s32 %v3845, %v3847
        %v3849 = vrot.slane %v3842, %v3848
        %v3850 = vcombine.low %v3502, %v3503
        %v3851 = vcombine.low %v3504, %v3505
        %v3853 = vunpack.c.l.s4 1966171168
        %v3854 = vunpack.c.0.s8 %v3853
        %v3855 = vlaneseq
        %v3856 = vshrl.u32 %v3855, 7
        %v3857 = vsub.s32 %v3854, %v3856
        %v3858 = vrot.slane %v3850, %v3857
        %v3860 = vunpack.c.l.s4 1966171168
        %v3861 = vunpack.c.0.s8 %v3860
        %v3862 = vlaneseq
        %v3863 = vshrl.u32 %v3862, 7
        %v3864 = vsub.s32 %v3861, %v3863
        %v3865 = vrot.slane %v3851, %v3864
        %v3866 = vcombine.low %v3858, %v3865
        %v3868 = vunpack.c.l.s4 1966171168
        %v3869 = vunpack.c.0.s8 %v3868
        %v3870 = vlaneseq
        %v3871 = vshrl.u32 %v3870, 7
        %v3872 = vsub.s32 %v3869, %v3871
        %v3873 = vrot.slane %v3866, %v3872
        %v3874 = vcombine.low %v3506, %v3507
        %v3875 = vcombine.low %v3508, %v3509
        %v3877 = vunpack.c.l.s4 1966171168
        %v3878 = vunpack.c.0.s8 %v3877
        %v3879 = vlaneseq
        %v3880 = vshrl.u32 %v3879, 7
        %v3881 = vsub.s32 %v3878, %v3880
        %v3882 = vrot.slane %v3874, %v3881
        %v3884 = vunpack.c.l.s4 1966171168
        %v3885 = vunpack.c.0.s8 %v3884
        %v3886 = vlaneseq
        %v3887 = vshrl.u32 %v3886, 7
        %v3888 = vsub.s32 %v3885, %v3887
        %v3889 = vrot.slane %v3875, %v3888
        %v3890 = vcombine.low %v3882, %v3889
        %v3892 = vunpack.c.l.s4 1966171168
        %v3893 = vunpack.c.0.s8 %v3892
        %v3894 = vlaneseq
        %v3895 = vshrl.u32 %v3894, 7
        %v3896 = vsub.s32 %v3893, %v3895
        %v3897 = vrot.slane %v3890, %v3896
        %v3898 = vcombine.low %v3510, %v3511
        %v3899 = vcombine.low %v3512, %v3513
        %v3901 = vunpack.c.l.s4 1966171168
        %v3902 = vunpack.c.0.s8 %v3901
        %v3903 = vlaneseq
        %v3904 = vshrl.u32 %v3903, 7
        %v3905 = vsub.s32 %v3902, %v3904
        %v3906 = vrot.slane %v3898, %v3905
        %v3908 = vunpack.c.l.s4 1966171168
        %v3909 = vunpack.c.0.s8 %v3908
        %v3910 = vlaneseq
        %v3911 = vshrl.u32 %v3910, 7
        %v3912 = vsub.s32 %v3909, %v3911
        %v3913 = vrot.slane %v3899, %v3912
        %v3914 = vcombine.low %v3906, %v3913
        %v3916 = vunpack.c.l.s4 1966171168
        %v3917 = vunpack.c.0.s8 %v3916
        %v3918 = vlaneseq
        %v3919 = vshrl.u32 %v3918, 7
        %v3920 = vsub.s32 %v3917, %v3919
        %v3921 = vrot.slane %v3914, %v3920
        %v3922 = vcombine.low %v3514, %v3515
        %v3923 = vcombine.low %v3516, %v3517
        %v3925 = vunpack.c.l.s4 1966171168
        %v3926 = vunpack.c.0.s8 %v3925
        %v3927 = vlaneseq
        %v3928 = vshrl.u32 %v3927, 7
        %v3929 = vsub.s32 %v3926, %v3928
        %v3930 = vrot.slane %v3922, %v3929
        %v3932 = vunpack.c.l.s4 1966171168
        %v3933 = vunpack.c.0.s8 %v3932
        %v3934 = vlaneseq
        %v3935 = vshrl.u32 %v3934, 7
        %v3936 = vsub.s32 %v3933, %v3935
        %v3937 = vrot.slane %v3923, %v3936
        %v3938 = vcombine.low %v3930, %v3937
        %v3940 = vunpack.c.l.s4 1966171168
        %v3941 = vunpack.c.0.s8 %v3940
        %v3942 = vlaneseq
        %v3943 = vshrl.u32 %v3942, 7
        %v3944 = vsub.s32 %v3941, %v3943
        %v3945 = vrot.slane %v3938, %v3944
        %v3946 = vcombine.low %v3518, %v3519
        %v3947 = vcombine.low %v3520, %v3521
        %v3949 = vunpack.c.l.s4 1966171168
        %v3950 = vunpack.c.0.s8 %v3949
        %v3951 = vlaneseq
        %v3952 = vshrl.u32 %v3951, 7
        %v3953 = vsub.s32 %v3950, %v3952
        %v3954 = vrot.slane %v3946, %v3953
        %v3956 = vunpack.c.l.s4 1966171168
        %v3957 = vunpack.c.0.s8 %v3956
        %v3958 = vlaneseq
        %v3959 = vshrl.u32 %v3958, 7
        %v3960 = vsub.s32 %v3957, %v3959
        %v3961 = vrot.slane %v3947, %v3960
        %v3962 = vcombine.low %v3954, %v3961
        %v3964 = vunpack.c.l.s4 1966171168
        %v3965 = vunpack.c.0.s8 %v3964
        %v3966 = vlaneseq
        %v3967 = vshrl.u32 %v3966, 7
        %v3968 = vsub.s32 %v3965, %v3967
        %v3969 = vrot.slane %v3962, %v3968
        %v3986 = vmul.f32 %v3393, %v3609
        %v3987 = vmul.f32 %v3393, %v3633
        %v3988 = vmul.f32 %v3393, %v3657
        %v3989 = vmul.f32 %v3393, %v3681
        %v3990 = vmul.f32 %v3393, %v3705
        %v3991 = vmul.f32 %v3393, %v3729
        %v3992 = vmul.f32 %v3393, %v3753
        %v3993 = vmul.f32 %v3393, %v3777
        %v3994 = vmul.f32 %v3393, %v3801
        %v3995 = vmul.f32 %v3393, %v3825
        %v3996 = vmul.f32 %v3393, %v3849
        %v3997 = vmul.f32 %v3393, %v3873
        %v3998 = vmul.f32 %v3393, %v3897
        %v3999 = vmul.f32 %v3393, %v3921
        %v4000 = vmul.f32 %v3393, %v3945
        %v4001 = vmul.f32 %v3393, %v3969
        %v4002 = vld [vmem:[%s6] sm:$0xf]
        %v4019 = vlaneseq
        %v4020 = vshrl.u32 %v4019, 7
        %v4021 = vsub.s32 0, %v4020
        %v4022 = vrot.slane %v3986, %v4021
        %v4023 = vlaneseq
        %v4024 = vshrl.u32 %v4023, 7
        %v4025 = vsub.s32 1, %v4024
        %v4026 = vrot.slane %v3986, %v4025
        %v4027 = vlaneseq
        %v4028 = vshrl.u32 %v4027, 7
        %v4029 = vsub.s32 2, %v4028
        %v4030 = vrot.slane %v3986, %v4029
        %v4031 = vlaneseq
        %v4032 = vshrl.u32 %v4031, 7
        %v4033 = vsub.s32 3, %v4032
        %v4034 = vrot.slane %v3986, %v4033
        %v4035 = vlaneseq
        %v4036 = vshrl.u32 %v4035, 7
        %v4037 = vsub.s32 0, %v4036
        %v4038 = vrot.slane %v3987, %v4037
        %v4039 = vlaneseq
        %v4040 = vshrl.u32 %v4039, 7
        %v4041 = vsub.s32 1, %v4040
        %v4042 = vrot.slane %v3987, %v4041
        %v4043 = vlaneseq
        %v4044 = vshrl.u32 %v4043, 7
        %v4045 = vsub.s32 2, %v4044
        %v4046 = vrot.slane %v3987, %v4045
        %v4047 = vlaneseq
        %v4048 = vshrl.u32 %v4047, 7
        %v4049 = vsub.s32 3, %v4048
        %v4050 = vrot.slane %v3987, %v4049
        %v4051 = vlaneseq
        %v4052 = vshrl.u32 %v4051, 7
        %v4053 = vsub.s32 0, %v4052
        %v4054 = vrot.slane %v3988, %v4053
        %v4055 = vlaneseq
        %v4056 = vshrl.u32 %v4055, 7
        %v4057 = vsub.s32 1, %v4056
        %v4058 = vrot.slane %v3988, %v4057
        %v4059 = vlaneseq
        %v4060 = vshrl.u32 %v4059, 7
        %v4061 = vsub.s32 2, %v4060
        %v4062 = vrot.slane %v3988, %v4061
        %v4063 = vlaneseq
        %v4064 = vshrl.u32 %v4063, 7
        %v4065 = vsub.s32 3, %v4064
        %v4066 = vrot.slane %v3988, %v4065
        %v4067 = vlaneseq
        %v4068 = vshrl.u32 %v4067, 7
        %v4069 = vsub.s32 0, %v4068
        %v4070 = vrot.slane %v3989, %v4069
        %v4071 = vlaneseq
        %v4072 = vshrl.u32 %v4071, 7
        %v4073 = vsub.s32 1, %v4072
        %v4074 = vrot.slane %v3989, %v4073
        %v4075 = vlaneseq
        %v4076 = vshrl.u32 %v4075, 7
        %v4077 = vsub.s32 2, %v4076
        %v4078 = vrot.slane %v3989, %v4077
        %v4079 = vlaneseq
        %v4080 = vshrl.u32 %v4079, 7
        %v4081 = vsub.s32 3, %v4080
        %v4082 = vrot.slane %v3989, %v4081
        %v4083 = vlaneseq
        %v4084 = vshrl.u32 %v4083, 7
        %v4085 = vsub.s32 0, %v4084
        %v4086 = vrot.slane %v3990, %v4085
        %v4087 = vlaneseq
        %v4088 = vshrl.u32 %v4087, 7
        %v4089 = vsub.s32 1, %v4088
        %v4090 = vrot.slane %v3990, %v4089
        %v4091 = vlaneseq
        %v4092 = vshrl.u32 %v4091, 7
        %v4093 = vsub.s32 2, %v4092
        %v4094 = vrot.slane %v3990, %v4093
        %v4095 = vlaneseq
        %v4096 = vshrl.u32 %v4095, 7
        %v4097 = vsub.s32 3, %v4096
        %v4098 = vrot.slane %v3990, %v4097
        %v4099 = vlaneseq
        %v4100 = vshrl.u32 %v4099, 7
        %v4101 = vsub.s32 0, %v4100
        %v4102 = vrot.slane %v3991, %v4101
        %v4103 = vlaneseq
        %v4104 = vshrl.u32 %v4103, 7
        %v4105 = vsub.s32 1, %v4104
        %v4106 = vrot.slane %v3991, %v4105
        %v4107 = vlaneseq
        %v4108 = vshrl.u32 %v4107, 7
        %v4109 = vsub.s32 2, %v4108
        %v4110 = vrot.slane %v3991, %v4109
        %v4111 = vlaneseq
        %v4112 = vshrl.u32 %v4111, 7
        %v4113 = vsub.s32 3, %v4112
        %v4114 = vrot.slane %v3991, %v4113
        %v4115 = vlaneseq
        %v4116 = vshrl.u32 %v4115, 7
        %v4117 = vsub.s32 0, %v4116
        %v4118 = vrot.slane %v3992, %v4117
        %v4119 = vlaneseq
        %v4120 = vshrl.u32 %v4119, 7
        %v4121 = vsub.s32 1, %v4120
        %v4122 = vrot.slane %v3992, %v4121
        %v4123 = vlaneseq
        %v4124 = vshrl.u32 %v4123, 7
        %v4125 = vsub.s32 2, %v4124
        %v4126 = vrot.slane %v3992, %v4125
        %v4127 = vlaneseq
        %v4128 = vshrl.u32 %v4127, 7
        %v4129 = vsub.s32 3, %v4128
        %v4130 = vrot.slane %v3992, %v4129
        %v4131 = vlaneseq
        %v4132 = vshrl.u32 %v4131, 7
        %v4133 = vsub.s32 0, %v4132
        %v4134 = vrot.slane %v3993, %v4133
        %v4135 = vlaneseq
        %v4136 = vshrl.u32 %v4135, 7
        %v4137 = vsub.s32 1, %v4136
        %v4138 = vrot.slane %v3993, %v4137
        %v4139 = vlaneseq
        %v4140 = vshrl.u32 %v4139, 7
        %v4141 = vsub.s32 2, %v4140
        %v4142 = vrot.slane %v3993, %v4141
        %v4143 = vlaneseq
        %v4144 = vshrl.u32 %v4143, 7
        %v4145 = vsub.s32 3, %v4144
        %v4146 = vrot.slane %v3993, %v4145
        %v4147 = vlaneseq
        %v4148 = vshrl.u32 %v4147, 7
        %v4149 = vsub.s32 0, %v4148
        %v4150 = vrot.slane %v3994, %v4149
        %v4151 = vlaneseq
        %v4152 = vshrl.u32 %v4151, 7
        %v4153 = vsub.s32 1, %v4152
        %v4154 = vrot.slane %v3994, %v4153
        %v4155 = vlaneseq
        %v4156 = vshrl.u32 %v4155, 7
        %v4157 = vsub.s32 2, %v4156
        %v4158 = vrot.slane %v3994, %v4157
        %v4159 = vlaneseq
        %v4160 = vshrl.u32 %v4159, 7
        %v4161 = vsub.s32 3, %v4160
        %v4162 = vrot.slane %v3994, %v4161
        %v4163 = vlaneseq
        %v4164 = vshrl.u32 %v4163, 7
        %v4165 = vsub.s32 0, %v4164
        %v4166 = vrot.slane %v3995, %v4165
        %v4167 = vlaneseq
        %v4168 = vshrl.u32 %v4167, 7
        %v4169 = vsub.s32 1, %v4168
        %v4170 = vrot.slane %v3995, %v4169
        %v4171 = vlaneseq
        %v4172 = vshrl.u32 %v4171, 7
        %v4173 = vsub.s32 2, %v4172
        %v4174 = vrot.slane %v3995, %v4173
        %v4175 = vlaneseq
        %v4176 = vshrl.u32 %v4175, 7
        %v4177 = vsub.s32 3, %v4176
        %v4178 = vrot.slane %v3995, %v4177
        %v4179 = vlaneseq
        %v4180 = vshrl.u32 %v4179, 7
        %v4181 = vsub.s32 0, %v4180
        %v4182 = vrot.slane %v3996, %v4181
        %v4183 = vlaneseq
        %v4184 = vshrl.u32 %v4183, 7
        %v4185 = vsub.s32 1, %v4184
        %v4186 = vrot.slane %v3996, %v4185
        %v4187 = vlaneseq
        %v4188 = vshrl.u32 %v4187, 7
        %v4189 = vsub.s32 2, %v4188
        %v4190 = vrot.slane %v3996, %v4189
        %v4191 = vlaneseq
        %v4192 = vshrl.u32 %v4191, 7
        %v4193 = vsub.s32 3, %v4192
        %v4194 = vrot.slane %v3996, %v4193
        %v4195 = vlaneseq
        %v4196 = vshrl.u32 %v4195, 7
        %v4197 = vsub.s32 0, %v4196
        %v4198 = vrot.slane %v3997, %v4197
        %v4199 = vlaneseq
        %v4200 = vshrl.u32 %v4199, 7
        %v4201 = vsub.s32 1, %v4200
        %v4202 = vrot.slane %v3997, %v4201
        %v4203 = vlaneseq
        %v4204 = vshrl.u32 %v4203, 7
        %v4205 = vsub.s32 2, %v4204
        %v4206 = vrot.slane %v3997, %v4205
        %v4207 = vlaneseq
        %v4208 = vshrl.u32 %v4207, 7
        %v4209 = vsub.s32 3, %v4208
        %v4210 = vrot.slane %v3997, %v4209
        %v4211 = vlaneseq
        %v4212 = vshrl.u32 %v4211, 7
        %v4213 = vsub.s32 0, %v4212
        %v4214 = vrot.slane %v3998, %v4213
        %v4215 = vlaneseq
        %v4216 = vshrl.u32 %v4215, 7
        %v4217 = vsub.s32 1, %v4216
        %v4218 = vrot.slane %v3998, %v4217
        %v4219 = vlaneseq
        %v4220 = vshrl.u32 %v4219, 7
        %v4221 = vsub.s32 2, %v4220
        %v4222 = vrot.slane %v3998, %v4221
        %v4223 = vlaneseq
        %v4224 = vshrl.u32 %v4223, 7
        %v4225 = vsub.s32 3, %v4224
        %v4226 = vrot.slane %v3998, %v4225
        %v4227 = vlaneseq
        %v4228 = vshrl.u32 %v4227, 7
        %v4229 = vsub.s32 0, %v4228
        %v4230 = vrot.slane %v3999, %v4229
        %v4231 = vlaneseq
        %v4232 = vshrl.u32 %v4231, 7
        %v4233 = vsub.s32 1, %v4232
        %v4234 = vrot.slane %v3999, %v4233
        %v4235 = vlaneseq
        %v4236 = vshrl.u32 %v4235, 7
        %v4237 = vsub.s32 2, %v4236
        %v4238 = vrot.slane %v3999, %v4237
        %v4239 = vlaneseq
        %v4240 = vshrl.u32 %v4239, 7
        %v4241 = vsub.s32 3, %v4240
        %v4242 = vrot.slane %v3999, %v4241
        %v4243 = vlaneseq
        %v4244 = vshrl.u32 %v4243, 7
        %v4245 = vsub.s32 0, %v4244
        %v4246 = vrot.slane %v4000, %v4245
        %v4247 = vlaneseq
        %v4248 = vshrl.u32 %v4247, 7
        %v4249 = vsub.s32 1, %v4248
        %v4250 = vrot.slane %v4000, %v4249
        %v4251 = vlaneseq
        %v4252 = vshrl.u32 %v4251, 7
        %v4253 = vsub.s32 2, %v4252
        %v4254 = vrot.slane %v4000, %v4253
        %v4255 = vlaneseq
        %v4256 = vshrl.u32 %v4255, 7
        %v4257 = vsub.s32 3, %v4256
        %v4258 = vrot.slane %v4000, %v4257
        %v4259 = vlaneseq
        %v4260 = vshrl.u32 %v4259, 7
        %v4261 = vsub.s32 0, %v4260
        %v4262 = vrot.slane %v4001, %v4261
        %v4263 = vlaneseq
        %v4264 = vshrl.u32 %v4263, 7
        %v4265 = vsub.s32 1, %v4264
        %v4266 = vrot.slane %v4001, %v4265
        %v4267 = vlaneseq
        %v4268 = vshrl.u32 %v4267, 7
        %v4269 = vsub.s32 2, %v4268
        %v4270 = vrot.slane %v4001, %v4269
        %v4271 = vlaneseq
        %v4272 = vshrl.u32 %v4271, 7
        %v4273 = vsub.s32 3, %v4272
        %v4274 = vrot.slane %v4001, %v4273
        %v4339 = vmul.f32 %v2689, %v4022
        %v4340 = vmul.f32 %v2690, %v4026
        %v4341 = vmul.f32 %v2691, %v4030
        %v4342 = vmul.f32 %v2692, %v4034
        %v4343 = vmul.f32 %v2693, %v4038
        %v4344 = vmul.f32 %v2694, %v4042
        %v4345 = vmul.f32 %v2695, %v4046
        %v4346 = vmul.f32 %v2696, %v4050
        %v4347 = vmul.f32 %v2697, %v4054
        %v4348 = vmul.f32 %v2698, %v4058
        %v4349 = vmul.f32 %v2699, %v4062
        %v4350 = vmul.f32 %v2700, %v4066
        %v4351 = vmul.f32 %v2701, %v4070
        %v4352 = vmul.f32 %v2702, %v4074
        %v4353 = vmul.f32 %v2703, %v4078
        %v4354 = vmul.f32 %v2704, %v4082
        %v4355 = vmul.f32 %v2705, %v4086
        %v4356 = vmul.f32 %v2706, %v4090
        %v4357 = vmul.f32 %v2707, %v4094
        %v4358 = vmul.f32 %v2708, %v4098
        %v4359 = vmul.f32 %v2709, %v4102
        %v4360 = vmul.f32 %v2710, %v4106
        %v4361 = vmul.f32 %v2711, %v4110
        %v4362 = vmul.f32 %v2712, %v4114
        %v4363 = vmul.f32 %v2713, %v4118
        %v4364 = vmul.f32 %v2714, %v4122
        %v4365 = vmul.f32 %v2715, %v4126
        %v4366 = vmul.f32 %v2716, %v4130
        %v4367 = vmul.f32 %v2717, %v4134
        %v4368 = vmul.f32 %v2718, %v4138
        %v4369 = vmul.f32 %v2719, %v4142
        %v4370 = vmul.f32 %v2720, %v4146
        %v4371 = vmul.f32 %v2721, %v4150
        %v4372 = vmul.f32 %v2722, %v4154
        %v4373 = vmul.f32 %v2723, %v4158
        %v4374 = vmul.f32 %v2724, %v4162
        %v4375 = vmul.f32 %v2725, %v4166
        %v4376 = vmul.f32 %v2726, %v4170
        %v4377 = vmul.f32 %v2727, %v4174
        %v4378 = vmul.f32 %v2728, %v4178
        %v4379 = vmul.f32 %v2729, %v4182
        %v4380 = vmul.f32 %v2730, %v4186
        %v4381 = vmul.f32 %v2731, %v4190
        %v4382 = vmul.f32 %v2732, %v4194
        %v4383 = vmul.f32 %v2733, %v4198
        %v4384 = vmul.f32 %v2734, %v4202
        %v4385 = vmul.f32 %v2735, %v4206
        %v4386 = vmul.f32 %v2736, %v4210
        %v4387 = vmul.f32 %v2737, %v4214
        %v4388 = vmul.f32 %v2738, %v4218
        %v4389 = vmul.f32 %v2739, %v4222
        %v4390 = vmul.f32 %v2740, %v4226
        %v4391 = vmul.f32 %v2741, %v4230
        %v4392 = vmul.f32 %v2742, %v4234
        %v4393 = vmul.f32 %v2743, %v4238
        %v4394 = vmul.f32 %v2744, %v4242
        %v4395 = vmul.f32 %v2745, %v4246
        %v4396 = vmul.f32 %v2746, %v4250
        %v4397 = vmul.f32 %v2747, %v4254
        %v4398 = vmul.f32 %v2748, %v4258
        %v4399 = vmul.f32 %v2749, %v4262
        %v4400 = vmul.f32 %v2750, %v4266
        %v4401 = vmul.f32 %v2751, %v4270
        %v4402 = vmul.f32 %v2752, %v4274
        %v4467 = vcombine.low %v4339, %v4340
        %v4468 = vcombine.low %v4341, %v4342
        %v4470 = vunpack.c.l.s4 1966171168
        %v4471 = vunpack.c.0.s8 %v4470
        %v4472 = vlaneseq
        %v4473 = vshrl.u32 %v4472, 7
        %v4474 = vsub.s32 %v4471, %v4473
        %v4475 = vrot.slane %v4467, %v4474
        %v4477 = vunpack.c.l.s4 1966171168
        %v4478 = vunpack.c.0.s8 %v4477
        %v4479 = vlaneseq
        %v4480 = vshrl.u32 %v4479, 7
        %v4481 = vsub.s32 %v4478, %v4480
        %v4482 = vrot.slane %v4468, %v4481
        %v4483 = vcombine.low %v4475, %v4482
        %v4485 = vunpack.c.l.s4 1966171168
        %v4486 = vunpack.c.0.s8 %v4485
        %v4487 = vlaneseq
        %v4488 = vshrl.u32 %v4487, 7
        %v4489 = vsub.s32 %v4486, %v4488
        %v4490 = vrot.slane %v4483, %v4489
        %v4491 = vcombine.low %v4343, %v4344
        %v4492 = vcombine.low %v4345, %v4346
        %v4494 = vunpack.c.l.s4 1966171168
        %v4495 = vunpack.c.0.s8 %v4494
        %v4496 = vlaneseq
        %v4497 = vshrl.u32 %v4496, 7
        %v4498 = vsub.s32 %v4495, %v4497
        %v4499 = vrot.slane %v4491, %v4498
        %v4501 = vunpack.c.l.s4 1966171168
        %v4502 = vunpack.c.0.s8 %v4501
        %v4503 = vlaneseq
        %v4504 = vshrl.u32 %v4503, 7
        %v4505 = vsub.s32 %v4502, %v4504
        %v4506 = vrot.slane %v4492, %v4505
        %v4507 = vcombine.low %v4499, %v4506
        %v4509 = vunpack.c.l.s4 1966171168
        %v4510 = vunpack.c.0.s8 %v4509
        %v4511 = vlaneseq
        %v4512 = vshrl.u32 %v4511, 7
        %v4513 = vsub.s32 %v4510, %v4512
        %v4514 = vrot.slane %v4507, %v4513
        %v4515 = vcombine.low %v4347, %v4348
        %v4516 = vcombine.low %v4349, %v4350
        %v4518 = vunpack.c.l.s4 1966171168
        %v4519 = vunpack.c.0.s8 %v4518
        %v4520 = vlaneseq
        %v4521 = vshrl.u32 %v4520, 7
        %v4522 = vsub.s32 %v4519, %v4521
        %v4523 = vrot.slane %v4515, %v4522
        %v4525 = vunpack.c.l.s4 1966171168
        %v4526 = vunpack.c.0.s8 %v4525
        %v4527 = vlaneseq
        %v4528 = vshrl.u32 %v4527, 7
        %v4529 = vsub.s32 %v4526, %v4528
        %v4530 = vrot.slane %v4516, %v4529
        %v4531 = vcombine.low %v4523, %v4530
        %v4533 = vunpack.c.l.s4 1966171168
        %v4534 = vunpack.c.0.s8 %v4533
        %v4535 = vlaneseq
        %v4536 = vshrl.u32 %v4535, 7
        %v4537 = vsub.s32 %v4534, %v4536
        %v4538 = vrot.slane %v4531, %v4537
        %v4539 = vcombine.low %v4351, %v4352
        %v4540 = vcombine.low %v4353, %v4354
        %v4542 = vunpack.c.l.s4 1966171168
        %v4543 = vunpack.c.0.s8 %v4542
        %v4544 = vlaneseq
        %v4545 = vshrl.u32 %v4544, 7
        %v4546 = vsub.s32 %v4543, %v4545
        %v4547 = vrot.slane %v4539, %v4546
        %v4549 = vunpack.c.l.s4 1966171168
        %v4550 = vunpack.c.0.s8 %v4549
        %v4551 = vlaneseq
        %v4552 = vshrl.u32 %v4551, 7
        %v4553 = vsub.s32 %v4550, %v4552
        %v4554 = vrot.slane %v4540, %v4553
        %v4555 = vcombine.low %v4547, %v4554
        %v4557 = vunpack.c.l.s4 1966171168
        %v4558 = vunpack.c.0.s8 %v4557
        %v4559 = vlaneseq
        %v4560 = vshrl.u32 %v4559, 7
        %v4561 = vsub.s32 %v4558, %v4560
        %v4562 = vrot.slane %v4555, %v4561
        %v4563 = vcombine.low %v4355, %v4356
        %v4564 = vcombine.low %v4357, %v4358
        %v4566 = vunpack.c.l.s4 1966171168
        %v4567 = vunpack.c.0.s8 %v4566
        %v4568 = vlaneseq
        %v4569 = vshrl.u32 %v4568, 7
        %v4570 = vsub.s32 %v4567, %v4569
        %v4571 = vrot.slane %v4563, %v4570
        %v4573 = vunpack.c.l.s4 1966171168
        %v4574 = vunpack.c.0.s8 %v4573
        %v4575 = vlaneseq
        %v4576 = vshrl.u32 %v4575, 7
        %v4577 = vsub.s32 %v4574, %v4576
        %v4578 = vrot.slane %v4564, %v4577
        %v4579 = vcombine.low %v4571, %v4578
        %v4581 = vunpack.c.l.s4 1966171168
        %v4582 = vunpack.c.0.s8 %v4581
        %v4583 = vlaneseq
        %v4584 = vshrl.u32 %v4583, 7
        %v4585 = vsub.s32 %v4582, %v4584
        %v4586 = vrot.slane %v4579, %v4585
        %v4587 = vcombine.low %v4359, %v4360
        %v4588 = vcombine.low %v4361, %v4362
        %v4590 = vunpack.c.l.s4 1966171168
        %v4591 = vunpack.c.0.s8 %v4590
        %v4592 = vlaneseq
        %v4593 = vshrl.u32 %v4592, 7
        %v4594 = vsub.s32 %v4591, %v4593
        %v4595 = vrot.slane %v4587, %v4594
        %v4597 = vunpack.c.l.s4 1966171168
        %v4598 = vunpack.c.0.s8 %v4597
        %v4599 = vlaneseq
        %v4600 = vshrl.u32 %v4599, 7
        %v4601 = vsub.s32 %v4598, %v4600
        %v4602 = vrot.slane %v4588, %v4601
        %v4603 = vcombine.low %v4595, %v4602
        %v4605 = vunpack.c.l.s4 1966171168
        %v4606 = vunpack.c.0.s8 %v4605
        %v4607 = vlaneseq
        %v4608 = vshrl.u32 %v4607, 7
        %v4609 = vsub.s32 %v4606, %v4608
        %v4610 = vrot.slane %v4603, %v4609
        %v4611 = vcombine.low %v4363, %v4364
        %v4612 = vcombine.low %v4365, %v4366
        %v4614 = vunpack.c.l.s4 1966171168
        %v4615 = vunpack.c.0.s8 %v4614
        %v4616 = vlaneseq
        %v4617 = vshrl.u32 %v4616, 7
        %v4618 = vsub.s32 %v4615, %v4617
        %v4619 = vrot.slane %v4611, %v4618
        %v4621 = vunpack.c.l.s4 1966171168
        %v4622 = vunpack.c.0.s8 %v4621
        %v4623 = vlaneseq
        %v4624 = vshrl.u32 %v4623, 7
        %v4625 = vsub.s32 %v4622, %v4624
        %v4626 = vrot.slane %v4612, %v4625
        %v4627 = vcombine.low %v4619, %v4626
        %v4629 = vunpack.c.l.s4 1966171168
        %v4630 = vunpack.c.0.s8 %v4629
        %v4631 = vlaneseq
        %v4632 = vshrl.u32 %v4631, 7
        %v4633 = vsub.s32 %v4630, %v4632
        %v4634 = vrot.slane %v4627, %v4633
        %v4635 = vcombine.low %v4367, %v4368
        %v4636 = vcombine.low %v4369, %v4370
        %v4638 = vunpack.c.l.s4 1966171168
        %v4639 = vunpack.c.0.s8 %v4638
        %v4640 = vlaneseq
        %v4641 = vshrl.u32 %v4640, 7
        %v4642 = vsub.s32 %v4639, %v4641
        %v4643 = vrot.slane %v4635, %v4642
        %v4645 = vunpack.c.l.s4 1966171168
        %v4646 = vunpack.c.0.s8 %v4645
        %v4647 = vlaneseq
        %v4648 = vshrl.u32 %v4647, 7
        %v4649 = vsub.s32 %v4646, %v4648
        %v4650 = vrot.slane %v4636, %v4649
        %v4651 = vcombine.low %v4643, %v4650
        %v4653 = vunpack.c.l.s4 1966171168
        %v4654 = vunpack.c.0.s8 %v4653
        %v4655 = vlaneseq
        %v4656 = vshrl.u32 %v4655, 7
        %v4657 = vsub.s32 %v4654, %v4656
        %v4658 = vrot.slane %v4651, %v4657
        %v4659 = vcombine.low %v4371, %v4372
        %v4660 = vcombine.low %v4373, %v4374
        %v4662 = vunpack.c.l.s4 1966171168
        %v4663 = vunpack.c.0.s8 %v4662
        %v4664 = vlaneseq
        %v4665 = vshrl.u32 %v4664, 7
        %v4666 = vsub.s32 %v4663, %v4665
        %v4667 = vrot.slane %v4659, %v4666
        %v4669 = vunpack.c.l.s4 1966171168
        %v4670 = vunpack.c.0.s8 %v4669
        %v4671 = vlaneseq
        %v4672 = vshrl.u32 %v4671, 7
        %v4673 = vsub.s32 %v4670, %v4672
        %v4674 = vrot.slane %v4660, %v4673
        %v4675 = vcombine.low %v4667, %v4674
        %v4677 = vunpack.c.l.s4 1966171168
        %v4678 = vunpack.c.0.s8 %v4677
        %v4679 = vlaneseq
        %v4680 = vshrl.u32 %v4679, 7
        %v4681 = vsub.s32 %v4678, %v4680
        %v4682 = vrot.slane %v4675, %v4681
        %v4683 = vcombine.low %v4375, %v4376
        %v4684 = vcombine.low %v4377, %v4378
        %v4686 = vunpack.c.l.s4 1966171168
        %v4687 = vunpack.c.0.s8 %v4686
        %v4688 = vlaneseq
        %v4689 = vshrl.u32 %v4688, 7
        %v4690 = vsub.s32 %v4687, %v4689
        %v4691 = vrot.slane %v4683, %v4690
        %v4693 = vunpack.c.l.s4 1966171168
        %v4694 = vunpack.c.0.s8 %v4693
        %v4695 = vlaneseq
        %v4696 = vshrl.u32 %v4695, 7
        %v4697 = vsub.s32 %v4694, %v4696
        %v4698 = vrot.slane %v4684, %v4697
        %v4699 = vcombine.low %v4691, %v4698
        %v4701 = vunpack.c.l.s4 1966171168
        %v4702 = vunpack.c.0.s8 %v4701
        %v4703 = vlaneseq
        %v4704 = vshrl.u32 %v4703, 7
        %v4705 = vsub.s32 %v4702, %v4704
        %v4706 = vrot.slane %v4699, %v4705
        %v4707 = vcombine.low %v4379, %v4380
        %v4708 = vcombine.low %v4381, %v4382
        %v4710 = vunpack.c.l.s4 1966171168
        %v4711 = vunpack.c.0.s8 %v4710
        %v4712 = vlaneseq
        %v4713 = vshrl.u32 %v4712, 7
        %v4714 = vsub.s32 %v4711, %v4713
        %v4715 = vrot.slane %v4707, %v4714
        %v4717 = vunpack.c.l.s4 1966171168
        %v4718 = vunpack.c.0.s8 %v4717
        %v4719 = vlaneseq
        %v4720 = vshrl.u32 %v4719, 7
        %v4721 = vsub.s32 %v4718, %v4720
        %v4722 = vrot.slane %v4708, %v4721
        %v4723 = vcombine.low %v4715, %v4722
        %v4725 = vunpack.c.l.s4 1966171168
        %v4726 = vunpack.c.0.s8 %v4725
        %v4727 = vlaneseq
        %v4728 = vshrl.u32 %v4727, 7
        %v4729 = vsub.s32 %v4726, %v4728
        %v4730 = vrot.slane %v4723, %v4729
        %v4731 = vcombine.low %v4383, %v4384
        %v4732 = vcombine.low %v4385, %v4386
        %v4734 = vunpack.c.l.s4 1966171168
        %v4735 = vunpack.c.0.s8 %v4734
        %v4736 = vlaneseq
        %v4737 = vshrl.u32 %v4736, 7
        %v4738 = vsub.s32 %v4735, %v4737
        %v4739 = vrot.slane %v4731, %v4738
        %v4741 = vunpack.c.l.s4 1966171168
        %v4742 = vunpack.c.0.s8 %v4741
        %v4743 = vlaneseq
        %v4744 = vshrl.u32 %v4743, 7
        %v4745 = vsub.s32 %v4742, %v4744
        %v4746 = vrot.slane %v4732, %v4745
        %v4747 = vcombine.low %v4739, %v4746
        %v4749 = vunpack.c.l.s4 1966171168
        %v4750 = vunpack.c.0.s8 %v4749
        %v4751 = vlaneseq
        %v4752 = vshrl.u32 %v4751, 7
        %v4753 = vsub.s32 %v4750, %v4752
        %v4754 = vrot.slane %v4747, %v4753
        %v4755 = vcombine.low %v4387, %v4388
        %v4756 = vcombine.low %v4389, %v4390
        %v4758 = vunpack.c.l.s4 1966171168
        %v4759 = vunpack.c.0.s8 %v4758
        %v4760 = vlaneseq
        %v4761 = vshrl.u32 %v4760, 7
        %v4762 = vsub.s32 %v4759, %v4761
        %v4763 = vrot.slane %v4755, %v4762
        %v4765 = vunpack.c.l.s4 1966171168
        %v4766 = vunpack.c.0.s8 %v4765
        %v4767 = vlaneseq
        %v4768 = vshrl.u32 %v4767, 7
        %v4769 = vsub.s32 %v4766, %v4768
        %v4770 = vrot.slane %v4756, %v4769
        %v4771 = vcombine.low %v4763, %v4770
        %v4773 = vunpack.c.l.s4 1966171168
        %v4774 = vunpack.c.0.s8 %v4773
        %v4775 = vlaneseq
        %v4776 = vshrl.u32 %v4775, 7
        %v4777 = vsub.s32 %v4774, %v4776
        %v4778 = vrot.slane %v4771, %v4777
        %v4779 = vcombine.low %v4391, %v4392
        %v4780 = vcombine.low %v4393, %v4394
        %v4782 = vunpack.c.l.s4 1966171168
        %v4783 = vunpack.c.0.s8 %v4782
        %v4784 = vlaneseq
        %v4785 = vshrl.u32 %v4784, 7
        %v4786 = vsub.s32 %v4783, %v4785
        %v4787 = vrot.slane %v4779, %v4786
        %v4789 = vunpack.c.l.s4 1966171168
        %v4790 = vunpack.c.0.s8 %v4789
        %v4791 = vlaneseq
        %v4792 = vshrl.u32 %v4791, 7
        %v4793 = vsub.s32 %v4790, %v4792
        %v4794 = vrot.slane %v4780, %v4793
        %v4795 = vcombine.low %v4787, %v4794
        %v4797 = vunpack.c.l.s4 1966171168
        %v4798 = vunpack.c.0.s8 %v4797
        %v4799 = vlaneseq
        %v4800 = vshrl.u32 %v4799, 7
        %v4801 = vsub.s32 %v4798, %v4800
        %v4802 = vrot.slane %v4795, %v4801
        %v4803 = vcombine.low %v4395, %v4396
        %v4804 = vcombine.low %v4397, %v4398
        %v4806 = vunpack.c.l.s4 1966171168
        %v4807 = vunpack.c.0.s8 %v4806
        %v4808 = vlaneseq
        %v4809 = vshrl.u32 %v4808, 7
        %v4810 = vsub.s32 %v4807, %v4809
        %v4811 = vrot.slane %v4803, %v4810
        %v4813 = vunpack.c.l.s4 1966171168
        %v4814 = vunpack.c.0.s8 %v4813
        %v4815 = vlaneseq
        %v4816 = vshrl.u32 %v4815, 7
        %v4817 = vsub.s32 %v4814, %v4816
        %v4818 = vrot.slane %v4804, %v4817
        %v4819 = vcombine.low %v4811, %v4818
        %v4821 = vunpack.c.l.s4 1966171168
        %v4822 = vunpack.c.0.s8 %v4821
        %v4823 = vlaneseq
        %v4824 = vshrl.u32 %v4823, 7
        %v4825 = vsub.s32 %v4822, %v4824
        %v4826 = vrot.slane %v4819, %v4825
        %v4827 = vcombine.low %v4399, %v4400
        %v4828 = vcombine.low %v4401, %v4402
        %v4830 = vunpack.c.l.s4 1966171168
        %v4831 = vunpack.c.0.s8 %v4830
        %v4832 = vlaneseq
        %v4833 = vshrl.u32 %v4832, 7
        %v4834 = vsub.s32 %v4831, %v4833
        %v4835 = vrot.slane %v4827, %v4834
        %v4837 = vunpack.c.l.s4 1966171168
        %v4838 = vunpack.c.0.s8 %v4837
        %v4839 = vlaneseq
        %v4840 = vshrl.u32 %v4839, 7
        %v4841 = vsub.s32 %v4838, %v4840
        %v4842 = vrot.slane %v4828, %v4841
        %v4843 = vcombine.low %v4835, %v4842
        %v4845 = vunpack.c.l.s4 1966171168
        %v4846 = vunpack.c.0.s8 %v4845
        %v4847 = vlaneseq
        %v4848 = vshrl.u32 %v4847, 7
        %v4849 = vsub.s32 %v4846, %v4848
        %v4850 = vrot.slane %v4843, %v4849
        %v4867 = vsub.f32 %v4002, %v4490
        %v4868 = vsub.f32 %v4002, %v4514
        %v4869 = vsub.f32 %v4002, %v4538
        %v4870 = vsub.f32 %v4002, %v4562
        %v4871 = vsub.f32 %v4002, %v4586
        %v4872 = vsub.f32 %v4002, %v4610
        %v4873 = vsub.f32 %v4002, %v4634
        %v4874 = vsub.f32 %v4002, %v4658
        %v4875 = vsub.f32 %v4002, %v4682
        %v4876 = vsub.f32 %v4002, %v4706
        %v4877 = vsub.f32 %v4002, %v4730
        %v4878 = vsub.f32 %v4002, %v4754
        %v4879 = vsub.f32 %v4002, %v4778
        %v4880 = vsub.f32 %v4002, %v4802
        %v4881 = vsub.f32 %v4002, %v4826
        %v4882 = vsub.f32 %v4002, %v4850
        %v4883 = vmul.f32 %v2000, %v4022
        %v4884 = vmul.f32 %v2002, %v4026
        %v4885 = vmul.f32 %v2226, %v4030
        %v4886 = vmul.f32 %v2228, %v4034
        %v4887 = vmul.f32 %v2004, %v4038
        %v4888 = vmul.f32 %v2006, %v4042
        %v4889 = vmul.f32 %v2230, %v4046
        %v4890 = vmul.f32 %v2232, %v4050
        %v4891 = vmul.f32 %v2010, %v4054
        %v4892 = vmul.f32 %v2012, %v4058
        %v4893 = vmul.f32 %v2236, %v4062
        %v4894 = vmul.f32 %v2238, %v4066
        %v4895 = vmul.f32 %v2014, %v4070
        %v4896 = vmul.f32 %v2016, %v4074
        %v4897 = vmul.f32 %v2240, %v4078
        %v4898 = vmul.f32 %v2242, %v4082
        %v4899 = vmul.f32 %v2020, %v4086
        %v4900 = vmul.f32 %v2022, %v4090
        %v4901 = vmul.f32 %v2246, %v4094
        %v4902 = vmul.f32 %v2248, %v4098
        %v4903 = vmul.f32 %v2024, %v4102
        %v4904 = vmul.f32 %v2026, %v4106
        %v4905 = vmul.f32 %v2250, %v4110
        %v4906 = vmul.f32 %v2252, %v4114
        %v4907 = vmul.f32 %v2030, %v4118
        %v4908 = vmul.f32 %v2032, %v4122
        %v4909 = vmul.f32 %v2256, %v4126
        %v4910 = vmul.f32 %v2258, %v4130
        %v4911 = vmul.f32 %v2034, %v4134
        %v4912 = vmul.f32 %v2036, %v4138
        %v4913 = vmul.f32 %v2260, %v4142
        %v4914 = vmul.f32 %v2262, %v4146
        %v4915 = vmul.f32 %v2040, %v4150
        %v4916 = vmul.f32 %v2042, %v4154
        %v4917 = vmul.f32 %v2266, %v4158
        %v4918 = vmul.f32 %v2268, %v4162
        %v4919 = vmul.f32 %v2044, %v4166
        %v4920 = vmul.f32 %v2046, %v4170
        %v4921 = vmul.f32 %v2270, %v4174
        %v4922 = vmul.f32 %v2272, %v4178
        %v4923 = vmul.f32 %v2050, %v4182
        %v4924 = vmul.f32 %v2052, %v4186
        %v4925 = vmul.f32 %v2276, %v4190
        %v4926 = vmul.f32 %v2278, %v4194
        %v4927 = vmul.f32 %v2054, %v4198
        %v4928 = vmul.f32 %v2056, %v4202
        %v4929 = vmul.f32 %v2280, %v4206
        %v4930 = vmul.f32 %v2282, %v4210
        %v4931 = vmul.f32 %v2060, %v4214
        %v4932 = vmul.f32 %v2062, %v4218
        %v4933 = vmul.f32 %v2286, %v4222
        %v4934 = vmul.f32 %v2288, %v4226
        %v4935 = vmul.f32 %v2064, %v4230
        %v4936 = vmul.f32 %v2066, %v4234
        %v4937 = vmul.f32 %v2290, %v4238
        %v4938 = vmul.f32 %v2292, %v4242
        %v4939 = vmul.f32 %v2070, %v4246
        %v4940 = vmul.f32 %v2072, %v4250
        %v4941 = vmul.f32 %v2296, %v4254
        %v4942 = vmul.f32 %v2298, %v4258
        %v4943 = vmul.f32 %v2074, %v4262
        %v4944 = vmul.f32 %v2076, %v4266
        %v4945 = vmul.f32 %v2300, %v4270
        %v4946 = vmul.f32 %v2302, %v4274
        %v4963 = vlaneseq
        %v4964 = vshrl.u32 %v4963, 7
        %v4965 = vsub.s32 0, %v4964
        %v4966 = vrot.slane %v4867, %v4965
        %v4967 = vlaneseq
        %v4968 = vshrl.u32 %v4967, 7
        %v4969 = vsub.s32 1, %v4968
        %v4970 = vrot.slane %v4867, %v4969
        %v4971 = vlaneseq
        %v4972 = vshrl.u32 %v4971, 7
        %v4973 = vsub.s32 2, %v4972
        %v4974 = vrot.slane %v4867, %v4973
        %v4975 = vlaneseq
        %v4976 = vshrl.u32 %v4975, 7
        %v4977 = vsub.s32 3, %v4976
        %v4978 = vrot.slane %v4867, %v4977
        %v4979 = vlaneseq
        %v4980 = vshrl.u32 %v4979, 7
        %v4981 = vsub.s32 0, %v4980
        %v4982 = vrot.slane %v4868, %v4981
        %v4983 = vlaneseq
        %v4984 = vshrl.u32 %v4983, 7
        %v4985 = vsub.s32 1, %v4984
        %v4986 = vrot.slane %v4868, %v4985
        %v4987 = vlaneseq
        %v4988 = vshrl.u32 %v4987, 7
        %v4989 = vsub.s32 2, %v4988
        %v4990 = vrot.slane %v4868, %v4989
        %v4991 = vlaneseq
        %v4992 = vshrl.u32 %v4991, 7
        %v4993 = vsub.s32 3, %v4992
        %v4994 = vrot.slane %v4868, %v4993
        %v4995 = vlaneseq
        %v4996 = vshrl.u32 %v4995, 7
        %v4997 = vsub.s32 0, %v4996
        %v4998 = vrot.slane %v4869, %v4997
        %v4999 = vlaneseq
        %v5000 = vshrl.u32 %v4999, 7
        %v5001 = vsub.s32 1, %v5000
        %v5002 = vrot.slane %v4869, %v5001
        %v5003 = vlaneseq
        %v5004 = vshrl.u32 %v5003, 7
        %v5005 = vsub.s32 2, %v5004
        %v5006 = vrot.slane %v4869, %v5005
        %v5007 = vlaneseq
        %v5008 = vshrl.u32 %v5007, 7
        %v5009 = vsub.s32 3, %v5008
        %v5010 = vrot.slane %v4869, %v5009
        %v5011 = vlaneseq
        %v5012 = vshrl.u32 %v5011, 7
        %v5013 = vsub.s32 0, %v5012
        %v5014 = vrot.slane %v4870, %v5013
        %v5015 = vlaneseq
        %v5016 = vshrl.u32 %v5015, 7
        %v5017 = vsub.s32 1, %v5016
        %v5018 = vrot.slane %v4870, %v5017
        %v5019 = vlaneseq
        %v5020 = vshrl.u32 %v5019, 7
        %v5021 = vsub.s32 2, %v5020
        %v5022 = vrot.slane %v4870, %v5021
        %v5023 = vlaneseq
        %v5024 = vshrl.u32 %v5023, 7
        %v5025 = vsub.s32 3, %v5024
        %v5026 = vrot.slane %v4870, %v5025
        %v5027 = vlaneseq
        %v5028 = vshrl.u32 %v5027, 7
        %v5029 = vsub.s32 0, %v5028
        %v5030 = vrot.slane %v4871, %v5029
        %v5031 = vlaneseq
        %v5032 = vshrl.u32 %v5031, 7
        %v5033 = vsub.s32 1, %v5032
        %v5034 = vrot.slane %v4871, %v5033
        %v5035 = vlaneseq
        %v5036 = vshrl.u32 %v5035, 7
        %v5037 = vsub.s32 2, %v5036
        %v5038 = vrot.slane %v4871, %v5037
        %v5039 = vlaneseq
        %v5040 = vshrl.u32 %v5039, 7
        %v5041 = vsub.s32 3, %v5040
        %v5042 = vrot.slane %v4871, %v5041
        %v5043 = vlaneseq
        %v5044 = vshrl.u32 %v5043, 7
        %v5045 = vsub.s32 0, %v5044
        %v5046 = vrot.slane %v4872, %v5045
        %v5047 = vlaneseq
        %v5048 = vshrl.u32 %v5047, 7
        %v5049 = vsub.s32 1, %v5048
        %v5050 = vrot.slane %v4872, %v5049
        %v5051 = vlaneseq
        %v5052 = vshrl.u32 %v5051, 7
        %v5053 = vsub.s32 2, %v5052
        %v5054 = vrot.slane %v4872, %v5053
        %v5055 = vlaneseq
        %v5056 = vshrl.u32 %v5055, 7
        %v5057 = vsub.s32 3, %v5056
        %v5058 = vrot.slane %v4872, %v5057
        %v5059 = vlaneseq
        %v5060 = vshrl.u32 %v5059, 7
        %v5061 = vsub.s32 0, %v5060
        %v5062 = vrot.slane %v4873, %v5061
        %v5063 = vlaneseq
        %v5064 = vshrl.u32 %v5063, 7
        %v5065 = vsub.s32 1, %v5064
        %v5066 = vrot.slane %v4873, %v5065
        %v5067 = vlaneseq
        %v5068 = vshrl.u32 %v5067, 7
        %v5069 = vsub.s32 2, %v5068
        %v5070 = vrot.slane %v4873, %v5069
        %v5071 = vlaneseq
        %v5072 = vshrl.u32 %v5071, 7
        %v5073 = vsub.s32 3, %v5072
        %v5074 = vrot.slane %v4873, %v5073
        %v5075 = vlaneseq
        %v5076 = vshrl.u32 %v5075, 7
        %v5077 = vsub.s32 0, %v5076
        %v5078 = vrot.slane %v4874, %v5077
        %v5079 = vlaneseq
        %v5080 = vshrl.u32 %v5079, 7
        %v5081 = vsub.s32 1, %v5080
        %v5082 = vrot.slane %v4874, %v5081
        %v5083 = vlaneseq
        %v5084 = vshrl.u32 %v5083, 7
        %v5085 = vsub.s32 2, %v5084
        %v5086 = vrot.slane %v4874, %v5085
        %v5087 = vlaneseq
        %v5088 = vshrl.u32 %v5087, 7
        %v5089 = vsub.s32 3, %v5088
        %v5090 = vrot.slane %v4874, %v5089
        %v5091 = vlaneseq
        %v5092 = vshrl.u32 %v5091, 7
        %v5093 = vsub.s32 0, %v5092
        %v5094 = vrot.slane %v4875, %v5093
        %v5095 = vlaneseq
        %v5096 = vshrl.u32 %v5095, 7
        %v5097 = vsub.s32 1, %v5096
        %v5098 = vrot.slane %v4875, %v5097
        %v5099 = vlaneseq
        %v5100 = vshrl.u32 %v5099, 7
        %v5101 = vsub.s32 2, %v5100
        %v5102 = vrot.slane %v4875, %v5101
        %v5103 = vlaneseq
        %v5104 = vshrl.u32 %v5103, 7
        %v5105 = vsub.s32 3, %v5104
        %v5106 = vrot.slane %v4875, %v5105
        %v5107 = vlaneseq
        %v5108 = vshrl.u32 %v5107, 7
        %v5109 = vsub.s32 0, %v5108
        %v5110 = vrot.slane %v4876, %v5109
        %v5111 = vlaneseq
        %v5112 = vshrl.u32 %v5111, 7
        %v5113 = vsub.s32 1, %v5112
        %v5114 = vrot.slane %v4876, %v5113
        %v5115 = vlaneseq
        %v5116 = vshrl.u32 %v5115, 7
        %v5117 = vsub.s32 2, %v5116
        %v5118 = vrot.slane %v4876, %v5117
        %v5119 = vlaneseq
        %v5120 = vshrl.u32 %v5119, 7
        %v5121 = vsub.s32 3, %v5120
        %v5122 = vrot.slane %v4876, %v5121
        %v5123 = vlaneseq
        %v5124 = vshrl.u32 %v5123, 7
        %v5125 = vsub.s32 0, %v5124
        %v5126 = vrot.slane %v4877, %v5125
        %v5127 = vlaneseq
        %v5128 = vshrl.u32 %v5127, 7
        %v5129 = vsub.s32 1, %v5128
        %v5130 = vrot.slane %v4877, %v5129
        %v5131 = vlaneseq
        %v5132 = vshrl.u32 %v5131, 7
        %v5133 = vsub.s32 2, %v5132
        %v5134 = vrot.slane %v4877, %v5133
        %v5135 = vlaneseq
        %v5136 = vshrl.u32 %v5135, 7
        %v5137 = vsub.s32 3, %v5136
        %v5138 = vrot.slane %v4877, %v5137
        %v5139 = vlaneseq
        %v5140 = vshrl.u32 %v5139, 7
        %v5141 = vsub.s32 0, %v5140
        %v5142 = vrot.slane %v4878, %v5141
        %v5143 = vlaneseq
        %v5144 = vshrl.u32 %v5143, 7
        %v5145 = vsub.s32 1, %v5144
        %v5146 = vrot.slane %v4878, %v5145
        %v5147 = vlaneseq
        %v5148 = vshrl.u32 %v5147, 7
        %v5149 = vsub.s32 2, %v5148
        %v5150 = vrot.slane %v4878, %v5149
        %v5151 = vlaneseq
        %v5152 = vshrl.u32 %v5151, 7
        %v5153 = vsub.s32 3, %v5152
        %v5154 = vrot.slane %v4878, %v5153
        %v5155 = vlaneseq
        %v5156 = vshrl.u32 %v5155, 7
        %v5157 = vsub.s32 0, %v5156
        %v5158 = vrot.slane %v4879, %v5157
        %v5159 = vlaneseq
        %v5160 = vshrl.u32 %v5159, 7
        %v5161 = vsub.s32 1, %v5160
        %v5162 = vrot.slane %v4879, %v5161
        %v5163 = vlaneseq
        %v5164 = vshrl.u32 %v5163, 7
        %v5165 = vsub.s32 2, %v5164
        %v5166 = vrot.slane %v4879, %v5165
        %v5167 = vlaneseq
        %v5168 = vshrl.u32 %v5167, 7
        %v5169 = vsub.s32 3, %v5168
        %v5170 = vrot.slane %v4879, %v5169
        %v5171 = vlaneseq
        %v5172 = vshrl.u32 %v5171, 7
        %v5173 = vsub.s32 0, %v5172
        %v5174 = vrot.slane %v4880, %v5173
        %v5175 = vlaneseq
        %v5176 = vshrl.u32 %v5175, 7
        %v5177 = vsub.s32 1, %v5176
        %v5178 = vrot.slane %v4880, %v5177
        %v5179 = vlaneseq
        %v5180 = vshrl.u32 %v5179, 7
        %v5181 = vsub.s32 2, %v5180
        %v5182 = vrot.slane %v4880, %v5181
        %v5183 = vlaneseq
        %v5184 = vshrl.u32 %v5183, 7
        %v5185 = vsub.s32 3, %v5184
        %v5186 = vrot.slane %v4880, %v5185
        %v5187 = vlaneseq
        %v5188 = vshrl.u32 %v5187, 7
        %v5189 = vsub.s32 0, %v5188
        %v5190 = vrot.slane %v4881, %v5189
        %v5191 = vlaneseq
        %v5192 = vshrl.u32 %v5191, 7
        %v5193 = vsub.s32 1, %v5192
        %v5194 = vrot.slane %v4881, %v5193
        %v5195 = vlaneseq
        %v5196 = vshrl.u32 %v5195, 7
        %v5197 = vsub.s32 2, %v5196
        %v5198 = vrot.slane %v4881, %v5197
        %v5199 = vlaneseq
        %v5200 = vshrl.u32 %v5199, 7
        %v5201 = vsub.s32 3, %v5200
        %v5202 = vrot.slane %v4881, %v5201
        %v5203 = vlaneseq
        %v5204 = vshrl.u32 %v5203, 7
        %v5205 = vsub.s32 0, %v5204
        %v5206 = vrot.slane %v4882, %v5205
        %v5207 = vlaneseq
        %v5208 = vshrl.u32 %v5207, 7
        %v5209 = vsub.s32 1, %v5208
        %v5210 = vrot.slane %v4882, %v5209
        %v5211 = vlaneseq
        %v5212 = vshrl.u32 %v5211, 7
        %v5213 = vsub.s32 2, %v5212
        %v5214 = vrot.slane %v4882, %v5213
        %v5215 = vlaneseq
        %v5216 = vshrl.u32 %v5215, 7
        %v5217 = vsub.s32 3, %v5216
        %v5218 = vrot.slane %v4882, %v5217
        %v5283 = vadd.f32 %v4883, %v4966
        %v5284 = vadd.f32 %v4884, %v4970
        %v5285 = vadd.f32 %v4885, %v4974
        %v5286 = vadd.f32 %v4886, %v4978
        %v5287 = vadd.f32 %v4887, %v4982
        %v5288 = vadd.f32 %v4888, %v4986
        %v5289 = vadd.f32 %v4889, %v4990
        %v5290 = vadd.f32 %v4890, %v4994
        %v5291 = vadd.f32 %v4891, %v4998
        %v5292 = vadd.f32 %v4892, %v5002
        %v5293 = vadd.f32 %v4893, %v5006
        %v5294 = vadd.f32 %v4894, %v5010
        %v5295 = vadd.f32 %v4895, %v5014
        %v5296 = vadd.f32 %v4896, %v5018
        %v5297 = vadd.f32 %v4897, %v5022
        %v5298 = vadd.f32 %v4898, %v5026
        %v5299 = vadd.f32 %v4899, %v5030
        %v5300 = vadd.f32 %v4900, %v5034
        %v5301 = vadd.f32 %v4901, %v5038
        %v5302 = vadd.f32 %v4902, %v5042
        %v5303 = vadd.f32 %v4903, %v5046
        %v5304 = vadd.f32 %v4904, %v5050
        %v5305 = vadd.f32 %v4905, %v5054
        %v5306 = vadd.f32 %v4906, %v5058
        %v5307 = vadd.f32 %v4907, %v5062
        %v5308 = vadd.f32 %v4908, %v5066
        %v5309 = vadd.f32 %v4909, %v5070
        %v5310 = vadd.f32 %v4910, %v5074
        %v5311 = vadd.f32 %v4911, %v5078
        %v5312 = vadd.f32 %v4912, %v5082
        %v5313 = vadd.f32 %v4913, %v5086
        %v5314 = vadd.f32 %v4914, %v5090
        %v5315 = vadd.f32 %v4915, %v5094
        %v5316 = vadd.f32 %v4916, %v5098
        %v5317 = vadd.f32 %v4917, %v5102
        %v5318 = vadd.f32 %v4918, %v5106
        %v5319 = vadd.f32 %v4919, %v5110
        %v5320 = vadd.f32 %v4920, %v5114
        %v5321 = vadd.f32 %v4921, %v5118
        %v5322 = vadd.f32 %v4922, %v5122
        %v5323 = vadd.f32 %v4923, %v5126
        %v5324 = vadd.f32 %v4924, %v5130
        %v5325 = vadd.f32 %v4925, %v5134
        %v5326 = vadd.f32 %v4926, %v5138
        %v5327 = vadd.f32 %v4927, %v5142
        %v5328 = vadd.f32 %v4928, %v5146
        %v5329 = vadd.f32 %v4929, %v5150
        %v5330 = vadd.f32 %v4930, %v5154
        %v5331 = vadd.f32 %v4931, %v5158
        %v5332 = vadd.f32 %v4932, %v5162
        %v5333 = vadd.f32 %v4933, %v5166
        %v5334 = vadd.f32 %v4934, %v5170
        %v5335 = vadd.f32 %v4935, %v5174
        %v5336 = vadd.f32 %v4936, %v5178
        %v5337 = vadd.f32 %v4937, %v5182
        %v5338 = vadd.f32 %v4938, %v5186
        %v5339 = vadd.f32 %v4939, %v5190
        %v5340 = vadd.f32 %v4940, %v5194
        %v5341 = vadd.f32 %v4941, %v5198
        %v5342 = vadd.f32 %v4942, %v5202
        %v5343 = vadd.f32 %v4943, %v5206
        %v5344 = vadd.f32 %v4944, %v5210
        %v5345 = vadd.f32 %v4945, %v5214
        %v5346 = vadd.f32 %v4946, %v5218
        %v5347 = vmul.f32 %v5283, 0.2
        %v5348 = vmul.f32 %v5284, 0.2
        %v5349 = vmul.f32 %v5285, 0.2
        %v5350 = vmul.f32 %v5286, 0.2
        %v5351 = vmul.f32 %v5287, 0.2
        %v5352 = vmul.f32 %v5288, 0.2
        %v5353 = vmul.f32 %v5289, 0.2
        %v5354 = vmul.f32 %v5290, 0.2
        %v5355 = vmul.f32 %v5291, 0.2
        %v5356 = vmul.f32 %v5292, 0.2
        %v5357 = vmul.f32 %v5293, 0.2
        %v5358 = vmul.f32 %v5294, 0.2
        %v5359 = vmul.f32 %v5295, 0.2
        %v5360 = vmul.f32 %v5296, 0.2
        %v5361 = vmul.f32 %v5297, 0.2
        %v5362 = vmul.f32 %v5298, 0.2
        %v5363 = vmul.f32 %v5299, 0.2
        %v5364 = vmul.f32 %v5300, 0.2
        %v5365 = vmul.f32 %v5301, 0.2
        %v5366 = vmul.f32 %v5302, 0.2
        %v5367 = vmul.f32 %v5303, 0.2
        %v5368 = vmul.f32 %v5304, 0.2
        %v5369 = vmul.f32 %v5305, 0.2
        %v5370 = vmul.f32 %v5306, 0.2
        %v5371 = vmul.f32 %v5307, 0.2
        %v5372 = vmul.f32 %v5308, 0.2
        %v5373 = vmul.f32 %v5309, 0.2
        %v5374 = vmul.f32 %v5310, 0.2
        %v5375 = vmul.f32 %v5311, 0.2
        %v5376 = vmul.f32 %v5312, 0.2
        %v5377 = vmul.f32 %v5313, 0.2
        %v5378 = vmul.f32 %v5314, 0.2
        %v5379 = vmul.f32 %v5315, 0.2
        %v5380 = vmul.f32 %v5316, 0.2
        %v5381 = vmul.f32 %v5317, 0.2
        %v5382 = vmul.f32 %v5318, 0.2
        %v5383 = vmul.f32 %v5319, 0.2
        %v5384 = vmul.f32 %v5320, 0.2
        %v5385 = vmul.f32 %v5321, 0.2
        %v5386 = vmul.f32 %v5322, 0.2
        %v5387 = vmul.f32 %v5323, 0.2
        %v5388 = vmul.f32 %v5324, 0.2
        %v5389 = vmul.f32 %v5325, 0.2
        %v5390 = vmul.f32 %v5326, 0.2
        %v5391 = vmul.f32 %v5327, 0.2
        %v5392 = vmul.f32 %v5328, 0.2
        %v5393 = vmul.f32 %v5329, 0.2
        %v5394 = vmul.f32 %v5330, 0.2
        %v5395 = vmul.f32 %v5331, 0.2
        %v5396 = vmul.f32 %v5332, 0.2
        %v5397 = vmul.f32 %v5333, 0.2
        %v5398 = vmul.f32 %v5334, 0.2
        %v5399 = vmul.f32 %v5335, 0.2
        %v5400 = vmul.f32 %v5336, 0.2
        %v5401 = vmul.f32 %v5337, 0.2
        %v5402 = vmul.f32 %v5338, 0.2
        %v5403 = vmul.f32 %v5339, 0.2
        %v5404 = vmul.f32 %v5340, 0.2
        %v5405 = vmul.f32 %v5341, 0.2
        %v5406 = vmul.f32 %v5342, 0.2
        %v5407 = vmul.f32 %v5343, 0.2
        %v5408 = vmul.f32 %v5344, 0.2
        %v5409 = vmul.f32 %v5345, 0.2
        %v5410 = vmul.f32 %v5346, 0.2
        %v5411 = vmax.f32 %v5283, %v5347
        %v5412 = vmax.f32 %v5284, %v5348
        %v5413 = vmax.f32 %v5285, %v5349
        %v5414 = vmax.f32 %v5286, %v5350
        %v5415 = vmax.f32 %v5287, %v5351
        %v5416 = vmax.f32 %v5288, %v5352
        %v5417 = vmax.f32 %v5289, %v5353
        %v5418 = vmax.f32 %v5290, %v5354
        %v5419 = vmax.f32 %v5291, %v5355
        %v5420 = vmax.f32 %v5292, %v5356
        %v5421 = vmax.f32 %v5293, %v5357
        %v5422 = vmax.f32 %v5294, %v5358
        %v5423 = vmax.f32 %v5295, %v5359
        %v5424 = vmax.f32 %v5296, %v5360
        %v5425 = vmax.f32 %v5297, %v5361
        %v5426 = vmax.f32 %v5298, %v5362
        %v5427 = vmax.f32 %v5299, %v5363
        %v5428 = vmax.f32 %v5300, %v5364
        %v5429 = vmax.f32 %v5301, %v5365
        %v5430 = vmax.f32 %v5302, %v5366
        %v5431 = vmax.f32 %v5303, %v5367
        %v5432 = vmax.f32 %v5304, %v5368
        %v5433 = vmax.f32 %v5305, %v5369
        %v5434 = vmax.f32 %v5306, %v5370
        %v5435 = vmax.f32 %v5307, %v5371
        %v5436 = vmax.f32 %v5308, %v5372
        %v5437 = vmax.f32 %v5309, %v5373
        %v5438 = vmax.f32 %v5310, %v5374
        %v5439 = vmax.f32 %v5311, %v5375
        %v5440 = vmax.f32 %v5312, %v5376
        %v5441 = vmax.f32 %v5313, %v5377
        %v5442 = vmax.f32 %v5314, %v5378
        %v5443 = vmax.f32 %v5315, %v5379
        %v5444 = vmax.f32 %v5316, %v5380
        %v5445 = vmax.f32 %v5317, %v5381
        %v5446 = vmax.f32 %v5318, %v5382
        %v5447 = vmax.f32 %v5319, %v5383
        %v5448 = vmax.f32 %v5320, %v5384
        %v5449 = vmax.f32 %v5321, %v5385
        %v5450 = vmax.f32 %v5322, %v5386
        %v5451 = vmax.f32 %v5323, %v5387
        %v5452 = vmax.f32 %v5324, %v5388
        %v5453 = vmax.f32 %v5325, %v5389
        %v5454 = vmax.f32 %v5326, %v5390
        %v5455 = vmax.f32 %v5327, %v5391
        %v5456 = vmax.f32 %v5328, %v5392
        %v5457 = vmax.f32 %v5329, %v5393
        %v5458 = vmax.f32 %v5330, %v5394
        %v5459 = vmax.f32 %v5331, %v5395
        %v5460 = vmax.f32 %v5332, %v5396
        %v5461 = vmax.f32 %v5333, %v5397
        %v5462 = vmax.f32 %v5334, %v5398
        %v5463 = vmax.f32 %v5335, %v5399
        %v5464 = vmax.f32 %v5336, %v5400
        %v5465 = vmax.f32 %v5337, %v5401
        %v5466 = vmax.f32 %v5338, %v5402
        %v5467 = vmax.f32 %v5339, %v5403
        %v5468 = vmax.f32 %v5340, %v5404
        %v5469 = vmax.f32 %v5341, %v5405
        %v5470 = vmax.f32 %v5342, %v5406
        %v5471 = vmax.f32 %v5343, %v5407
        %v5472 = vmax.f32 %v5344, %v5408
        %v5473 = vmax.f32 %v5345, %v5409
        %v5474 = vmax.f32 %v5346, %v5410
        %v5475 = vpack.c.bf16 %v5415, %v5411
        %v5476 = vpack.c.bf16 %v5416, %v5412
        %v5477 = vpack.c.bf16 %v5417, %v5413
        %v5478 = vpack.c.bf16 %v5418, %v5414
        %v5479 = vpack.c.bf16 %v5423, %v5419
        %v5480 = vpack.c.bf16 %v5424, %v5420
        %v5481 = vpack.c.bf16 %v5425, %v5421
        %v5482 = vpack.c.bf16 %v5426, %v5422
        %v5483 = vpack.c.bf16 %v5431, %v5427
        %v5484 = vpack.c.bf16 %v5432, %v5428
        %v5485 = vpack.c.bf16 %v5433, %v5429
        %v5486 = vpack.c.bf16 %v5434, %v5430
        %v5487 = vpack.c.bf16 %v5439, %v5435
        %v5488 = vpack.c.bf16 %v5440, %v5436
        %v5489 = vpack.c.bf16 %v5441, %v5437
        %v5490 = vpack.c.bf16 %v5442, %v5438
        %v5491 = vpack.c.bf16 %v5447, %v5443
        %v5492 = vpack.c.bf16 %v5448, %v5444
        %v5493 = vpack.c.bf16 %v5449, %v5445
        %v5494 = vpack.c.bf16 %v5450, %v5446
        %v5495 = vpack.c.bf16 %v5455, %v5451
        %v5496 = vpack.c.bf16 %v5456, %v5452
        %v5497 = vpack.c.bf16 %v5457, %v5453
        %v5498 = vpack.c.bf16 %v5458, %v5454
        %v5499 = vpack.c.bf16 %v5463, %v5459
        %v5500 = vpack.c.bf16 %v5464, %v5460
        %v5501 = vpack.c.bf16 %v5465, %v5461
        %v5502 = vpack.c.bf16 %v5466, %v5462
        %v5503 = vpack.c.bf16 %v5471, %v5467
        %v5504 = vpack.c.bf16 %v5472, %v5468
        %v5505 = vpack.c.bf16 %v5473, %v5469
        %v5506 = vpack.c.bf16 %v5474, %v5470
        %v5507 = vld [vmem:[#allocation8] sm:$0xff]
        %v5508 = vld [vmem:[#allocation8 + $0x8] sm:$0xff]
        %v5509 = vld [vmem:[#allocation8 + $0x10] sm:$0xff]
        %v5510 = vld [vmem:[#allocation8 + $0x18] sm:$0xff]
        %v5511 = vld [vmem:[#allocation8 + $0x20] sm:$0xff]
        %v5512 = vld [vmem:[#allocation8 + $0x28] sm:$0xff]
        %v5513 = vld [vmem:[#allocation8 + $0x30] sm:$0xff]
        %v5514 = vld [vmem:[#allocation8 + $0x38] sm:$0xff]
        %v5515 = vld [vmem:[#allocation8 + $0x40] sm:$0xff]
        %v5516 = vld [vmem:[#allocation8 + $0x48] sm:$0xff]
        %v5517 = vld [vmem:[#allocation8 + $0x50] sm:$0xff]
        %v5518 = vld [vmem:[#allocation8 + $0x58] sm:$0xff]
        %v5519 = vld [vmem:[#allocation8 + $0x60] sm:$0xff]
        %v5520 = vld [vmem:[#allocation8 + $0x68] sm:$0xff]
        %v5521 = vld [vmem:[#allocation8 + $0x70] sm:$0xff]
        %v5522 = vld [vmem:[#allocation8 + $0x78] sm:$0xff]
        %v5523 = vld [vmem:[#allocation8 + $0x80] sm:$0xff]
        %v5524 = vld [vmem:[#allocation8 + $0x88] sm:$0xff]
        %v5525 = vld [vmem:[#allocation8 + $0x90] sm:$0xff]
        %v5526 = vld [vmem:[#allocation8 + $0x98] sm:$0xff]
        %v5527 = vld [vmem:[#allocation8 + $0xa0] sm:$0xff]
        %v5528 = vld [vmem:[#allocation8 + $0xa8] sm:$0xff]
        %v5529 = vld [vmem:[#allocation8 + $0xb0] sm:$0xff]
        %v5530 = vld [vmem:[#allocation8 + $0xb8] sm:$0xff]
        %v5531 = vld [vmem:[#allocation8 + $0xc0] sm:$0xff]
        %v5532 = vld [vmem:[#allocation8 + $0xc8] sm:$0xff]
        %v5533 = vld [vmem:[#allocation8 + $0xd0] sm:$0xff]
        %v5534 = vld [vmem:[#allocation8 + $0xd8] sm:$0xff]
        %v5535 = vld [vmem:[#allocation8 + $0xe0] sm:$0xff]
        %v5536 = vld [vmem:[#allocation8 + $0xe8] sm:$0xff]
        %v5537 = vld [vmem:[#allocation8 + $0xf0] sm:$0xff]
        %v5538 = vld [vmem:[#allocation8 + $0xf8] sm:$0xff]
        %v5539 = vld [vmem:[#allocation8 + $0x100] sm:$0xff]
        %v5540 = vld [vmem:[#allocation8 + $0x108] sm:$0xff]
        %v5541 = vld [vmem:[#allocation8 + $0x110] sm:$0xff]
        %v5542 = vld [vmem:[#allocation8 + $0x118] sm:$0xff]
        %v5543 = vld [vmem:[#allocation8 + $0x120] sm:$0xff]
        %v5544 = vld [vmem:[#allocation8 + $0x128] sm:$0xff]
        %v5545 = vld [vmem:[#allocation8 + $0x130] sm:$0xff]
        %v5546 = vld [vmem:[#allocation8 + $0x138] sm:$0xff]
        %v5547 = vld [vmem:[#allocation8 + $0x140] sm:$0xff]
        %v5548 = vld [vmem:[#allocation8 + $0x148] sm:$0xff]
        %v5549 = vld [vmem:[#allocation8 + $0x150] sm:$0xff]
        %v5550 = vld [vmem:[#allocation8 + $0x158] sm:$0xff]
        %v5551 = vld [vmem:[#allocation8 + $0x160] sm:$0xff]
        %v5552 = vld [vmem:[#allocation8 + $0x168] sm:$0xff]
        %v5553 = vld [vmem:[#allocation8 + $0x170] sm:$0xff]
        %v5554 = vld [vmem:[#allocation8 + $0x178] sm:$0xff]
        %v5555 = vld [vmem:[#allocation8 + $0x180] sm:$0xff]
        %v5556 = vld [vmem:[#allocation8 + $0x188] sm:$0xff]
        %v5557 = vld [vmem:[#allocation8 + $0x190] sm:$0xff]
        %v5558 = vld [vmem:[#allocation8 + $0x198] sm:$0xff]
        %v5559 = vld [vmem:[#allocation8 + $0x1a0] sm:$0xff]
        %v5560 = vld [vmem:[#allocation8 + $0x1a8] sm:$0xff]
        %v5561 = vld [vmem:[#allocation8 + $0x1b0] sm:$0xff]
        %v5562 = vld [vmem:[#allocation8 + $0x1b8] sm:$0xff]
        %v5563 = vld [vmem:[#allocation8 + $0x1c0] sm:$0xff]
        %v5564 = vld [vmem:[#allocation8 + $0x1c8] sm:$0xff]
        %v5565 = vld [vmem:[#allocation8 + $0x1d0] sm:$0xff]
        %v5566 = vld [vmem:[#allocation8 + $0x1d8] sm:$0xff]
        %v5567 = vld [vmem:[#allocation8 + $0x1e0] sm:$0xff]
        %v5568 = vld [vmem:[#allocation8 + $0x1e8] sm:$0xff]
        %v5569 = vld [vmem:[#allocation8 + $0x1f0] sm:$0xff]
        %v5570 = vld [vmem:[#allocation8 + $0x1f8] sm:$0xff]
        %v5571 = vld [vmem:[%s8] sm:$0x3]
        %v5573 = vlaneseq
        %v5574 = vshrl.u32 %v5573, 7
        %v5575 = vsub.s32 0, %v5574
        %v5576 = vrot.slane %v5571, %v5575
        %v5577 = vlaneseq
        %v5578 = vshrl.u32 %v5577, 7
        %v5579 = vsub.s32 1, %v5578
        %v5580 = vrot.slane %v5571, %v5579
        %v5647 = vunpack.c.l.b16 %v5507
        %v5648 = vunpack.c.h.b16 %v5507
        %v5649 = vunpack.c.l.b16 %v5508
        %v5650 = vunpack.c.h.b16 %v5508
        %v5651 = vunpack.c.l.b16 %v5509
        %v5652 = vunpack.c.h.b16 %v5509
        %v5653 = vunpack.c.l.b16 %v5510
        %v5654 = vunpack.c.h.b16 %v5510
        %v5655 = vunpack.c.l.b16 %v5511
        %v5656 = vunpack.c.h.b16 %v5511
        %v5657 = vunpack.c.l.b16 %v5512
        %v5658 = vunpack.c.h.b16 %v5512
        %v5659 = vunpack.c.l.b16 %v5513
        %v5660 = vunpack.c.h.b16 %v5513
        %v5661 = vunpack.c.l.b16 %v5514
        %v5662 = vunpack.c.h.b16 %v5514
        %v5663 = vunpack.c.l.b16 %v5515
        %v5664 = vunpack.c.h.b16 %v5515
        %v5665 = vunpack.c.l.b16 %v5516
        %v5666 = vunpack.c.h.b16 %v5516
        %v5667 = vunpack.c.l.b16 %v5517
        %v5668 = vunpack.c.h.b16 %v5517
        %v5669 = vunpack.c.l.b16 %v5518
        %v5670 = vunpack.c.h.b16 %v5518
        %v5671 = vunpack.c.l.b16 %v5519
        %v5672 = vunpack.c.h.b16 %v5519
        %v5673 = vunpack.c.l.b16 %v5520
        %v5674 = vunpack.c.h.b16 %v5520
        %v5675 = vunpack.c.l.b16 %v5521
        %v5676 = vunpack.c.h.b16 %v5521
        %v5677 = vunpack.c.l.b16 %v5522
        %v5678 = vunpack.c.h.b16 %v5522
        %v5679 = vunpack.c.l.b16 %v5523
        %v5680 = vunpack.c.h.b16 %v5523
        %v5681 = vunpack.c.l.b16 %v5524
        %v5682 = vunpack.c.h.b16 %v5524
        %v5683 = vunpack.c.l.b16 %v5525
        %v5684 = vunpack.c.h.b16 %v5525
        %v5685 = vunpack.c.l.b16 %v5526
        %v5686 = vunpack.c.h.b16 %v5526
        %v5687 = vunpack.c.l.b16 %v5527
        %v5688 = vunpack.c.h.b16 %v5527
        %v5689 = vunpack.c.l.b16 %v5528
        %v5690 = vunpack.c.h.b16 %v5528
        %v5691 = vunpack.c.l.b16 %v5529
        %v5692 = vunpack.c.h.b16 %v5529
        %v5693 = vunpack.c.l.b16 %v5530
        %v5694 = vunpack.c.h.b16 %v5530
        %v5695 = vunpack.c.l.b16 %v5531
        %v5696 = vunpack.c.h.b16 %v5531
        %v5697 = vunpack.c.l.b16 %v5532
        %v5698 = vunpack.c.h.b16 %v5532
        %v5699 = vunpack.c.l.b16 %v5533
        %v5700 = vunpack.c.h.b16 %v5533
        %v5701 = vunpack.c.l.b16 %v5534
        %v5702 = vunpack.c.h.b16 %v5534
        %v5703 = vunpack.c.l.b16 %v5535
        %v5704 = vunpack.c.h.b16 %v5535
        %v5705 = vunpack.c.l.b16 %v5536
        %v5706 = vunpack.c.h.b16 %v5536
        %v5707 = vunpack.c.l.b16 %v5537
        %v5708 = vunpack.c.h.b16 %v5537
        %v5709 = vunpack.c.l.b16 %v5538
        %v5710 = vunpack.c.h.b16 %v5538
        %v5711 = vunpack.c.l.b16 %v5539
        %v5712 = vunpack.c.h.b16 %v5539
        %v5713 = vunpack.c.l.b16 %v5540
        %v5714 = vunpack.c.h.b16 %v5540
        %v5715 = vunpack.c.l.b16 %v5541
        %v5716 = vunpack.c.h.b16 %v5541
        %v5717 = vunpack.c.l.b16 %v5542
        %v5718 = vunpack.c.h.b16 %v5542
        %v5719 = vunpack.c.l.b16 %v5543
        %v5720 = vunpack.c.h.b16 %v5543
        %v5721 = vunpack.c.l.b16 %v5544
        %v5722 = vunpack.c.h.b16 %v5544
        %v5723 = vunpack.c.l.b16 %v5545
        %v5724 = vunpack.c.h.b16 %v5545
        %v5725 = vunpack.c.l.b16 %v5546
        %v5726 = vunpack.c.h.b16 %v5546
        %v5727 = vunpack.c.l.b16 %v5547
        %v5728 = vunpack.c.h.b16 %v5547
        %v5729 = vunpack.c.l.b16 %v5548
        %v5730 = vunpack.c.h.b16 %v5548
        %v5731 = vunpack.c.l.b16 %v5549
        %v5732 = vunpack.c.h.b16 %v5549
        %v5733 = vunpack.c.l.b16 %v5550
        %v5734 = vunpack.c.h.b16 %v5550
        %v5735 = vunpack.c.l.b16 %v5551
        %v5736 = vunpack.c.h.b16 %v5551
        %v5737 = vunpack.c.l.b16 %v5552
        %v5738 = vunpack.c.h.b16 %v5552
        %v5739 = vunpack.c.l.b16 %v5553
        %v5740 = vunpack.c.h.b16 %v5553
        %v5741 = vunpack.c.l.b16 %v5554
        %v5742 = vunpack.c.h.b16 %v5554
        %v5743 = vunpack.c.l.b16 %v5555
        %v5744 = vunpack.c.h.b16 %v5555
        %v5745 = vunpack.c.l.b16 %v5556
        %v5746 = vunpack.c.h.b16 %v5556
        %v5747 = vunpack.c.l.b16 %v5557
        %v5748 = vunpack.c.h.b16 %v5557
        %v5749 = vunpack.c.l.b16 %v5558
        %v5750 = vunpack.c.h.b16 %v5558
        %v5751 = vunpack.c.l.b16 %v5559
        %v5752 = vunpack.c.h.b16 %v5559
        %v5753 = vunpack.c.l.b16 %v5560
        %v5754 = vunpack.c.h.b16 %v5560
        %v5755 = vunpack.c.l.b16 %v5561
        %v5756 = vunpack.c.h.b16 %v5561
        %v5757 = vunpack.c.l.b16 %v5562
        %v5758 = vunpack.c.h.b16 %v5562
        %v5759 = vunpack.c.l.b16 %v5563
        %v5760 = vunpack.c.h.b16 %v5563
        %v5761 = vunpack.c.l.b16 %v5564
        %v5762 = vunpack.c.h.b16 %v5564
        %v5763 = vunpack.c.l.b16 %v5565
        %v5764 = vunpack.c.h.b16 %v5565
        %v5765 = vunpack.c.l.b16 %v5566
        %v5766 = vunpack.c.h.b16 %v5566
        %v5767 = vunpack.c.l.b16 %v5567
        %v5768 = vunpack.c.h.b16 %v5567
        %v5769 = vunpack.c.l.b16 %v5568
        %v5770 = vunpack.c.h.b16 %v5568
        %v5771 = vunpack.c.l.b16 %v5569
        %v5772 = vunpack.c.h.b16 %v5569
        %v5773 = vunpack.c.l.b16 %v5570
        %v5774 = vunpack.c.h.b16 %v5570
        %v5775 = vpack.c.b16 %v5649, %v5647
        %v5776 = vpack.c.b16 %v5650, %v5648
        %v5777 = vpack.c.b16 %v5653, %v5651
        %v5778 = vpack.c.b16 %v5654, %v5652
        %v5779 = vpack.c.b16 %v5657, %v5655
        %v5780 = vpack.c.b16 %v5658, %v5656
        %v5781 = vpack.c.b16 %v5661, %v5659
        %v5782 = vpack.c.b16 %v5662, %v5660
        %v5783 = vpack.c.b16 %v5665, %v5663
        %v5784 = vpack.c.b16 %v5666, %v5664
        %v5785 = vpack.c.b16 %v5669, %v5667
        %v5786 = vpack.c.b16 %v5670, %v5668
        %v5787 = vpack.c.b16 %v5673, %v5671
        %v5788 = vpack.c.b16 %v5674, %v5672
        %v5789 = vpack.c.b16 %v5677, %v5675
        %v5790 = vpack.c.b16 %v5678, %v5676
        %v5791 = vpack.c.b16 %v5681, %v5679
        %v5792 = vpack.c.b16 %v5682, %v5680
        %v5793 = vpack.c.b16 %v5685, %v5683
        %v5794 = vpack.c.b16 %v5686, %v5684
        %v5795 = vpack.c.b16 %v5689, %v5687
        %v5796 = vpack.c.b16 %v5690, %v5688
        %v5797 = vpack.c.b16 %v5693, %v5691
        %v5798 = vpack.c.b16 %v5694, %v5692
        %v5799 = vpack.c.b16 %v5697, %v5695
        %v5800 = vpack.c.b16 %v5698, %v5696
        %v5801 = vpack.c.b16 %v5701, %v5699
        %v5802 = vpack.c.b16 %v5702, %v5700
        %v5803 = vpack.c.b16 %v5705, %v5703
        %v5804 = vpack.c.b16 %v5706, %v5704
        %v5805 = vpack.c.b16 %v5709, %v5707
        %v5806 = vpack.c.b16 %v5710, %v5708
        %v5807 = vpack.c.b16 %v5713, %v5711
        %v5808 = vpack.c.b16 %v5714, %v5712
        %v5809 = vpack.c.b16 %v5717, %v5715
        %v5810 = vpack.c.b16 %v5718, %v5716
        %v5811 = vpack.c.b16 %v5721, %v5719
        %v5812 = vpack.c.b16 %v5722, %v5720
        %v5813 = vpack.c.b16 %v5725, %v5723
        %v5814 = vpack.c.b16 %v5726, %v5724
        %v5815 = vpack.c.b16 %v5729, %v5727
        %v5816 = vpack.c.b16 %v5730, %v5728
        %v5817 = vpack.c.b16 %v5733, %v5731
        %v5818 = vpack.c.b16 %v5734, %v5732
        %v5819 = vpack.c.b16 %v5737, %v5735
        %v5820 = vpack.c.b16 %v5738, %v5736
        %v5821 = vpack.c.b16 %v5741, %v5739
        %v5822 = vpack.c.b16 %v5742, %v5740
        %v5823 = vpack.c.b16 %v5745, %v5743
        %v5824 = vpack.c.b16 %v5746, %v5744
        %v5825 = vpack.c.b16 %v5749, %v5747
        %v5826 = vpack.c.b16 %v5750, %v5748
        %v5827 = vpack.c.b16 %v5753, %v5751
        %v5828 = vpack.c.b16 %v5754, %v5752
        %v5829 = vpack.c.b16 %v5757, %v5755
        %v5830 = vpack.c.b16 %v5758, %v5756
        %v5831 = vpack.c.b16 %v5761, %v5759
        %v5832 = vpack.c.b16 %v5762, %v5760
        %v5833 = vpack.c.b16 %v5765, %v5763
        %v5834 = vpack.c.b16 %v5766, %v5764
        %v5835 = vpack.c.b16 %v5769, %v5767
        %v5836 = vpack.c.b16 %v5770, %v5768
        %v5837 = vpack.c.b16 %v5773, %v5771
        %v5838 = vpack.c.b16 %v5774, %v5772
        %5903 = vmatprep.subr.bf16.mxu0 %v5776
        %5904 = vmatpush1.bf16.msra.mxu0 %v5775
        %5905 = vmatprep.subr.bf16.mxu0 %v5778
        %5906 = vmatpush1.bf16.msra.mxu0 %v5777
        %5907 = vmatprep.subr.bf16.mxu0 %v5780
        %5908 = vmatpush1.bf16.msra.mxu0 %v5779
        %5909 = vmatprep.subr.bf16.mxu0 %v5782
        %5910 = vmatpush1.bf16.msra.mxu0 %v5781
        %5911 = vmatprep.subr.bf16.mxu0 %v5784
        %5912 = vmatpush1.bf16.msra.mxu0 %v5783
        %5913 = vmatprep.subr.bf16.mxu0 %v5786
        %5914 = vmatpush1.bf16.msra.mxu0 %v5785
        %5915 = vmatprep.subr.bf16.mxu0 %v5788
        %5916 = vmatpush1.bf16.msra.mxu0 %v5787
        %5917 = vmatprep.subr.bf16.mxu0 %v5790
        %5918 = vmatpush1.bf16.msra.mxu0 %v5789
        %5919 = vmatprep.subr.bf16.mxu0 %v5792
        %5920 = vmatpush1.bf16.msra.mxu0 %v5791
        %5921 = vmatprep.subr.bf16.mxu0 %v5794
        %5922 = vmatpush1.bf16.msra.mxu0 %v5793
        %5923 = vmatprep.subr.bf16.mxu0 %v5796
        %5924 = vmatpush1.bf16.msra.mxu0 %v5795
        %5925 = vmatprep.subr.bf16.mxu0 %v5798
        %5926 = vmatpush1.bf16.msra.mxu0 %v5797
        %5927 = vmatprep.subr.bf16.mxu0 %v5800
        %5928 = vmatpush1.bf16.msra.mxu0 %v5799
        %5929 = vmatprep.subr.bf16.mxu0 %v5802
        %5930 = vmatpush1.bf16.msra.mxu0 %v5801
        %5931 = vmatprep.subr.bf16.mxu0 %v5804
        %5932 = vmatpush1.bf16.msra.mxu0 %v5803
        %5933 = vmatprep.subr.bf16.mxu0 %v5806
        %5934 = vmatpush1.bf16.msra.mxu0 %v5805
        %5935 = vmatprep.mubr.bf16.mxu0 %v5476
        %5936 = vmatmul.mubr.bf16.gmra.mrb[0].mxu0 %v5475
        %v5937 = vpop.f32.mrb[0].mxu0
        %v5938 = vadd.f32 %v5576, %v5937
        %v5939 = vpop.f32.mrb[0].mxu0
        %v5940 = vadd.f32 %v5580, %v5939
        %v5941 = vpop.f32.mrb[0].mxu0
        %v5942 = vadd.f32 %v5576, %v5941
        %v5943 = vpop.f32.mrb[0].mxu0
        %v5944 = vadd.f32 %v5580, %v5943
        %5945 = vmatprep.mubr.bf16.mxu0 %v5480
        %5946 = vmatmul.mubr.bf16.gmra.mrb[0].mxu0 %v5479
        %v5947 = vpop.f32.mrb[0].mxu0
        %v5948 = vadd.f32 %v5576, %v5947
        %v5949 = vpop.f32.mrb[0].mxu0
        %v5950 = vadd.f32 %v5580, %v5949
        %v5951 = vpop.f32.mrb[0].mxu0
        %v5952 = vadd.f32 %v5576, %v5951
        %v5953 = vpop.f32.mrb[0].mxu0
        %v5954 = vadd.f32 %v5580, %v5953
        %5955 = vmatprep.mubr.bf16.mxu0 %v5484
        %5956 = vmatmul.mubr.bf16.gmra.mrb[0].mxu0 %v5483
        %v5957 = vpop.f32.mrb[0].mxu0
        %v5958 = vadd.f32 %v5576, %v5957
        %v5959 = vpop.f32.mrb[0].mxu0
        %v5960 = vadd.f32 %v5580, %v5959
        %v5961 = vpop.f32.mrb[0].mxu0
        %v5962 = vadd.f32 %v5576, %v5961
        %v5963 = vpop.f32.mrb[0].mxu0
        %v5964 = vadd.f32 %v5580, %v5963
        %5965 = vmatprep.mubr.bf16.mxu0 %v5488
        %5966 = vmatmul.mubr.bf16.gmra.mrb[0].mxu0 %v5487
        %v5967 = vpop.f32.mrb[0].mxu0
        %v5968 = vadd.f32 %v5576, %v5967
        %v5969 = vpop.f32.mrb[0].mxu0
        %v5970 = vadd.f32 %v5580, %v5969
        %v5971 = vpop.f32.mrb[0].mxu0
        %v5972 = vadd.f32 %v5576, %v5971
        %v5973 = vpop.f32.mrb[0].mxu0
        %v5974 = vadd.f32 %v5580, %v5973
        %5975 = vmatprep.mubr.bf16.mxu0 %v5492
        %5976 = vmatmul.mubr.bf16.gmra.mrb[0].mxu0 %v5491
        %v5977 = vpop.f32.mrb[0].mxu0
        %v5978 = vadd.f32 %v5576, %v5977
        %v5979 = vpop.f32.mrb[0].mxu0
        %v5980 = vadd.f32 %v5580, %v5979
        %v5981 = vpop.f32.mrb[0].mxu0
        %v5982 = vadd.f32 %v5576, %v5981
        %v5983 = vpop.f32.mrb[0].mxu0
        %v5984 = vadd.f32 %v5580, %v5983
        %5985 = vmatprep.mubr.bf16.mxu0 %v5496
        %5986 = vmatmul.mubr.bf16.gmra.mrb[0].mxu0 %v5495
        %v5987 = vpop.f32.mrb[0].mxu0
        %v5988 = vadd.f32 %v5576, %v5987
        %v5989 = vpop.f32.mrb[0].mxu0
        %v5990 = vadd.f32 %v5580, %v5989
        %v5991 = vpop.f32.mrb[0].mxu0
        %v5992 = vadd.f32 %v5576, %v5991
        %v5993 = vpop.f32.mrb[0].mxu0
        %v5994 = vadd.f32 %v5580, %v5993
        %5995 = vmatprep.mubr.bf16.mxu0 %v5500
        %5996 = vmatmul.mubr.bf16.gmra.mrb[0].mxu0 %v5499
        %v5997 = vpop.f32.mrb[0].mxu0
        %v5998 = vadd.f32 %v5576, %v5997
        %v5999 = vpop.f32.mrb[0].mxu0
        %v6000 = vadd.f32 %v5580, %v5999
        %v6001 = vpop.f32.mrb[0].mxu0
        %v6002 = vadd.f32 %v5576, %v6001
        %v6003 = vpop.f32.mrb[0].mxu0
        %v6004 = vadd.f32 %v5580, %v6003
        %6005 = vmatprep.mubr.bf16.mxu0 %v5504
        %6006 = vmatmul.mubr.bf16.gmra.mrb[0].mxu0 %v5503
        %v6007 = vpop.f32.mrb[0].mxu0
        %v6008 = vadd.f32 %v5576, %v6007
        %v6009 = vpop.f32.mrb[0].mxu0
        %v6010 = vadd.f32 %v5580, %v6009
        %v6011 = vpop.f32.mrb[0].mxu0
        %v6012 = vadd.f32 %v5576, %v6011
        %v6013 = vpop.f32.mrb[0].mxu0
        %v6014 = vadd.f32 %v5580, %v6013
        %6015 = vdwg.mxu0
        %6016 = vmatprep.subr.bf16.mxu0 %v5808
        %6017 = vmatpush1.bf16.msra.mxu0 %v5807
        %6018 = vmatprep.subr.bf16.mxu0 %v5810
        %6019 = vmatpush1.bf16.msra.mxu0 %v5809
        %6020 = vmatprep.subr.bf16.mxu0 %v5812
        %6021 = vmatpush1.bf16.msra.mxu0 %v5811
        %6022 = vmatprep.subr.bf16.mxu0 %v5814
        %6023 = vmatpush1.bf16.msra.mxu0 %v5813
        %6024 = vmatprep.subr.bf16.mxu0 %v5816
        %6025 = vmatpush1.bf16.msra.mxu0 %v5815
        %6026 = vmatprep.subr.bf16.mxu0 %v5818
        %6027 = vmatpush1.bf16.msra.mxu0 %v5817
        %6028 = vmatprep.subr.bf16.mxu0 %v5820
        %6029 = vmatpush1.bf16.msra.mxu0 %v5819
        %6030 = vmatprep.subr.bf16.mxu0 %v5822
        %6031 = vmatpush1.bf16.msra.mxu0 %v5821
        %6032 = vmatprep.subr.bf16.mxu0 %v5824
        %6033 = vmatpush1.bf16.msra.mxu0 %v5823
        %6034 = vmatprep.subr.bf16.mxu0 %v5826
        %6035 = vmatpush1.bf16.msra.mxu0 %v5825
        %6036 = vmatprep.subr.bf16.mxu0 %v5828
        %6037 = vmatpush1.bf16.msra.mxu0 %v5827
        %6038 = vmatprep.subr.bf16.mxu0 %v5830
        %6039 = vmatpush1.bf16.msra.mxu0 %v5829
        %6040 = vmatprep.subr.bf16.mxu0 %v5832
        %6041 = vmatpush1.bf16.msra.mxu0 %v5831
        %6042 = vmatprep.subr.bf16.mxu0 %v5834
        %6043 = vmatpush1.bf16.msra.mxu0 %v5833
        %6044 = vmatprep.subr.bf16.mxu0 %v5836
        %6045 = vmatpush1.bf16.msra.mxu0 %v5835
        %6046 = vmatprep.subr.bf16.mxu0 %v5838
        %6047 = vmatpush1.bf16.msra.mxu0 %v5837
        %6048 = vmatprep.mubr.bf16.mxu0 %v5478
        %6049 = vmatmul.mubr.bf16.gmra.mrb[0].mxu0 %v5477
        %v6050 = vpop.f32.mrb[0].mxu0
        %v6051 = vadd.f32 %v5938, %v6050
        %v6052 = vpop.f32.mrb[0].mxu0
        %v6053 = vadd.f32 %v5940, %v6052
        %v6054 = vpop.f32.mrb[0].mxu0
        %v6055 = vadd.f32 %v5942, %v6054
        %v6056 = vpop.f32.mrb[0].mxu0
        %v6057 = vadd.f32 %v5944, %v6056
        %6058 = vmatprep.mubr.bf16.mxu0 %v5482
        %6059 = vmatmul.mubr.bf16.gmra.mrb[0].mxu0 %v5481
        %v6060 = vpop.f32.mrb[0].mxu0
        %v6061 = vadd.f32 %v5948, %v6060
        %v6062 = vpop.f32.mrb[0].mxu0
        %v6063 = vadd.f32 %v5950, %v6062
        %v6064 = vpop.f32.mrb[0].mxu0
        %v6065 = vadd.f32 %v5952, %v6064
        %v6066 = vpop.f32.mrb[0].mxu0
        %v6067 = vadd.f32 %v5954, %v6066
        %6068 = vmatprep.mubr.bf16.mxu0 %v5486
        %6069 = vmatmul.mubr.bf16.gmra.mrb[0].mxu0 %v5485
        %v6070 = vpop.f32.mrb[0].mxu0
        %v6071 = vadd.f32 %v5958, %v6070
        %v6072 = vpop.f32.mrb[0].mxu0
        %v6073 = vadd.f32 %v5960, %v6072
        %v6074 = vpop.f32.mrb[0].mxu0
        %v6075 = vadd.f32 %v5962, %v6074
        %v6076 = vpop.f32.mrb[0].mxu0
        %v6077 = vadd.f32 %v5964, %v6076
        %6078 = vmatprep.mubr.bf16.mxu0 %v5490
        %6079 = vmatmul.mubr.bf16.gmra.mrb[0].mxu0 %v5489
        %v6080 = vpop.f32.mrb[0].mxu0
        %v6081 = vadd.f32 %v5968, %v6080
        %v6082 = vpop.f32.mrb[0].mxu0
        %v6083 = vadd.f32 %v5970, %v6082
        %v6084 = vpop.f32.mrb[0].mxu0
        %v6085 = vadd.f32 %v5972, %v6084
        %v6086 = vpop.f32.mrb[0].mxu0
        %v6087 = vadd.f32 %v5974, %v6086
        %6088 = vmatprep.mubr.bf16.mxu0 %v5494
        %6089 = vmatmul.mubr.bf16.gmra.mrb[0].mxu0 %v5493
        %v6090 = vpop.f32.mrb[0].mxu0
        %v6091 = vadd.f32 %v5978, %v6090
        %v6092 = vpop.f32.mrb[0].mxu0
        %v6093 = vadd.f32 %v5980, %v6092
        %v6094 = vpop.f32.mrb[0].mxu0
        %v6095 = vadd.f32 %v5982, %v6094
        %v6096 = vpop.f32.mrb[0].mxu0
        %v6097 = vadd.f32 %v5984, %v6096
        %6098 = vmatprep.mubr.bf16.mxu0 %v5498
        %6099 = vmatmul.mubr.bf16.gmra.mrb[0].mxu0 %v5497
        %v6100 = vpop.f32.mrb[0].mxu0
        %v6101 = vadd.f32 %v5988, %v6100
        %v6102 = vpop.f32.mrb[0].mxu0
        %v6103 = vadd.f32 %v5990, %v6102
        %v6104 = vpop.f32.mrb[0].mxu0
        %v6105 = vadd.f32 %v5992, %v6104
        %v6106 = vpop.f32.mrb[0].mxu0
        %v6107 = vadd.f32 %v5994, %v6106
        %6108 = vmatprep.mubr.bf16.mxu0 %v5502
        %6109 = vmatmul.mubr.bf16.gmra.mrb[0].mxu0 %v5501
        %v6110 = vpop.f32.mrb[0].mxu0
        %v6111 = vadd.f32 %v5998, %v6110
        %v6112 = vpop.f32.mrb[0].mxu0
        %v6113 = vadd.f32 %v6000, %v6112
        %v6114 = vpop.f32.mrb[0].mxu0
        %v6115 = vadd.f32 %v6002, %v6114
        %v6116 = vpop.f32.mrb[0].mxu0
        %v6117 = vadd.f32 %v6004, %v6116
        %6118 = vmatprep.mubr.bf16.mxu0 %v5506
        %6119 = vmatmul.mubr.bf16.gmra.mrb[0].mxu0 %v5505
        %v6120 = vpop.f32.mrb[0].mxu0
        %v6121 = vadd.f32 %v6008, %v6120
        %v6122 = vpop.f32.mrb[0].mxu0
        %v6123 = vadd.f32 %v6010, %v6122
        %v6124 = vpop.f32.mrb[0].mxu0
        %v6125 = vadd.f32 %v6012, %v6124
        %v6126 = vpop.f32.mrb[0].mxu0
        %v6127 = vadd.f32 %v6014, %v6126
        %6128 = vdwg.mxu0
        %v6129 = vtanh.pop %v6051
        %v6130 = vtanh.pop %v6053
        %v6131 = vtanh.pop %v6055
        %v6132 = vtanh.pop %v6057
        %v6133 = vtanh.pop %v6061
        %v6134 = vtanh.pop %v6063
        %v6135 = vtanh.pop %v6065
        %v6136 = vtanh.pop %v6067
        %v6137 = vtanh.pop %v6071
        %v6138 = vtanh.pop %v6073
        %v6139 = vtanh.pop %v6075
        %v6140 = vtanh.pop %v6077
        %v6141 = vtanh.pop %v6081
        %v6142 = vtanh.pop %v6083
        %v6143 = vtanh.pop %v6085
        %v6144 = vtanh.pop %v6087
        %v6145 = vtanh.pop %v6091
        %v6146 = vtanh.pop %v6093
        %v6147 = vtanh.pop %v6095
        %v6148 = vtanh.pop %v6097
        %v6149 = vtanh.pop %v6101
        %v6150 = vtanh.pop %v6103
        %v6151 = vtanh.pop %v6105
        %v6152 = vtanh.pop %v6107
        %v6153 = vtanh.pop %v6111
        %v6154 = vtanh.pop %v6113
        %v6155 = vtanh.pop %v6115
        %v6156 = vtanh.pop %v6117
        %v6157 = vtanh.pop %v6121
        %v6158 = vtanh.pop %v6123
        %v6159 = vtanh.pop %v6125
        %v6160 = vtanh.pop %v6127
        %6161 = vst [vmem:[%s394] sm:$0xff] %v6129
        %6162 = vst [vmem:[%s394 + $0x8] sm:$0xff] %v6130
        %6163 = vst [vmem:[%s394 + $0x10] sm:$0xff] %v6131
        %6164 = vst [vmem:[%s394 + $0x18] sm:$0xff] %v6132
        %6165 = vst [vmem:[%s394 + $0x20] sm:$0xff] %v6133
        %6166 = vst [vmem:[%s394 + $0x28] sm:$0xff] %v6134
        %6167 = vst [vmem:[%s394 + $0x30] sm:$0xff] %v6135
        %6168 = vst [vmem:[%s394 + $0x38] sm:$0xff] %v6136
        %6169 = vst [vmem:[%s394 + $0x40] sm:$0xff] %v6137
        %6170 = vst [vmem:[%s394 + $0x48] sm:$0xff] %v6138
        %6171 = vst [vmem:[%s394 + $0x50] sm:$0xff] %v6139
        %6172 = vst [vmem:[%s394 + $0x58] sm:$0xff] %v6140
        %6173 = vst [vmem:[%s394 + $0x60] sm:$0xff] %v6141
        %6174 = vst [vmem:[%s394 + $0x68] sm:$0xff] %v6142
        %6175 = vst [vmem:[%s394 + $0x70] sm:$0xff] %v6143
        %6176 = vst [vmem:[%s394 + $0x78] sm:$0xff] %v6144
        %6177 = vst [vmem:[%s394 + $0x80] sm:$0xff] %v6145
        %6178 = vst [vmem:[%s394 + $0x88] sm:$0xff] %v6146
        %6179 = vst [vmem:[%s394 + $0x90] sm:$0xff] %v6147
        %6180 = vst [vmem:[%s394 + $0x98] sm:$0xff] %v6148
        %6181 = vst [vmem:[%s394 + $0xa0] sm:$0xff] %v6149
        %6182 = vst [vmem:[%s394 + $0xa8] sm:$0xff] %v6150
        %6183 = vst [vmem:[%s394 + $0xb0] sm:$0xff] %v6151
        %6184 = vst [vmem:[%s394 + $0xb8] sm:$0xff] %v6152
        %6185 = vst [vmem:[%s394 + $0xc0] sm:$0xff] %v6153
        %6186 = vst [vmem:[%s394 + $0xc8] sm:$0xff] %v6154
        %6187 = vst [vmem:[%s394 + $0xd0] sm:$0xff] %v6155
        %6188 = vst [vmem:[%s394 + $0xd8] sm:$0xff] %v6156
        %6189 = vst [vmem:[%s394 + $0xe0] sm:$0xff] %v6157
        %6190 = vst [vmem:[%s394 + $0xe8] sm:$0xff] %v6158
        %6191 = vst [vmem:[%s394 + $0xf0] sm:$0xff] %v6159
        %6192 = vst [vmem:[%s394 + $0xf8] sm:$0xff] %v6160
        %s6193 = sand.u32 %s230, 1
        %s6194 = scalar_lea.sflag [#allocation4], %s6193
        %s6195 = sand.u32 %s230, 1
        %s6196 = smul.addr %s6195, 256
        %s6197 = scalar_lea.vmem [#allocation10], %s6196
        // Predicated region
        $region73: #{tpu_custom_call.1} parent=55 // pred_check
          %p6198 = pneg %p240
        $region74: #{tpu_custom_call.1} parent=55 // pred_check_branch
          %6200 = sbr.rel (%p6198) target = $region76
        $region75: #{tpu_custom_call.1} parent=55 // pred_region
          %s6201 = smul.u32 16, %s28
          %s6203 = ssub.s32 4096, 4096
          %6204 = vsyncadd %s6194, %s6203
          %s6205 = smul.addr %s6201, 2
          %s6206 = smul.addr %s6205, 128
          %s6207 = scalar_lea.hbm %s9, %s6206
          %s6208 = sshll.u32 %s6197, 4
          %s6209 = int_to_ptr.vmem [resolvable:$true] %s6208
          %6214 = dma.vmem_to_hbm [thread:$0]  %s6209, 4096, %s6207, %s6194, 256, 256, 16
        $region76: #{tpu_custom_call.1} parent=55 // pred_fallthru
          _
      $region56: #{tpu_custom_call.1} parent=5 // pred_fallthru
        _
      %p6215 = scmp.le.s32.totalorder 2, %s23
      // Predicated region
      $region77: #{tpu_custom_call.1} parent=5 // pred_check
        %p6216 = pneg %p6215
      $region78: #{tpu_custom_call.1} parent=5 // pred_check_branch
        %6218 = sbr.rel (%p6216) target = $region80
      $region79: #{tpu_custom_call.1} parent=5 // pred_region
        %s6219 = ssub.s32 %s23, 2
        // Predicated region
        $region81: #{tpu_custom_call.1} parent=79 // pred_check
          %p6220 = pneg %p246
        $region82: #{tpu_custom_call.1} parent=79 // pred_check_branch
          %6222 = sbr.rel (%p6220) target = $region84
        $region83: #{tpu_custom_call.1} parent=79 // pred_region
          %s6223 = sand.u32 %s231, 1
          %s6224 = scalar_lea.sflag [#allocation4], %s6223
          %s6225 = sand.u32 %s231, 1
          %s6226 = smul.addr %s6225, 256
          %s6227 = scalar_lea.vmem [#allocation10], %s6226
          %6228 = dma.done %s6224, 4096
        $region84: #{tpu_custom_call.1} parent=79 // pred_fallthru
          _
      $region80: #{tpu_custom_call.1} parent=5 // pred_fallthru
        _
    $region6: #{tpu_custom_call.1} parent=1 // loop_footer
      %s27 = sadd.s32 1, %s23
    $region7: #{tpu_custom_call.1} parent=1 // loop_footer_branch
      %22 = sbr.rel target = $region3
    $region8: #{tpu_custom_call.1} parent=1 // loop_exit
      _
    %6229 = vsyncpa [#allocation3], 1
    %s6230 = scalar_lea.sflag [#allocation3], 1
    %6231 = vsyncpa %s6230, 1
    %6232 = vsyncpa [#allocation6], 1
    %6233 = vsyncpa [#allocation9], 1
    %6234 = vsyncpa [#allocation4], 1
    %s6235 = scalar_lea.sflag [#allocation4], 1
    %6236 = vsyncpa %s6235, 1

</llo_original>
